<compile_context>
chip_gen: v5e
topology: v5e:2x2
jax: 0.10.0
libtpu: 0.0.40
codegen_flags: <defaults>
</compile_context>

<pallas_src>
import functools

import jax
import jax.numpy as jnp
from jax.experimental import pallas as pl
from jax.experimental.pallas import tpu as pltpu


def _leaky(h):
    # nn.LeakyReLU default negative_slope = 0.01
    return jnp.where(h > 0, h, 0.01 * h)


def _round_up(n, m):
    return ((n + m - 1) // m) * m


def _cdiv(a, b):
    return -(-a // b)


# --------------------------------------------------------------------------- #
# Kernel: one batch tile, all (folded) weights VMEM-resident.
# --------------------------------------------------------------------------- #
def ae_kernel(
    x_ref,
    w1e_ref, b1e_ref,
    w2e_ref, b2e_ref,
    w3e_ref, b3e_ref,
    w1d_ref, b1d_ref,
    w2d_ref, b2d_ref,
    w3d_ref, b3d_ref,
    recon_ref, latent_ref,
    *, n_sub, tb_sub,
):
    bf16 = jnp.bfloat16
    f32 = jnp.float32

    # Process the batch tile as `n_sub` independent row sub-tiles (statically
    # unrolled).  The sub-tiles share no data, so the scheduler can overlap one
    # sub-tile's MXU matmul with the other's VPU epilogue
    # (bias + LeakyReLU + bf16 cast), which otherwise sits on the critical
    # path between strictly dependent matmuls.
    for s in range(n_sub):
        rows = pl.ds(s * tb_sub, tb_sub)
        x = x_ref[rows, :]                                   # (tb_sub, D_pad) bf16

        # ---- encoder ----
        h = jnp.dot(x, w1e_ref[...], preferred_element_type=f32) + b1e_ref[...]
        h = _leaky(h)
        # BN(1024) + Dropout folded away (eval mode); BN affine folded into w2e/b2e.
        h = jnp.dot(h.astype(bf16), w2e_ref[...], preferred_element_type=f32) + b2e_ref[...]
        h = _leaky(h)
        # BN(512) folded into w3e/b3e.
        z = jnp.dot(h.astype(bf16), w3e_ref[...], preferred_element_type=f32) + b3e_ref[...]
        latent_ref[rows, :] = z

        # ---- decoder ----
        h = jnp.dot(z.astype(bf16), w1d_ref[...], preferred_element_type=f32) + b1d_ref[...]
        h = _leaky(h)
        # BN(512) + Dropout folded away; BN affine folded into w2d/b2d.
        h = jnp.dot(h.astype(bf16), w2d_ref[...], preferred_element_type=f32) + b2d_ref[...]
        h = _leaky(h)
        # BN(1024) folded into w3d/b3d.
        recon_ref[rows, :] = (
            jnp.dot(h.astype(bf16), w3d_ref[...], preferred_element_type=f32) + b3d_ref[...]
        )


# --------------------------------------------------------------------------- #
# Parameter construction (PyTorch-shaped, f32) and BN folding.
# --------------------------------------------------------------------------- #
def make_params(key, input_dim, dim_code):
    """Deterministic synthetic parameters mimicking the PyTorch module shapes."""
    D = input_dim * input_dim * 3
    eps = 1e-5

    def linear(key, fan_in, fan_out):
        kw, kb = jax.random.split(key)
        bound = 1.0 / jnp.sqrt(fan_in)
        w = jax.random.uniform(kw, (fan_in, fan_out), jnp.float32, -bound, bound)
        b = jax.random.uniform(kb, (1, fan_out), jnp.float32, -bound, bound)
        return w, b

    def bn_fold(key, n):
        kg, kb, km, kv = jax.random.split(key, 4)
        gamma = jax.random.uniform(kg, (1, n), jnp.float32, 0.8, 1.2)
        beta = 0.1 * jax.random.normal(kb, (1, n), jnp.float32)
        rmean = 0.1 * jax.random.normal(km, (1, n), jnp.float32)
        rvar = jax.random.uniform(kv, (1, n), jnp.float32, 0.5, 1.5)
        scale = gamma / jnp.sqrt(rvar + eps)
        shift = beta - rmean * scale
        return scale, shift

    keys = jax.random.split(key, 10)
    w1e, b1e = linear(keys[0], D, 1024)
    s1e, t1e = bn_fold(keys[1], 1024)
    w2e, b2e = linear(keys[2], 1024, 512)
    s2e, t2e = bn_fold(keys[3], 512)
    w3e, b3e = linear(keys[4], 512, dim_code)

    w1d, b1d = linear(keys[5], dim_code, 512)
    s1d, t1d = bn_fold(keys[6], 512)
    w2d, b2d = linear(keys[7], 512, 1024)
    s2d, t2d = bn_fold(keys[8], 1024)
    w3d, b3d = linear(keys[9], 1024, D)

    return (
        w1e, b1e, s1e, t1e,
        w2e, b2e, s2e, t2e,
        w3e, b3e,
        w1d, b1d, s1d, t1d,
        w2d, b2d, s2d, t2d,
        w3d, b3d,
    )


def fold_params(params):
    """Fold each eval-mode BatchNorm (scale, shift) into the following Linear."""
    (w1e, b1e, s1e, t1e,
     w2e, b2e, s2e, t2e,
     w3e, b3e,
     w1d, b1d, s1d, t1d,
     w2d, b2d, s2d, t2d,
     w3d, b3d) = params

    w2e_f = w2e * s1e.reshape(-1, 1)
    b2e_f = b2e + t1e @ w2e
    w3e_f = w3e * s2e.reshape(-1, 1)
    b3e_f = b3e + t2e @ w3e

    w2d_f = w2d * s1d.reshape(-1, 1)
    b2d_f = b2d + t1d @ w2d
    w3d_f = w3d * s2d.reshape(-1, 1)
    b3d_f = b3d + t2d @ w3d

    return (w1e, b1e, w2e_f, b2e_f, w3e_f, b3e_f,
            w1d, b1d, w2d_f, b2d_f, w3d_f, b3d_f)


def pack_params(params, dim_code):
    """Fold BN, lane-pad and bf16-cast the weights.

    Call ONCE, outside the per-forward jitted path, and pass the result to
    `autoencoder_forward` — this removes the per-call HBM pad/cast prologue
    that previously ran before every Pallas call.
    """
    (w1e, b1e, w2e, b2e, w3e, b3e,
     w1d, b1d, w2d, b2d, w3d, b3d) = fold_params(params)

    D, H1 = w1e.shape           # D, 1024
    H2 = w2e.shape[1]           # 512
    D_pad = _round_up(D, 128)
    Z_pad = _round_up(dim_code, 128)
    bf16, f32 = jnp.bfloat16, jnp.float32

    w1e_p = jnp.zeros((D_pad, H1), bf16).at[:D, :].set(w1e.astype(bf16))
    w3e_p = jnp.zeros((H2, Z_pad), bf16).at[:, :dim_code].set(w3e.astype(bf16))
    b3e_p = jnp.zeros((1, Z_pad), f32).at[:, :dim_code].set(b3e)
    w1d_p = jnp.zeros((Z_pad, H2), bf16).at[:dim_code, :].set(w1d.astype(bf16))
    w3d_p = jnp.zeros((H1, D_pad), bf16).at[:, :D].set(w3d.astype(bf16))
    b3d_p = jnp.zeros((1, D_pad), f32).at[:, :D].set(b3d)

    return (
        w1e_p, b1e.astype(f32),
        w2e.astype(bf16), b2e.astype(f32),
        w3e_p, b3e_p,
        w1d_p, b1d.astype(f32),
        w2d.astype(bf16), b2d.astype(f32),
        w3d_p, b3d_p,
    )


# --------------------------------------------------------------------------- #
# Batch-tile selection.
# --------------------------------------------------------------------------- #
def _pick_batch_tile(B, tb):
    """Pick the batch tile size.

    - Small B: clamp to round_up(B, 16) (16-row minimum for bf16 sublane
      packing) so a B=8 forward does not pay for a 128-row MXU tile.
    - Large B: keep tiles >= 128 rows (MXU M fill) and prefer >= 2 grid steps
      (v7x second TensorCore / megacore), but only when the extra batch
      padding that the split causes is <= ~12% (so single-TC chips do not pay
      for it).
    """
    tb = max(16, tb)
    tb_eff = min(tb, _round_up(B, 16))
    if tb_eff > 128:
        n_tiles = max(2, _cdiv(B, tb))
        cand = max(128, min(_round_up(_cdiv(B, n_tiles), 16), tb))
        if _round_up(B, cand) <= 1.125 * _round_up(B, tb_eff):
            tb_eff = cand
    return tb_eff


# --------------------------------------------------------------------------- #
# Wrapper: batch grid, resident weights, explicit VMEM budget.
# --------------------------------------------------------------------------- #
def autoencoder_forward(x, packed, *, dim_code, tb=256, single_buffer_weights=False):
    B, D = x.shape
    (w1e_p, b1e, w2e_b, b2e, w3e_p, b3e_p,
     w1d_p, b1d, w2d_b, b2d, w3d_p, b3d_p) = packed

    D_pad, H1 = w1e_p.shape
    H2 = w2e_b.shape[1]
    Z_pad = w3e_p.shape[1]
    assert D <= D_pad and dim_code <= Z_pad

    tb_eff = _pick_batch_tile(B, tb)
    B_pad = _round_up(B, tb_eff)
    grid = B_pad // tb_eff
    # In-kernel row sub-tiling for MXU/VPU-epilogue overlap (needs 16-row
    # sub-tiles for clean bf16 sublane packing).
    n_sub = 2 if tb_eff % 32 == 0 else 1
    tb_sub = tb_eff // n_sub

    bf16, f32 = jnp.bfloat16, jnp.float32
    # Zero-padded, bf16 input (lane-dense everywhere).
    x_p = jnp.zeros((B_pad, D_pad), bf16).at[:B, :D].set(x.astype(bf16))

    ins = (
        x_p,
        w1e_p, b1e, w2e_b, b2e, w3e_p, b3e_p,
        w1d_p, b1d, w2d_b, b2d, w3d_p, b3d_p,
    )
    weights = ins[1:]

    def resident(arr):
        # Full-array block, constant block index -> DMA'd once, stays resident
        # in VMEM across the whole batch grid.
        if single_buffer_weights:
            # The second pipeline buffer is never used for a constant block
            # index; dropping it halves the weight VMEM footprint (useful on
            # v7x / under v5e's scoped limit at large input_dim).
            return pl.BlockSpec(arr.shape, lambda i: (0, 0),
                                pipeline_mode=pl.Buffered(1))
        return pl.BlockSpec(arr.shape, lambda i: (0, 0))

    in_specs = [pl.BlockSpec((tb_eff, D_pad), lambda i: (i, 0))]
    in_specs += [resident(a) for a in weights]

    # Explicit VMEM budget sized to the actual residency: weights (x2 unless
    # single-buffered) + double-buffered x/recon/latent tiles + in-flight
    # activations, plus margin for compiler temporaries.
    w_bytes = sum(int(a.size) * jnp.dtype(a.dtype).itemsize for a in weights)
    w_resident = w_bytes if single_buffer_weights else 2 * w_bytes
    io_bytes = 2 * tb_eff * (2 * D_pad + 4 * D_pad + 4 * Z_pad)
    tmp_bytes = tb_eff * (H1 + H2 + max(H1, D_pad) + Z_pad) * 8
    vmem_limit = min(int(w_resident + io_bytes + tmp_bytes) + (16 << 20), 96 << 20)

    kernel = functools.partial(ae_kernel, n_sub=n_sub, tb_sub=tb_sub)

    recon_p, latent_p = pl.pallas_call(
        kernel,
        grid=(grid,),
        out_shape=(
            jax.ShapeDtypeStruct((B_pad, D_pad), f32),   # reconstruction
            jax.ShapeDtypeStruct((B_pad, Z_pad), f32),   # latent_code
        ),
        in_specs=in_specs,
        out_specs=(
            pl.BlockSpec((tb_eff, D_pad), lambda i: (i, 0)),
            pl.BlockSpec((tb_eff, Z_pad), lambda i: (i, 0)),
        ),
        compiler_params=pltpu.CompilerParams(
            dimension_semantics=("parallel",),
            vmem_limit_bytes=vmem_limit,
        ),
    )(*ins)

    return recon_p[:B, :D], latent_p[:B, :dim_code]


# --------------------------------------------------------------------------- #
# References.
# --------------------------------------------------------------------------- #
def reference_forward_f32(x, params):
    """Exact eval-mode module semantics, full f32."""
    (w1e, b1e, s1e, t1e,
     w2e, b2e, s2e, t2e,
     w3e, b3e,
     w1d, b1d, s1d, t1d,
     w2d, b2d, s2d, t2d,
     w3d, b3d) = params
    hp = jax.lax.Precision.HIGHEST

    h = jnp.dot(x, w1e, precision=hp) + b1e
    h = _leaky(h) * s1e + t1e
    h = jnp.dot(h, w2e, precision=hp) + b2e
    h = _leaky(h) * s2e + t2e
    z = jnp.dot(h, w3e, precision=hp) + b3e

    h = jnp.dot(z, w1d, precision=hp) + b1d
    h = _leaky(h) * s1d + t1d
    h = jnp.dot(h, w2d, precision=hp) + b2d
    h = _leaky(h) * s2d + t2d
    recon = jnp.dot(h, w3d, precision=hp) + b3d
    return recon, z


def reference_forward_bf16(x, params):
    """Same folded-BN / bf16-operand / f32-accum path as the kernel."""
    (w1e, b1e, w2e, b2e, w3e, b3e,
     w1d, b1d, w2d, b2d, w3d, b3d) = fold_params(params)
    bf16 = jnp.bfloat16

    def mm(a, w):
        return jnp.dot(a.astype(bf16), w.astype(bf16),
                       preferred_element_type=jnp.float32)

    h = _leaky(mm(x, w1e) + b1e)
    h = _leaky(mm(h, w2e) + b2e)
    z = mm(h, w3e) + b3e
    h = _leaky(mm(z, w1d) + b1d)
    h = _leaky(mm(h, w2d) + b2d)
    recon = mm(h, w3d) + b3d
    return recon, z


if __name__ == "__main__":
    input_dim = 8          # small spatial size -> D = 3 * 8 * 8 = 192
    dim_code = 32
    B = 8

    D = input_dim * input_dim * 3
    key = jax.random.PRNGKey(0)
    kx, kp = jax.random.split(key)
    x = jax.random.normal(kx, (B, D), jnp.float32)
    params = make_params(kp, input_dim, dim_code)

    # Pack (fold BN, pad, cast) ONCE, outside the per-call jitted path.
    packed = pack_params(params, dim_code)
    packed = jax.tree_util.tree_map(jax.block_until_ready, packed)

    fwd = jax.jit(functools.partial(autoencoder_forward, dim_code=dim_code))
    recon, latent = fwd(x, packed)
    recon = jax.block_until_ready(recon)
    latent = jax.block_until_ready(latent)

    assert recon.shape == (B, D) and latent.shape == (B, dim_code)
    assert recon.dtype == jnp.float32 and latent.dtype == jnp.float32

    # Tight check against the same folded-BN / bf16-operand / f32-accum math.
    recon_bf, latent_bf = reference_forward_bf16(x, params)
    assert jnp.allclose(latent, latent_bf, rtol=2e-2, atol=2e-2)
    assert jnp.allclose(recon, recon_bf, rtol=2e-2, atol=2e-2)

    # Loose sanity check against exact f32 eval-mode module semantics.
    recon_f32, latent_f32 = reference_forward_f32(x, params)
    assert jnp.allclose(latent, latent_f32, rtol=1e-1, atol=1e-1)
    assert jnp.allclose(recon, recon_f32, rtol=1e-1, atol=1e-1)

    print("KERNEL_OK")
</pallas_src>

<mosaic_0001>
module attributes {stable_mosaic.version = 11 : i64} {
  func.func @ae_kernel(%arg0: i32, %arg1: memref<16x256xbf16, #tpu.memory_space<vmem>>, %arg2: memref<256x1024xbf16, #tpu.memory_space<vmem>>, %arg3: memref<1x1024xf32, #tpu.memory_space<vmem>>, %arg4: memref<1024x512xbf16, #tpu.memory_space<vmem>>, %arg5: memref<1x512xf32, #tpu.memory_space<vmem>>, %arg6: memref<512x128xbf16, #tpu.memory_space<vmem>>, %arg7: memref<1x128xf32, #tpu.memory_space<vmem>>, %arg8: memref<128x512xbf16, #tpu.memory_space<vmem>>, %arg9: memref<1x512xf32, #tpu.memory_space<vmem>>, %arg10: memref<512x1024xbf16, #tpu.memory_space<vmem>>, %arg11: memref<1x1024xf32, #tpu.memory_space<vmem>>, %arg12: memref<1024x256xbf16, #tpu.memory_space<vmem>>, %arg13: memref<1x256xf32, #tpu.memory_space<vmem>>, %arg14: memref<16x256xf32, #tpu.memory_space<vmem>>, %arg15: memref<16x128xf32, #tpu.memory_space<vmem>>) attributes {dimension_semantics = [#tpu.dimension_semantics<parallel>], iteration_bounds = array<i64: 1>, scalar_prefetch = 0 : i64, scratch_operands = 0 : i64, tpu.core_type = #tpu.core_type<tc>, window_params = [{transform_indices = @transform_0, window_bounds = array<i64: 16, 256>}, {pipeline_mode = #tpu.pipeline_mode<synchronous>, transform_indices = @transform_1, window_bounds = array<i64: 256, 1024>}, {pipeline_mode = #tpu.pipeline_mode<synchronous>, transform_indices = @transform_2, window_bounds = array<i64: 1, 1024>}, {pipeline_mode = #tpu.pipeline_mode<synchronous>, transform_indices = @transform_3, window_bounds = array<i64: 1024, 512>}, {pipeline_mode = #tpu.pipeline_mode<synchronous>, transform_indices = @transform_4, window_bounds = array<i64: 1, 512>}, {pipeline_mode = #tpu.pipeline_mode<synchronous>, transform_indices = @transform_5, window_bounds = array<i64: 512, 128>}, {pipeline_mode = #tpu.pipeline_mode<synchronous>, transform_indices = @transform_6, window_bounds = array<i64: 1, 128>}, {pipeline_mode = #tpu.pipeline_mode<synchronous>, transform_indices = @transform_7, window_bounds = array<i64: 128, 512>}, {pipeline_mode = #tpu.pipeline_mode<synchronous>, transform_indices = @transform_8, window_bounds = array<i64: 1, 512>}, {pipeline_mode = #tpu.pipeline_mode<synchronous>, transform_indices = @transform_9, window_bounds = array<i64: 512, 1024>}, {pipeline_mode = #tpu.pipeline_mode<synchronous>, transform_indices = @transform_10, window_bounds = array<i64: 1, 1024>}, {pipeline_mode = #tpu.pipeline_mode<synchronous>, transform_indices = @transform_11, window_bounds = array<i64: 1024, 256>}, {pipeline_mode = #tpu.pipeline_mode<synchronous>, transform_indices = @transform_12, window_bounds = array<i64: 1, 256>}, {transform_indices = @transform_13, window_bounds = array<i64: 16, 256>}, {transform_indices = @transform_14, window_bounds = array<i64: 16, 128>}]} {
    %c0 = arith.constant 0 : index
    %c0_0 = arith.constant 0 : index
    %0 = vector.load %arg1[%c0, %c0_0] : memref<16x256xbf16, #tpu.memory_space<vmem>>, vector<16x256xbf16>
    %c0_1 = arith.constant 0 : index
    %c0_2 = arith.constant 0 : index
    %1 = vector.load %arg2[%c0_1, %c0_2] : memref<256x1024xbf16, #tpu.memory_space<vmem>>, vector<256x1024xbf16>
    %cst = arith.constant dense<0.000000e+00> : vector<16x1024xf32>
    %2 = tpu.matmul %0, %1, %cst {dimension_numbers = #tpu.dot_dimension_numbers<[1], [0], [0], [1], [0, 0, 1, 1], [], []>} : vector<16x256xbf16>, vector<256x1024xbf16>, vector<16x1024xf32> -> vector<16x1024xf32>
    %c0_3 = arith.constant 0 : index
    %c0_4 = arith.constant 0 : index
    %3 = vector.load %arg3[%c0_3, %c0_4] : memref<1x1024xf32, #tpu.memory_space<vmem>>, vector<1x1024xf32>
    %4 = vector.broadcast %3 : vector<1x1024xf32> to vector<16x1024xf32>
    %5 = arith.addf %2, %4 : vector<16x1024xf32>
    %cst_5 = arith.constant 0.000000e+00 : f32
    %6 = vector.broadcast %cst_5 : f32 to vector<16x1024xf32>
    %7 = arith.cmpf ogt, %5, %6 : vector<16x1024xf32>
    %cst_6 = arith.constant 0.00999999977 : f32
    %8 = vector.broadcast %cst_6 : f32 to vector<16x1024xf32>
    %9 = arith.mulf %8, %5 : vector<16x1024xf32>
    %10 = arith.select %7, %5, %9 : vector<16x1024xi1>, vector<16x1024xf32>
    %11 = arith.truncf %10 : vector<16x1024xf32> to vector<16x1024xbf16>
    %c0_7 = arith.constant 0 : index
    %c0_8 = arith.constant 0 : index
    %12 = vector.load %arg4[%c0_7, %c0_8] : memref<1024x512xbf16, #tpu.memory_space<vmem>>, vector<1024x512xbf16>
    %cst_9 = arith.constant dense<0.000000e+00> : vector<16x512xf32>
    %13 = tpu.matmul %11, %12, %cst_9 {dimension_numbers = #tpu.dot_dimension_numbers<[1], [0], [0], [1], [0, 0, 1, 1], [], []>} : vector<16x1024xbf16>, vector<1024x512xbf16>, vector<16x512xf32> -> vector<16x512xf32>
    %c0_10 = arith.constant 0 : index
    %c0_11 = arith.constant 0 : index
    %14 = vector.load %arg5[%c0_10, %c0_11] : memref<1x512xf32, #tpu.memory_space<vmem>>, vector<1x512xf32>
    %15 = vector.broadcast %14 : vector<1x512xf32> to vector<16x512xf32>
    %16 = arith.addf %13, %15 : vector<16x512xf32>
    %cst_12 = arith.constant 0.000000e+00 : f32
    %17 = vector.broadcast %cst_12 : f32 to vector<16x512xf32>
    %18 = arith.cmpf ogt, %16, %17 : vector<16x512xf32>
    %cst_13 = arith.constant 0.00999999977 : f32
    %19 = vector.broadcast %cst_13 : f32 to vector<16x512xf32>
    %20 = arith.mulf %19, %16 : vector<16x512xf32>
    %21 = arith.select %18, %16, %20 : vector<16x512xi1>, vector<16x512xf32>
    %22 = arith.truncf %21 : vector<16x512xf32> to vector<16x512xbf16>
    %c0_14 = arith.constant 0 : index
    %c0_15 = arith.constant 0 : index
    %23 = vector.load %arg6[%c0_14, %c0_15] : memref<512x128xbf16, #tpu.memory_space<vmem>>, vector<512x128xbf16>
    %cst_16 = arith.constant dense<0.000000e+00> : vector<16x128xf32>
    %24 = tpu.matmul %22, %23, %cst_16 {dimension_numbers = #tpu.dot_dimension_numbers<[1], [0], [0], [1], [0, 0, 1, 1], [], []>} : vector<16x512xbf16>, vector<512x128xbf16>, vector<16x128xf32> -> vector<16x128xf32>
    %c0_17 = arith.constant 0 : index
    %c0_18 = arith.constant 0 : index
    %25 = vector.load %arg7[%c0_17, %c0_18] : memref<1x128xf32, #tpu.memory_space<vmem>>, vector<1x128xf32>
    %26 = vector.broadcast %25 : vector<1x128xf32> to vector<16x128xf32>
    %27 = arith.addf %24, %26 : vector<16x128xf32>
    %c0_19 = arith.constant 0 : index
    %c0_20 = arith.constant 0 : index
    %28 = vector.load %arg15[%c0_19, %c0_20] : memref<16x128xf32, #tpu.memory_space<vmem>>, vector<16x128xf32>
    tpu.vector_store %arg15[%c0_19, %c0_20], %27 {strides = array<i32>} : memref<16x128xf32, #tpu.memory_space<vmem>>, vector<16x128xf32>,
    %29 = arith.truncf %27 : vector<16x128xf32> to vector<16x128xbf16>
    %c0_21 = arith.constant 0 : index
    %c0_22 = arith.constant 0 : index
    %30 = vector.load %arg8[%c0_21, %c0_22] : memref<128x512xbf16, #tpu.memory_space<vmem>>, vector<128x512xbf16>
    %cst_23 = arith.constant dense<0.000000e+00> : vector<16x512xf32>
    %31 = tpu.matmul %29, %30, %cst_23 {dimension_numbers = #tpu.dot_dimension_numbers<[1], [0], [0], [1], [0, 0, 1, 1], [], []>} : vector<16x128xbf16>, vector<128x512xbf16>, vector<16x512xf32> -> vector<16x512xf32>
    %c0_24 = arith.constant 0 : index
    %c0_25 = arith.constant 0 : index
    %32 = vector.load %arg9[%c0_24, %c0_25] : memref<1x512xf32, #tpu.memory_space<vmem>>, vector<1x512xf32>
    %33 = vector.broadcast %32 : vector<1x512xf32> to vector<16x512xf32>
    %34 = arith.addf %31, %33 : vector<16x512xf32>
    %cst_26 = arith.constant 0.000000e+00 : f32
    %35 = vector.broadcast %cst_26 : f32 to vector<16x512xf32>
    %36 = arith.cmpf ogt, %34, %35 : vector<16x512xf32>
    %cst_27 = arith.constant 0.00999999977 : f32
    %37 = vector.broadcast %cst_27 : f32 to vector<16x512xf32>
    %38 = arith.mulf %37, %34 : vector<16x512xf32>
    %39 = arith.select %36, %34, %38 : vector<16x512xi1>, vector<16x512xf32>
    %40 = arith.truncf %39 : vector<16x512xf32> to vector<16x512xbf16>
    %c0_28 = arith.constant 0 : index
    %c0_29 = arith.constant 0 : index
    %41 = vector.load %arg10[%c0_28, %c0_29] : memref<512x1024xbf16, #tpu.memory_space<vmem>>, vector<512x1024xbf16>
    %cst_30 = arith.constant dense<0.000000e+00> : vector<16x1024xf32>
    %42 = tpu.matmul %40, %41, %cst_30 {dimension_numbers = #tpu.dot_dimension_numbers<[1], [0], [0], [1], [0, 0, 1, 1], [], []>} : vector<16x512xbf16>, vector<512x1024xbf16>, vector<16x1024xf32> -> vector<16x1024xf32>
    %c0_31 = arith.constant 0 : index
    %c0_32 = arith.constant 0 : index
    %43 = vector.load %arg11[%c0_31, %c0_32] : memref<1x1024xf32, #tpu.memory_space<vmem>>, vector<1x1024xf32>
    %44 = vector.broadcast %43 : vector<1x1024xf32> to vector<16x1024xf32>
    %45 = arith.addf %42, %44 : vector<16x1024xf32>
    %cst_33 = arith.constant 0.000000e+00 : f32
    %46 = vector.broadcast %cst_33 : f32 to vector<16x1024xf32>
    %47 = arith.cmpf ogt, %45, %46 : vector<16x1024xf32>
    %cst_34 = arith.constant 0.00999999977 : f32
    %48 = vector.broadcast %cst_34 : f32 to vector<16x1024xf32>
    %49 = arith.mulf %48, %45 : vector<16x1024xf32>
    %50 = arith.select %47, %45, %49 : vector<16x1024xi1>, vector<16x1024xf32>
    %51 = arith.truncf %50 : vector<16x1024xf32> to vector<16x1024xbf16>
    %c0_35 = arith.constant 0 : index
    %c0_36 = arith.constant 0 : index
    %52 = vector.load %arg12[%c0_35, %c0_36] : memref<1024x256xbf16, #tpu.memory_space<vmem>>, vector<1024x256xbf16>
    %cst_37 = arith.constant dense<0.000000e+00> : vector<16x256xf32>
    %53 = tpu.matmul %51, %52, %cst_37 {dimension_numbers = #tpu.dot_dimension_numbers<[1], [0], [0], [1], [0, 0, 1, 1], [], []>} : vector<16x1024xbf16>, vector<1024x256xbf16>, vector<16x256xf32> -> vector<16x256xf32>
    %c0_38 = arith.constant 0 : index
    %c0_39 = arith.constant 0 : index
    %54 = vector.load %arg13[%c0_38, %c0_39] : memref<1x256xf32, #tpu.memory_space<vmem>>, vector<1x256xf32>
    %55 = vector.broadcast %54 : vector<1x256xf32> to vector<16x256xf32>
    %56 = arith.addf %53, %55 : vector<16x256xf32>
    %c0_40 = arith.constant 0 : index
    %c0_41 = arith.constant 0 : index
    %57 = vector.load %arg14[%c0_40, %c0_41] : memref<16x256xf32, #tpu.memory_space<vmem>>, vector<16x256xf32>
    tpu.vector_store %arg14[%c0_40, %c0_41], %56 {strides = array<i32>} : memref<16x256xf32, #tpu.memory_space<vmem>>, vector<16x256xf32>,
    return
  }
  func.func @transform_0(%arg0: i32) -> (i32, i32) {
    %c0_i32 = arith.constant 0 : i32
    %c0_i32_0 = arith.constant 0 : i32
    return %arg0, %c0_i32 : i32, i32
  }
  func.func @transform_1(%arg0: i32) -> (i32, i32) {
    %c0_i32 = arith.constant 0 : i32
    %c0_i32_0 = arith.constant 0 : i32
    %c0_i32_1 = arith.constant 0 : i32
    return %c0_i32, %c0_i32_0 : i32, i32
  }
  func.func @transform_2(%arg0: i32) -> (i32, i32) {
    %c0_i32 = arith.constant 0 : i32
    %c0_i32_0 = arith.constant 0 : i32
    %c0_i32_1 = arith.constant 0 : i32
    return %c0_i32, %c0_i32_0 : i32, i32
  }
  func.func @transform_3(%arg0: i32) -> (i32, i32) {
    %c0_i32 = arith.constant 0 : i32
    %c0_i32_0 = arith.constant 0 : i32
    %c0_i32_1 = arith.constant 0 : i32
    return %c0_i32, %c0_i32_0 : i32, i32
  }
  func.func @transform_4(%arg0: i32) -> (i32, i32) {
    %c0_i32 = arith.constant 0 : i32
    %c0_i32_0 = arith.constant 0 : i32
    %c0_i32_1 = arith.constant 0 : i32
    return %c0_i32, %c0_i32_0 : i32, i32
  }
  func.func @transform_5(%arg0: i32) -> (i32, i32) {
    %c0_i32 = arith.constant 0 : i32
    %c0_i32_0 = arith.constant 0 : i32
    %c0_i32_1 = arith.constant 0 : i32
    return %c0_i32, %c0_i32_0 : i32, i32
  }
  func.func @transform_6(%arg0: i32) -> (i32, i32) {
    %c0_i32 = arith.constant 0 : i32
    %c0_i32_0 = arith.constant 0 : i32
    %c0_i32_1 = arith.constant 0 : i32
    return %c0_i32, %c0_i32_0 : i32, i32
  }
  func.func @transform_7(%arg0: i32) -> (i32, i32) {
    %c0_i32 = arith.constant 0 : i32
    %c0_i32_0 = arith.constant 0 : i32
    %c0_i32_1 = arith.constant 0 : i32
    return %c0_i32, %c0_i32_0 : i32, i32
  }
  func.func @transform_8(%arg0: i32) -> (i32, i32) {
    %c0_i32 = arith.constant 0 : i32
    %c0_i32_0 = arith.constant 0 : i32
    %c0_i32_1 = arith.constant 0 : i32
    return %c0_i32, %c0_i32_0 : i32, i32
  }
  func.func @transform_9(%arg0: i32) -> (i32, i32) {
    %c0_i32 = arith.constant 0 : i32
    %c0_i32_0 = arith.constant 0 : i32
    %c0_i32_1 = arith.constant 0 : i32
    return %c0_i32, %c0_i32_0 : i32, i32
  }
  func.func @transform_10(%arg0: i32) -> (i32, i32) {
    %c0_i32 = arith.constant 0 : i32
    %c0_i32_0 = arith.constant 0 : i32
    %c0_i32_1 = arith.constant 0 : i32
    return %c0_i32, %c0_i32_0 : i32, i32
  }
  func.func @transform_11(%arg0: i32) -> (i32, i32) {
    %c0_i32 = arith.constant 0 : i32
    %c0_i32_0 = arith.constant 0 : i32
    %c0_i32_1 = arith.constant 0 : i32
    return %c0_i32, %c0_i32_0 : i32, i32
  }
  func.func @transform_12(%arg0: i32) -> (i32, i32) {
    %c0_i32 = arith.constant 0 : i32
    %c0_i32_0 = arith.constant 0 : i32
    %c0_i32_1 = arith.constant 0 : i32
    return %c0_i32, %c0_i32_0 : i32, i32
  }
  func.func @transform_13(%arg0: i32) -> (i32, i32) {
    %c0_i32 = arith.constant 0 : i32
    %c0_i32_0 = arith.constant 0 : i32
    return %arg0, %c0_i32 : i32, i32
  }
  func.func @transform_14(%arg0: i32) -> (i32, i32) {
    %c0_i32 = arith.constant 0 : i32
    %c0_i32_0 = arith.constant 0 : i32
    return %arg0, %c0_i32 : i32, i32
  }
}

</mosaic_0001>

<llo_original>
// kernel: autoencoder_forward.1
$region0: #{autoencoder_forward.1}
  #allocation0 [shape = 'u32[]', space=smem, size = 0x4, offset = 0x4, fixed_abs, tag = 'smem constant byte address 0x4 - core index']
  #allocation1 [shape = 'u32[72,128]{1,0:T(1,128)}', space=vmem, size = 0x9000, scoped, tag = 'internal scratch']
  %s0 = inlined_call_operand.vmem [shape: bf16[16,256], index: 0, kind: input, shape index: {}]
  %s1 = inlined_call_operand.hbm [shape: bf16[256,1024], index: 1, kind: input, shape index: {}]
  %s2 = inlined_call_operand.vmem [shape: f32[1,1024], index: 2, kind: input, shape index: {}]
  %s3 = inlined_call_operand.hbm [shape: bf16[1024,512], index: 3, kind: input, shape index: {}]
  %s4 = inlined_call_operand.vmem [shape: f32[1,512], index: 4, kind: input, shape index: {}]
  %s5 = inlined_call_operand.hbm [shape: bf16[512,128], index: 5, kind: input, shape index: {}]
  %s6 = inlined_call_operand.vmem [shape: f32[1,128], index: 6, kind: input, shape index: {}]
  %s7 = inlined_call_operand.hbm [shape: bf16[128,512], index: 7, kind: input, shape index: {}]
  %s8 = inlined_call_operand.vmem [shape: f32[1,512], index: 8, kind: input, shape index: {}]
  %s9 = inlined_call_operand.hbm [shape: bf16[512,1024], index: 9, kind: input, shape index: {}]
  %s10 = inlined_call_operand.vmem [shape: f32[1,1024], index: 10, kind: input, shape index: {}]
  %s11 = inlined_call_operand.hbm [shape: bf16[1024,256], index: 11, kind: input, shape index: {}]
  %s12 = inlined_call_operand.vmem [shape: f32[1,256], index: 12, kind: input, shape index: {}]
  %s13 = inlined_call_operand.vmem [shape: f32[16,256], index: 13, kind: output, shape index: {0}]
  %s14 = inlined_call_operand.vmem [shape: f32[16,128], index: 14, kind: output, shape index: {1}]
  %15 = xla_tuple %s13, %s14
  %s16 = sld [smem:[#allocation0]]
  $region94: #{autoencoder_forward.1} parent=0
    _
  %s18 = ssub.s32 1, %s16
  %s19 = scalar_select 0, %s18, %s16
  $region1: #{autoencoder_forward.1} parent=0
    #allocation2 [shape = 'u8[524288]{0}', space=vmem, size = 0x80000, scoped, tag = 'input window, operand 1, single buffered']
    #allocation3 [shape = 's32[1]{0}', space=sflag, size = 0x4, scoped, tag = 'scoped memory for autoencoder_forward.1']
    #allocation4 [shape = 'u8[1048576]{0}', space=vmem, size = 0x100000, scoped, tag = 'input window, operand 3, single buffered']
    #allocation5 [shape = 's32[1]{0}', space=sflag, size = 0x4, scoped, tag = 'scoped memory for autoencoder_forward.1']
    #allocation6 [shape = 'u8[131072]{0}', space=vmem, size = 0x20000, scoped, tag = 'input window, operand 5, single buffered']
    #allocation7 [shape = 'u8[131072]{0}', space=vmem, size = 0x20000, scoped, tag = 'input window, operand 7, single buffered']
    #allocation8 [shape = 's32[1]{0}', space=sflag, size = 0x4, scoped, tag = 'scoped memory for autoencoder_forward.1']
    #allocation9 [shape = 'u8[1048576]{0}', space=vmem, size = 0x100000, scoped, tag = 'input window, operand 9, single buffered']
    #allocation10 [shape = 'u8[524288]{0}', space=vmem, size = 0x80000, scoped, tag = 'input window, operand 11, single buffered']
    #allocation11 [shape = 's32[1]{0}', space=sflag, size = 0x4, scoped, tag = 'scoped memory for autoencoder_forward.1']
    %20 = vsyncpa [#allocation3], 0
    %21 = vsyncpa [#allocation5], 0
    %22 = vsyncpa [#allocation8], 0
    %23 = vsyncpa [#allocation11], 0
    // Predicated region
    $region2: #{autoencoder_forward.1} parent=1 // pred_check
      _
    $region3: #{autoencoder_forward.1} parent=1 // pred_check_branch
      %25 = sbr.rel (0) target = $region5
    $region4: #{autoencoder_forward.1} parent=1 // pred_region
      _
    $region5: #{autoencoder_forward.1} parent=1 // pred_fallthru
      _
    // Predicated region
    $region6: #{autoencoder_forward.1} parent=1 // pred_check
      _
    $region7: #{autoencoder_forward.1} parent=1 // pred_check_branch
      %27 = sbr.rel (0) target = $region9
    $region8: #{autoencoder_forward.1} parent=1 // pred_region
      %29 = vsyncadd [#allocation3], 0
      %s30 = sshll.u32 %s1, 4
      %s31 = int_to_ptr.hbm [resolvable:$true] %s30
      %s32 = sshll.u32 [#allocation2], 4
      %s33 = int_to_ptr.vmem [resolvable:$true] %s32
      %38 = dma.hbm_to_vmem [thread:$0]  %s31, 16384, %s33, [#allocation3], 512, 512, 32
    $region9: #{autoencoder_forward.1} parent=1 // pred_fallthru
      _
    // Predicated region
    $region10: #{autoencoder_forward.1} parent=1 // pred_check
      _
    $region11: #{autoencoder_forward.1} parent=1 // pred_check_branch
      %40 = sbr.rel (0) target = $region13
    $region12: #{autoencoder_forward.1} parent=1 // pred_region
      _
    $region13: #{autoencoder_forward.1} parent=1 // pred_fallthru
      _
    // Predicated region
    $region14: #{autoencoder_forward.1} parent=1 // pred_check
      _
    $region15: #{autoencoder_forward.1} parent=1 // pred_check_branch
      %42 = sbr.rel (0) target = $region17
    $region16: #{autoencoder_forward.1} parent=1 // pred_region
      %44 = vsyncadd [#allocation5], 0
      %s45 = sshll.u32 %s3, 4
      %s46 = int_to_ptr.hbm [resolvable:$true] %s45
      %s47 = sshll.u32 [#allocation4], 4
      %s48 = int_to_ptr.vmem [resolvable:$true] %s47
      %53 = dma.hbm_to_vmem [thread:$0]  %s46, 32768, %s48, [#allocation5], 256, 256, 16
    $region17: #{autoencoder_forward.1} parent=1 // pred_fallthru
      _
    // Predicated region
    $region18: #{autoencoder_forward.1} parent=1 // pred_check
      _
    $region19: #{autoencoder_forward.1} parent=1 // pred_check_branch
      %55 = sbr.rel (0) target = $region21
    $region20: #{autoencoder_forward.1} parent=1 // pred_region
      _
    $region21: #{autoencoder_forward.1} parent=1 // pred_fallthru
      _
    // Predicated region
    $region22: #{autoencoder_forward.1} parent=1 // pred_check
      _
    $region23: #{autoencoder_forward.1} parent=1 // pred_check_branch
      %57 = sbr.rel (0) target = $region25
    $region24: #{autoencoder_forward.1} parent=1 // pred_region
      %59 = vsyncadd [#allocation5], 0
      %s60 = sshll.u32 %s5, 4
      %s61 = int_to_ptr.hbm [resolvable:$true] %s60
      %s62 = sshll.u32 [#allocation6], 4
      %s63 = int_to_ptr.vmem [resolvable:$true] %s62
      %68 = dma.hbm_to_vmem [thread:$0]  %s61, 4096, %s63, [#allocation5], 64, 64, 4
    $region25: #{autoencoder_forward.1} parent=1 // pred_fallthru
      _
    // Predicated region
    $region26: #{autoencoder_forward.1} parent=1 // pred_check
      _
    $region27: #{autoencoder_forward.1} parent=1 // pred_check_branch
      %70 = sbr.rel (0) target = $region29
    $region28: #{autoencoder_forward.1} parent=1 // pred_region
      _
    $region29: #{autoencoder_forward.1} parent=1 // pred_fallthru
      _
    // Predicated region
    $region30: #{autoencoder_forward.1} parent=1 // pred_check
      _
    $region31: #{autoencoder_forward.1} parent=1 // pred_check_branch
      %72 = sbr.rel (0) target = $region33
    $region32: #{autoencoder_forward.1} parent=1 // pred_region
      %74 = vsyncadd [#allocation8], 0
      %s75 = sshll.u32 %s7, 4
      %s76 = int_to_ptr.hbm [resolvable:$true] %s75
      %s77 = sshll.u32 [#allocation7], 4
      %s78 = int_to_ptr.vmem [resolvable:$true] %s77
      %83 = dma.hbm_to_vmem [thread:$0]  %s76, 4096, %s78, [#allocation8], 256, 256, 16
    $region33: #{autoencoder_forward.1} parent=1 // pred_fallthru
      _
    // Predicated region
    $region34: #{autoencoder_forward.1} parent=1 // pred_check
      _
    $region35: #{autoencoder_forward.1} parent=1 // pred_check_branch
      %85 = sbr.rel (0) target = $region37
    $region36: #{autoencoder_forward.1} parent=1 // pred_region
      _
    $region37: #{autoencoder_forward.1} parent=1 // pred_fallthru
      _
    // Predicated region
    $region38: #{autoencoder_forward.1} parent=1 // pred_check
      _
    $region39: #{autoencoder_forward.1} parent=1 // pred_check_branch
      %87 = sbr.rel (0) target = $region41
    $region40: #{autoencoder_forward.1} parent=1 // pred_region
      %89 = vsyncadd [#allocation8], 0
      %s90 = sshll.u32 %s9, 4
      %s91 = int_to_ptr.hbm [resolvable:$true] %s90
      %s92 = sshll.u32 [#allocation9], 4
      %s93 = int_to_ptr.vmem [resolvable:$true] %s92
      %98 = dma.hbm_to_vmem [thread:$0]  %s91, 32768, %s93, [#allocation8], 512, 512, 32
    $region41: #{autoencoder_forward.1} parent=1 // pred_fallthru
      _
    // Predicated region
    $region42: #{autoencoder_forward.1} parent=1 // pred_check
      _
    $region43: #{autoencoder_forward.1} parent=1 // pred_check_branch
      %100 = sbr.rel (0) target = $region45
    $region44: #{autoencoder_forward.1} parent=1 // pred_region
      _
    $region45: #{autoencoder_forward.1} parent=1 // pred_fallthru
      _
    // Predicated region
    $region46: #{autoencoder_forward.1} parent=1 // pred_check
      _
    $region47: #{autoencoder_forward.1} parent=1 // pred_check_branch
      %102 = sbr.rel (0) target = $region49
    $region48: #{autoencoder_forward.1} parent=1 // pred_region
      %104 = vsyncadd [#allocation11], 0
      %s105 = sshll.u32 %s11, 4
      %s106 = int_to_ptr.hbm [resolvable:$true] %s105
      %s107 = sshll.u32 [#allocation10], 4
      %s108 = int_to_ptr.vmem [resolvable:$true] %s107
      %113 = dma.hbm_to_vmem [thread:$0]  %s106, 16384, %s108, [#allocation11], 128, 128, 8
    $region49: #{autoencoder_forward.1} parent=1 // pred_fallthru
      _
    // Predicated region
    $region50: #{autoencoder_forward.1} parent=1 // pred_check
      _
    $region51: #{autoencoder_forward.1} parent=1 // pred_check_branch
      %115 = sbr.rel (0) target = $region53
    $region52: #{autoencoder_forward.1} parent=1 // pred_region
      _
    $region53: #{autoencoder_forward.1} parent=1 // pred_fallthru
      _
    // Predicated region
    $region54: #{autoencoder_forward.1} parent=1 // pred_check
      _
    $region55: #{autoencoder_forward.1} parent=1 // pred_check_branch
      %117 = sbr.rel (0) target = $region57
    $region56: #{autoencoder_forward.1} parent=1 // pred_region
      %119 = dma.done [#allocation3], 16384
    $region57: #{autoencoder_forward.1} parent=1 // pred_fallthru
      _
    // Predicated region
    $region58: #{autoencoder_forward.1} parent=1 // pred_check
      _
    $region59: #{autoencoder_forward.1} parent=1 // pred_check_branch
      %121 = sbr.rel (0) target = $region61
    $region60: #{autoencoder_forward.1} parent=1 // pred_region
      %123 = dma.done [#allocation5], 32768
    $region61: #{autoencoder_forward.1} parent=1 // pred_fallthru
      _
    // Predicated region
    $region62: #{autoencoder_forward.1} parent=1 // pred_check
      _
    $region63: #{autoencoder_forward.1} parent=1 // pred_check_branch
      %125 = sbr.rel (0) target = $region65
    $region64: #{autoencoder_forward.1} parent=1 // pred_region
      %127 = dma.done [#allocation5], 4096
    $region65: #{autoencoder_forward.1} parent=1 // pred_fallthru
      _
    // Predicated region
    $region66: #{autoencoder_forward.1} parent=1 // pred_check
      _
    $region67: #{autoencoder_forward.1} parent=1 // pred_check_branch
      %129 = sbr.rel (0) target = $region69
    $region68: #{autoencoder_forward.1} parent=1 // pred_region
      %131 = dma.done [#allocation8], 4096
    $region69: #{autoencoder_forward.1} parent=1 // pred_fallthru
      _
    // Predicated region
    $region70: #{autoencoder_forward.1} parent=1 // pred_check
      _
    $region71: #{autoencoder_forward.1} parent=1 // pred_check_branch
      %133 = sbr.rel (0) target = $region73
    $region72: #{autoencoder_forward.1} parent=1 // pred_region
      %135 = dma.done [#allocation8], 32768
    $region73: #{autoencoder_forward.1} parent=1 // pred_fallthru
      _
    // Predicated region
    $region74: #{autoencoder_forward.1} parent=1 // pred_check
      _
    $region75: #{autoencoder_forward.1} parent=1 // pred_check_branch
      %137 = sbr.rel (0) target = $region77
    $region76: #{autoencoder_forward.1} parent=1 // pred_region
      %139 = dma.done [#allocation11], 16384
    $region77: #{autoencoder_forward.1} parent=1 // pred_fallthru
      _
    %v140 = vld [vmem:[%s0] sm:$0xff]
    %v141 = vld [vmem:[%s0 + $0x8] sm:$0xff]
    %v142 = vld [vmem:[#allocation2] sm:$0xff]
    %v143 = vld [vmem:[#allocation2 + $0x8] sm:$0xff]
    %v144 = vld [vmem:[#allocation2 + $0x10] sm:$0xff]
    %v145 = vld [vmem:[#allocation2 + $0x18] sm:$0xff]
    %v146 = vld [vmem:[#allocation2 + $0x20] sm:$0xff]
    %v147 = vld [vmem:[#allocation2 + $0x28] sm:$0xff]
    %v148 = vld [vmem:[#allocation2 + $0x30] sm:$0xff]
    %v149 = vld [vmem:[#allocation2 + $0x38] sm:$0xff]
    %v150 = vld [vmem:[#allocation2 + $0x40] sm:$0xff]
    %v151 = vld [vmem:[#allocation2 + $0x48] sm:$0xff]
    %v152 = vld [vmem:[#allocation2 + $0x50] sm:$0xff]
    %v153 = vld [vmem:[#allocation2 + $0x58] sm:$0xff]
    %v154 = vld [vmem:[#allocation2 + $0x60] sm:$0xff]
    %v155 = vld [vmem:[#allocation2 + $0x68] sm:$0xff]
    %v156 = vld [vmem:[#allocation2 + $0x70] sm:$0xff]
    %v157 = vld [vmem:[#allocation2 + $0x78] sm:$0xff]
    %v158 = vld [vmem:[#allocation2 + $0x80] sm:$0xff]
    %v159 = vld [vmem:[#allocation2 + $0x88] sm:$0xff]
    %v160 = vld [vmem:[#allocation2 + $0x90] sm:$0xff]
    %v161 = vld [vmem:[#allocation2 + $0x98] sm:$0xff]
    %v162 = vld [vmem:[#allocation2 + $0xa0] sm:$0xff]
    %v163 = vld [vmem:[#allocation2 + $0xa8] sm:$0xff]
    %v164 = vld [vmem:[#allocation2 + $0xb0] sm:$0xff]
    %v165 = vld [vmem:[#allocation2 + $0xb8] sm:$0xff]
    %v166 = vld [vmem:[#allocation2 + $0xc0] sm:$0xff]
    %v167 = vld [vmem:[#allocation2 + $0xc8] sm:$0xff]
    %v168 = vld [vmem:[#allocation2 + $0xd0] sm:$0xff]
    %v169 = vld [vmem:[#allocation2 + $0xd8] sm:$0xff]
    %v170 = vld [vmem:[#allocation2 + $0xe0] sm:$0xff]
    %v171 = vld [vmem:[#allocation2 + $0xe8] sm:$0xff]
    %v172 = vld [vmem:[#allocation2 + $0xf0] sm:$0xff]
    %v173 = vld [vmem:[#allocation2 + $0xf8] sm:$0xff]
    %v174 = vld [vmem:[#allocation2 + $0x100] sm:$0xff]
    %v175 = vld [vmem:[#allocation2 + $0x108] sm:$0xff]
    %v176 = vld [vmem:[#allocation2 + $0x110] sm:$0xff]
    %v177 = vld [vmem:[#allocation2 + $0x118] sm:$0xff]
    %v178 = vld [vmem:[#allocation2 + $0x120] sm:$0xff]
    %v179 = vld [vmem:[#allocation2 + $0x128] sm:$0xff]
    %v180 = vld [vmem:[#allocation2 + $0x130] sm:$0xff]
    %v181 = vld [vmem:[#allocation2 + $0x138] sm:$0xff]
    %v182 = vld [vmem:[#allocation2 + $0x140] sm:$0xff]
    %v183 = vld [vmem:[#allocation2 + $0x148] sm:$0xff]
    %v184 = vld [vmem:[#allocation2 + $0x150] sm:$0xff]
    %v185 = vld [vmem:[#allocation2 + $0x158] sm:$0xff]
    %v186 = vld [vmem:[#allocation2 + $0x160] sm:$0xff]
    %v187 = vld [vmem:[#allocation2 + $0x168] sm:$0xff]
    %v188 = vld [vmem:[#allocation2 + $0x170] sm:$0xff]
    %v189 = vld [vmem:[#allocation2 + $0x178] sm:$0xff]
    %v190 = vld [vmem:[#allocation2 + $0x180] sm:$0xff]
    %v191 = vld [vmem:[#allocation2 + $0x188] sm:$0xff]
    %v192 = vld [vmem:[#allocation2 + $0x190] sm:$0xff]
    %v193 = vld [vmem:[#allocation2 + $0x198] sm:$0xff]
    %v194 = vld [vmem:[#allocation2 + $0x1a0] sm:$0xff]
    %v195 = vld [vmem:[#allocation2 + $0x1a8] sm:$0xff]
    %v196 = vld [vmem:[#allocation2 + $0x1b0] sm:$0xff]
    %v197 = vld [vmem:[#allocation2 + $0x1b8] sm:$0xff]
    %v198 = vld [vmem:[#allocation2 + $0x1c0] sm:$0xff]
    %v199 = vld [vmem:[#allocation2 + $0x1c8] sm:$0xff]
    %v200 = vld [vmem:[#allocation2 + $0x1d0] sm:$0xff]
    %v201 = vld [vmem:[#allocation2 + $0x1d8] sm:$0xff]
    %v202 = vld [vmem:[#allocation2 + $0x1e0] sm:$0xff]
    %v203 = vld [vmem:[#allocation2 + $0x1e8] sm:$0xff]
    %v204 = vld [vmem:[#allocation2 + $0x1f0] sm:$0xff]
    %v205 = vld [vmem:[#allocation2 + $0x1f8] sm:$0xff]
    %v206 = vld [vmem:[#allocation2 + $0x200] sm:$0xff]
    %v207 = vld [vmem:[#allocation2 + $0x208] sm:$0xff]
    %v208 = vld [vmem:[#allocation2 + $0x210] sm:$0xff]
    %v209 = vld [vmem:[#allocation2 + $0x218] sm:$0xff]
    %v210 = vld [vmem:[#allocation2 + $0x220] sm:$0xff]
    %v211 = vld [vmem:[#allocation2 + $0x228] sm:$0xff]
    %v212 = vld [vmem:[#allocation2 + $0x230] sm:$0xff]
    %v213 = vld [vmem:[#allocation2 + $0x238] sm:$0xff]
    %v214 = vld [vmem:[#allocation2 + $0x240] sm:$0xff]
    %v215 = vld [vmem:[#allocation2 + $0x248] sm:$0xff]
    %v216 = vld [vmem:[#allocation2 + $0x250] sm:$0xff]
    %v217 = vld [vmem:[#allocation2 + $0x258] sm:$0xff]
    %v218 = vld [vmem:[#allocation2 + $0x260] sm:$0xff]
    %v219 = vld [vmem:[#allocation2 + $0x268] sm:$0xff]
    %v220 = vld [vmem:[#allocation2 + $0x270] sm:$0xff]
    %v221 = vld [vmem:[#allocation2 + $0x278] sm:$0xff]
    %v222 = vld [vmem:[#allocation2 + $0x280] sm:$0xff]
    %v223 = vld [vmem:[#allocation2 + $0x288] sm:$0xff]
    %v224 = vld [vmem:[#allocation2 + $0x290] sm:$0xff]
    %v225 = vld [vmem:[#allocation2 + $0x298] sm:$0xff]
    %v226 = vld [vmem:[#allocation2 + $0x2a0] sm:$0xff]
    %v227 = vld [vmem:[#allocation2 + $0x2a8] sm:$0xff]
    %v228 = vld [vmem:[#allocation2 + $0x2b0] sm:$0xff]
    %v229 = vld [vmem:[#allocation2 + $0x2b8] sm:$0xff]
    %v230 = vld [vmem:[#allocation2 + $0x2c0] sm:$0xff]
    %v231 = vld [vmem:[#allocation2 + $0x2c8] sm:$0xff]
    %v232 = vld [vmem:[#allocation2 + $0x2d0] sm:$0xff]
    %v233 = vld [vmem:[#allocation2 + $0x2d8] sm:$0xff]
    %v234 = vld [vmem:[#allocation2 + $0x2e0] sm:$0xff]
    %v235 = vld [vmem:[#allocation2 + $0x2e8] sm:$0xff]
    %v236 = vld [vmem:[#allocation2 + $0x2f0] sm:$0xff]
    %v237 = vld [vmem:[#allocation2 + $0x2f8] sm:$0xff]
    %v238 = vld [vmem:[#allocation2 + $0x300] sm:$0xff]
    %v239 = vld [vmem:[#allocation2 + $0x308] sm:$0xff]
    %v240 = vld [vmem:[#allocation2 + $0x310] sm:$0xff]
    %v241 = vld [vmem:[#allocation2 + $0x318] sm:$0xff]
    %v242 = vld [vmem:[#allocation2 + $0x320] sm:$0xff]
    %v243 = vld [vmem:[#allocation2 + $0x328] sm:$0xff]
    %v244 = vld [vmem:[#allocation2 + $0x330] sm:$0xff]
    %v245 = vld [vmem:[#allocation2 + $0x338] sm:$0xff]
    %v246 = vld [vmem:[#allocation2 + $0x340] sm:$0xff]
    %v247 = vld [vmem:[#allocation2 + $0x348] sm:$0xff]
    %v248 = vld [vmem:[#allocation2 + $0x350] sm:$0xff]
    %v249 = vld [vmem:[#allocation2 + $0x358] sm:$0xff]
    %v250 = vld [vmem:[#allocation2 + $0x360] sm:$0xff]
    %v251 = vld [vmem:[#allocation2 + $0x368] sm:$0xff]
    %v252 = vld [vmem:[#allocation2 + $0x370] sm:$0xff]
    %v253 = vld [vmem:[#allocation2 + $0x378] sm:$0xff]
    %v254 = vld [vmem:[#allocation2 + $0x380] sm:$0xff]
    %v255 = vld [vmem:[#allocation2 + $0x388] sm:$0xff]
    %v256 = vld [vmem:[#allocation2 + $0x390] sm:$0xff]
    %v257 = vld [vmem:[#allocation2 + $0x398] sm:$0xff]
    %v258 = vld [vmem:[#allocation2 + $0x3a0] sm:$0xff]
    %v259 = vld [vmem:[#allocation2 + $0x3a8] sm:$0xff]
    %v260 = vld [vmem:[#allocation2 + $0x3b0] sm:$0xff]
    %v261 = vld [vmem:[#allocation2 + $0x3b8] sm:$0xff]
    %v262 = vld [vmem:[#allocation2 + $0x3c0] sm:$0xff]
    %v263 = vld [vmem:[#allocation2 + $0x3c8] sm:$0xff]
    %v264 = vld [vmem:[#allocation2 + $0x3d0] sm:$0xff]
    %v265 = vld [vmem:[#allocation2 + $0x3d8] sm:$0xff]
    %v266 = vld [vmem:[#allocation2 + $0x3e0] sm:$0xff]
    %v267 = vld [vmem:[#allocation2 + $0x3e8] sm:$0xff]
    %v268 = vld [vmem:[#allocation2 + $0x3f0] sm:$0xff]
    %v269 = vld [vmem:[#allocation2 + $0x3f8] sm:$0xff]
    %v270 = vld [vmem:[%s2] sm:$0xff]
    %v272 = vperm.slane %v270, 0
    %v273 = vperm.slane %v270, 1
    %v274 = vperm.slane %v270, 2
    %v275 = vperm.slane %v270, 3
    %v276 = vperm.slane %v270, 4
    %v277 = vperm.slane %v270, 5
    %v278 = vperm.slane %v270, 6
    %v279 = vperm.slane %v270, 7
    %v290 = vunpack.c.l.b16 %v140
    %v291 = vunpack.c.h.b16 %v140
    %v292 = vunpack.c.l.b16 %v141
    %v293 = vunpack.c.h.b16 %v141
    %v294 = vpack.c.b16 %v292, %v290
    %v295 = vpack.c.b16 %v293, %v291
    %v426 = vunpack.c.l.b16 %v142
    %v427 = vunpack.c.h.b16 %v142
    %v428 = vunpack.c.l.b16 %v143
    %v429 = vunpack.c.h.b16 %v143
    %v430 = vunpack.c.l.b16 %v144
    %v431 = vunpack.c.h.b16 %v144
    %v432 = vunpack.c.l.b16 %v145
    %v433 = vunpack.c.h.b16 %v145
    %v434 = vunpack.c.l.b16 %v146
    %v435 = vunpack.c.h.b16 %v146
    %v436 = vunpack.c.l.b16 %v147
    %v437 = vunpack.c.h.b16 %v147
    %v438 = vunpack.c.l.b16 %v148
    %v439 = vunpack.c.h.b16 %v148
    %v440 = vunpack.c.l.b16 %v149
    %v441 = vunpack.c.h.b16 %v149
    %v442 = vunpack.c.l.b16 %v150
    %v443 = vunpack.c.h.b16 %v150
    %v444 = vunpack.c.l.b16 %v151
    %v445 = vunpack.c.h.b16 %v151
    %v446 = vunpack.c.l.b16 %v152
    %v447 = vunpack.c.h.b16 %v152
    %v448 = vunpack.c.l.b16 %v153
    %v449 = vunpack.c.h.b16 %v153
    %v450 = vunpack.c.l.b16 %v154
    %v451 = vunpack.c.h.b16 %v154
    %v452 = vunpack.c.l.b16 %v155
    %v453 = vunpack.c.h.b16 %v155
    %v454 = vunpack.c.l.b16 %v156
    %v455 = vunpack.c.h.b16 %v156
    %v456 = vunpack.c.l.b16 %v157
    %v457 = vunpack.c.h.b16 %v157
    %v458 = vunpack.c.l.b16 %v158
    %v459 = vunpack.c.h.b16 %v158
    %v460 = vunpack.c.l.b16 %v159
    %v461 = vunpack.c.h.b16 %v159
    %v462 = vunpack.c.l.b16 %v160
    %v463 = vunpack.c.h.b16 %v160
    %v464 = vunpack.c.l.b16 %v161
    %v465 = vunpack.c.h.b16 %v161
    %v466 = vunpack.c.l.b16 %v162
    %v467 = vunpack.c.h.b16 %v162
    %v468 = vunpack.c.l.b16 %v163
    %v469 = vunpack.c.h.b16 %v163
    %v470 = vunpack.c.l.b16 %v164
    %v471 = vunpack.c.h.b16 %v164
    %v472 = vunpack.c.l.b16 %v165
    %v473 = vunpack.c.h.b16 %v165
    %v474 = vunpack.c.l.b16 %v166
    %v475 = vunpack.c.h.b16 %v166
    %v476 = vunpack.c.l.b16 %v167
    %v477 = vunpack.c.h.b16 %v167
    %v478 = vunpack.c.l.b16 %v168
    %v479 = vunpack.c.h.b16 %v168
    %v480 = vunpack.c.l.b16 %v169
    %v481 = vunpack.c.h.b16 %v169
    %v482 = vunpack.c.l.b16 %v170
    %v483 = vunpack.c.h.b16 %v170
    %v484 = vunpack.c.l.b16 %v171
    %v485 = vunpack.c.h.b16 %v171
    %v486 = vunpack.c.l.b16 %v172
    %v487 = vunpack.c.h.b16 %v172
    %v488 = vunpack.c.l.b16 %v173
    %v489 = vunpack.c.h.b16 %v173
    %v490 = vunpack.c.l.b16 %v174
    %v491 = vunpack.c.h.b16 %v174
    %v492 = vunpack.c.l.b16 %v175
    %v493 = vunpack.c.h.b16 %v175
    %v494 = vunpack.c.l.b16 %v176
    %v495 = vunpack.c.h.b16 %v176
    %v496 = vunpack.c.l.b16 %v177
    %v497 = vunpack.c.h.b16 %v177
    %v498 = vunpack.c.l.b16 %v178
    %v499 = vunpack.c.h.b16 %v178
    %v500 = vunpack.c.l.b16 %v179
    %v501 = vunpack.c.h.b16 %v179
    %v502 = vunpack.c.l.b16 %v180
    %v503 = vunpack.c.h.b16 %v180
    %v504 = vunpack.c.l.b16 %v181
    %v505 = vunpack.c.h.b16 %v181
    %v506 = vunpack.c.l.b16 %v182
    %v507 = vunpack.c.h.b16 %v182
    %v508 = vunpack.c.l.b16 %v183
    %v509 = vunpack.c.h.b16 %v183
    %v510 = vunpack.c.l.b16 %v184
    %v511 = vunpack.c.h.b16 %v184
    %v512 = vunpack.c.l.b16 %v185
    %v513 = vunpack.c.h.b16 %v185
    %v514 = vunpack.c.l.b16 %v186
    %v515 = vunpack.c.h.b16 %v186
    %v516 = vunpack.c.l.b16 %v187
    %v517 = vunpack.c.h.b16 %v187
    %v518 = vunpack.c.l.b16 %v188
    %v519 = vunpack.c.h.b16 %v188
    %v520 = vunpack.c.l.b16 %v189
    %v521 = vunpack.c.h.b16 %v189
    %v522 = vunpack.c.l.b16 %v190
    %v523 = vunpack.c.h.b16 %v190
    %v524 = vunpack.c.l.b16 %v191
    %v525 = vunpack.c.h.b16 %v191
    %v526 = vunpack.c.l.b16 %v192
    %v527 = vunpack.c.h.b16 %v192
    %v528 = vunpack.c.l.b16 %v193
    %v529 = vunpack.c.h.b16 %v193
    %v530 = vunpack.c.l.b16 %v194
    %v531 = vunpack.c.h.b16 %v194
    %v532 = vunpack.c.l.b16 %v195
    %v533 = vunpack.c.h.b16 %v195
    %v534 = vunpack.c.l.b16 %v196
    %v535 = vunpack.c.h.b16 %v196
    %v536 = vunpack.c.l.b16 %v197
    %v537 = vunpack.c.h.b16 %v197
    %v538 = vunpack.c.l.b16 %v198
    %v539 = vunpack.c.h.b16 %v198
    %v540 = vunpack.c.l.b16 %v199
    %v541 = vunpack.c.h.b16 %v199
    %v542 = vunpack.c.l.b16 %v200
    %v543 = vunpack.c.h.b16 %v200
    %v544 = vunpack.c.l.b16 %v201
    %v545 = vunpack.c.h.b16 %v201
    %v546 = vunpack.c.l.b16 %v202
    %v547 = vunpack.c.h.b16 %v202
    %v548 = vunpack.c.l.b16 %v203
    %v549 = vunpack.c.h.b16 %v203
    %v550 = vunpack.c.l.b16 %v204
    %v551 = vunpack.c.h.b16 %v204
    %v552 = vunpack.c.l.b16 %v205
    %v553 = vunpack.c.h.b16 %v205
    %v554 = vunpack.c.l.b16 %v206
    %v555 = vunpack.c.h.b16 %v206
    %v556 = vunpack.c.l.b16 %v207
    %v557 = vunpack.c.h.b16 %v207
    %v558 = vunpack.c.l.b16 %v208
    %v559 = vunpack.c.h.b16 %v208
    %v560 = vunpack.c.l.b16 %v209
    %v561 = vunpack.c.h.b16 %v209
    %v562 = vunpack.c.l.b16 %v210
    %v563 = vunpack.c.h.b16 %v210
    %v564 = vunpack.c.l.b16 %v211
    %v565 = vunpack.c.h.b16 %v211
    %v566 = vunpack.c.l.b16 %v212
    %v567 = vunpack.c.h.b16 %v212
    %v568 = vunpack.c.l.b16 %v213
    %v569 = vunpack.c.h.b16 %v213
    %v570 = vunpack.c.l.b16 %v214
    %v571 = vunpack.c.h.b16 %v214
    %v572 = vunpack.c.l.b16 %v215
    %v573 = vunpack.c.h.b16 %v215
    %v574 = vunpack.c.l.b16 %v216
    %v575 = vunpack.c.h.b16 %v216
    %v576 = vunpack.c.l.b16 %v217
    %v577 = vunpack.c.h.b16 %v217
    %v578 = vunpack.c.l.b16 %v218
    %v579 = vunpack.c.h.b16 %v218
    %v580 = vunpack.c.l.b16 %v219
    %v581 = vunpack.c.h.b16 %v219
    %v582 = vunpack.c.l.b16 %v220
    %v583 = vunpack.c.h.b16 %v220
    %v584 = vunpack.c.l.b16 %v221
    %v585 = vunpack.c.h.b16 %v221
    %v586 = vunpack.c.l.b16 %v222
    %v587 = vunpack.c.h.b16 %v222
    %v588 = vunpack.c.l.b16 %v223
    %v589 = vunpack.c.h.b16 %v223
    %v590 = vunpack.c.l.b16 %v224
    %v591 = vunpack.c.h.b16 %v224
    %v592 = vunpack.c.l.b16 %v225
    %v593 = vunpack.c.h.b16 %v225
    %v594 = vunpack.c.l.b16 %v226
    %v595 = vunpack.c.h.b16 %v226
    %v596 = vunpack.c.l.b16 %v227
    %v597 = vunpack.c.h.b16 %v227
    %v598 = vunpack.c.l.b16 %v228
    %v599 = vunpack.c.h.b16 %v228
    %v600 = vunpack.c.l.b16 %v229
    %v601 = vunpack.c.h.b16 %v229
    %v602 = vunpack.c.l.b16 %v230
    %v603 = vunpack.c.h.b16 %v230
    %v604 = vunpack.c.l.b16 %v231
    %v605 = vunpack.c.h.b16 %v231
    %v606 = vunpack.c.l.b16 %v232
    %v607 = vunpack.c.h.b16 %v232
    %v608 = vunpack.c.l.b16 %v233
    %v609 = vunpack.c.h.b16 %v233
    %v610 = vunpack.c.l.b16 %v234
    %v611 = vunpack.c.h.b16 %v234
    %v612 = vunpack.c.l.b16 %v235
    %v613 = vunpack.c.h.b16 %v235
    %v614 = vunpack.c.l.b16 %v236
    %v615 = vunpack.c.h.b16 %v236
    %v616 = vunpack.c.l.b16 %v237
    %v617 = vunpack.c.h.b16 %v237
    %v618 = vunpack.c.l.b16 %v238
    %v619 = vunpack.c.h.b16 %v238
    %v620 = vunpack.c.l.b16 %v239
    %v621 = vunpack.c.h.b16 %v239
    %v622 = vunpack.c.l.b16 %v240
    %v623 = vunpack.c.h.b16 %v240
    %v624 = vunpack.c.l.b16 %v241
    %v625 = vunpack.c.h.b16 %v241
    %v626 = vunpack.c.l.b16 %v242
    %v627 = vunpack.c.h.b16 %v242
    %v628 = vunpack.c.l.b16 %v243
    %v629 = vunpack.c.h.b16 %v243
    %v630 = vunpack.c.l.b16 %v244
    %v631 = vunpack.c.h.b16 %v244
    %v632 = vunpack.c.l.b16 %v245
    %v633 = vunpack.c.h.b16 %v245
    %v634 = vunpack.c.l.b16 %v246
    %v635 = vunpack.c.h.b16 %v246
    %v636 = vunpack.c.l.b16 %v247
    %v637 = vunpack.c.h.b16 %v247
    %v638 = vunpack.c.l.b16 %v248
    %v639 = vunpack.c.h.b16 %v248
    %v640 = vunpack.c.l.b16 %v249
    %v641 = vunpack.c.h.b16 %v249
    %v642 = vunpack.c.l.b16 %v250
    %v643 = vunpack.c.h.b16 %v250
    %v644 = vunpack.c.l.b16 %v251
    %v645 = vunpack.c.h.b16 %v251
    %v646 = vunpack.c.l.b16 %v252
    %v647 = vunpack.c.h.b16 %v252
    %v648 = vunpack.c.l.b16 %v253
    %v649 = vunpack.c.h.b16 %v253
    %v650 = vunpack.c.l.b16 %v254
    %v651 = vunpack.c.h.b16 %v254
    %v652 = vunpack.c.l.b16 %v255
    %v653 = vunpack.c.h.b16 %v255
    %v654 = vunpack.c.l.b16 %v256
    %v655 = vunpack.c.h.b16 %v256
    %v656 = vunpack.c.l.b16 %v257
    %v657 = vunpack.c.h.b16 %v257
    %v658 = vunpack.c.l.b16 %v258
    %v659 = vunpack.c.h.b16 %v258
    %v660 = vunpack.c.l.b16 %v259
    %v661 = vunpack.c.h.b16 %v259
    %v662 = vunpack.c.l.b16 %v260
    %v663 = vunpack.c.h.b16 %v260
    %v664 = vunpack.c.l.b16 %v261
    %v665 = vunpack.c.h.b16 %v261
    %v666 = vunpack.c.l.b16 %v262
    %v667 = vunpack.c.h.b16 %v262
    %v668 = vunpack.c.l.b16 %v263
    %v669 = vunpack.c.h.b16 %v263
    %v670 = vunpack.c.l.b16 %v264
    %v671 = vunpack.c.h.b16 %v264
    %v672 = vunpack.c.l.b16 %v265
    %v673 = vunpack.c.h.b16 %v265
    %v674 = vunpack.c.l.b16 %v266
    %v675 = vunpack.c.h.b16 %v266
    %v676 = vunpack.c.l.b16 %v267
    %v677 = vunpack.c.h.b16 %v267
    %v678 = vunpack.c.l.b16 %v268
    %v679 = vunpack.c.h.b16 %v268
    %v680 = vunpack.c.l.b16 %v269
    %v681 = vunpack.c.h.b16 %v269
    %v682 = vpack.c.b16 %v434, %v426
    %v683 = vpack.c.b16 %v435, %v427
    %v684 = vpack.c.b16 %v436, %v428
    %v685 = vpack.c.b16 %v437, %v429
    %v686 = vpack.c.b16 %v438, %v430
    %v687 = vpack.c.b16 %v439, %v431
    %v688 = vpack.c.b16 %v440, %v432
    %v689 = vpack.c.b16 %v441, %v433
    %v690 = vpack.c.b16 %v450, %v442
    %v691 = vpack.c.b16 %v451, %v443
    %v692 = vpack.c.b16 %v452, %v444
    %v693 = vpack.c.b16 %v453, %v445
    %v694 = vpack.c.b16 %v454, %v446
    %v695 = vpack.c.b16 %v455, %v447
    %v696 = vpack.c.b16 %v456, %v448
    %v697 = vpack.c.b16 %v457, %v449
    %v698 = vpack.c.b16 %v466, %v458
    %v699 = vpack.c.b16 %v467, %v459
    %v700 = vpack.c.b16 %v468, %v460
    %v701 = vpack.c.b16 %v469, %v461
    %v702 = vpack.c.b16 %v470, %v462
    %v703 = vpack.c.b16 %v471, %v463
    %v704 = vpack.c.b16 %v472, %v464
    %v705 = vpack.c.b16 %v473, %v465
    %v706 = vpack.c.b16 %v482, %v474
    %v707 = vpack.c.b16 %v483, %v475
    %v708 = vpack.c.b16 %v484, %v476
    %v709 = vpack.c.b16 %v485, %v477
    %v710 = vpack.c.b16 %v486, %v478
    %v711 = vpack.c.b16 %v487, %v479
    %v712 = vpack.c.b16 %v488, %v480
    %v713 = vpack.c.b16 %v489, %v481
    %v714 = vpack.c.b16 %v498, %v490
    %v715 = vpack.c.b16 %v499, %v491
    %v716 = vpack.c.b16 %v500, %v492
    %v717 = vpack.c.b16 %v501, %v493
    %v718 = vpack.c.b16 %v502, %v494
    %v719 = vpack.c.b16 %v503, %v495
    %v720 = vpack.c.b16 %v504, %v496
    %v721 = vpack.c.b16 %v505, %v497
    %v722 = vpack.c.b16 %v514, %v506
    %v723 = vpack.c.b16 %v515, %v507
    %v724 = vpack.c.b16 %v516, %v508
    %v725 = vpack.c.b16 %v517, %v509
    %v726 = vpack.c.b16 %v518, %v510
    %v727 = vpack.c.b16 %v519, %v511
    %v728 = vpack.c.b16 %v520, %v512
    %v729 = vpack.c.b16 %v521, %v513
    %v730 = vpack.c.b16 %v530, %v522
    %v731 = vpack.c.b16 %v531, %v523
    %v732 = vpack.c.b16 %v532, %v524
    %v733 = vpack.c.b16 %v533, %v525
    %v734 = vpack.c.b16 %v534, %v526
    %v735 = vpack.c.b16 %v535, %v527
    %v736 = vpack.c.b16 %v536, %v528
    %v737 = vpack.c.b16 %v537, %v529
    %v738 = vpack.c.b16 %v546, %v538
    %v739 = vpack.c.b16 %v547, %v539
    %v740 = vpack.c.b16 %v548, %v540
    %v741 = vpack.c.b16 %v549, %v541
    %v742 = vpack.c.b16 %v550, %v542
    %v743 = vpack.c.b16 %v551, %v543
    %v744 = vpack.c.b16 %v552, %v544
    %v745 = vpack.c.b16 %v553, %v545
    %v746 = vpack.c.b16 %v562, %v554
    %v747 = vpack.c.b16 %v563, %v555
    %v748 = vpack.c.b16 %v564, %v556
    %v749 = vpack.c.b16 %v565, %v557
    %v750 = vpack.c.b16 %v566, %v558
    %v751 = vpack.c.b16 %v567, %v559
    %v752 = vpack.c.b16 %v568, %v560
    %v753 = vpack.c.b16 %v569, %v561
    %v754 = vpack.c.b16 %v578, %v570
    %v755 = vpack.c.b16 %v579, %v571
    %v756 = vpack.c.b16 %v580, %v572
    %v757 = vpack.c.b16 %v581, %v573
    %v758 = vpack.c.b16 %v582, %v574
    %v759 = vpack.c.b16 %v583, %v575
    %v760 = vpack.c.b16 %v584, %v576
    %v761 = vpack.c.b16 %v585, %v577
    %v762 = vpack.c.b16 %v594, %v586
    %v763 = vpack.c.b16 %v595, %v587
    %v764 = vpack.c.b16 %v596, %v588
    %v765 = vpack.c.b16 %v597, %v589
    %v766 = vpack.c.b16 %v598, %v590
    %v767 = vpack.c.b16 %v599, %v591
    %v768 = vpack.c.b16 %v600, %v592
    %v769 = vpack.c.b16 %v601, %v593
    %v770 = vpack.c.b16 %v610, %v602
    %v771 = vpack.c.b16 %v611, %v603
    %v772 = vpack.c.b16 %v612, %v604
    %v773 = vpack.c.b16 %v613, %v605
    %v774 = vpack.c.b16 %v614, %v606
    %v775 = vpack.c.b16 %v615, %v607
    %v776 = vpack.c.b16 %v616, %v608
    %v777 = vpack.c.b16 %v617, %v609
    %v778 = vpack.c.b16 %v626, %v618
    %v779 = vpack.c.b16 %v627, %v619
    %v780 = vpack.c.b16 %v628, %v620
    %v781 = vpack.c.b16 %v629, %v621
    %v782 = vpack.c.b16 %v630, %v622
    %v783 = vpack.c.b16 %v631, %v623
    %v784 = vpack.c.b16 %v632, %v624
    %v785 = vpack.c.b16 %v633, %v625
    %v786 = vpack.c.b16 %v642, %v634
    %v787 = vpack.c.b16 %v643, %v635
    %v788 = vpack.c.b16 %v644, %v636
    %v789 = vpack.c.b16 %v645, %v637
    %v790 = vpack.c.b16 %v646, %v638
    %v791 = vpack.c.b16 %v647, %v639
    %v792 = vpack.c.b16 %v648, %v640
    %v793 = vpack.c.b16 %v649, %v641
    %v794 = vpack.c.b16 %v658, %v650
    %v795 = vpack.c.b16 %v659, %v651
    %v796 = vpack.c.b16 %v660, %v652
    %v797 = vpack.c.b16 %v661, %v653
    %v798 = vpack.c.b16 %v662, %v654
    %v799 = vpack.c.b16 %v663, %v655
    %v800 = vpack.c.b16 %v664, %v656
    %v801 = vpack.c.b16 %v665, %v657
    %v802 = vpack.c.b16 %v674, %v666
    %v803 = vpack.c.b16 %v675, %v667
    %v804 = vpack.c.b16 %v676, %v668
    %v805 = vpack.c.b16 %v677, %v669
    %v806 = vpack.c.b16 %v678, %v670
    %v807 = vpack.c.b16 %v679, %v671
    %v808 = vpack.c.b16 %v680, %v672
    %v809 = vpack.c.b16 %v681, %v673
    %938 = vmatpush.bf16.msra.mxu0 %v738
    %939 = vmatpush.bf16.msra.mxu0 %v730
    %940 = vmatpush.bf16.msra.mxu0 %v722
    %941 = vmatpush.bf16.msra.mxu0 %v714
    %942 = vmatpush.bf16.msra.mxu0 %v706
    %943 = vmatpush.bf16.msra.mxu0 %v698
    %944 = vmatpush.bf16.msra.mxu0 %v690
    %945 = vmatpush.bf16.msra.mxu0 %v682
    %946 = vmatmul.bf16.gmra.mxu0 %v294
    %v947 = vpop.f32.mrf.mxu0
    %v948 = vadd.f32 %v272, %v947
    %v949 = vpop.f32.mrf.mxu0
    %v950 = vadd.f32 %v272, %v949
    %951 = vdwg.mxu0
    %952 = vmatpush.bf16.msra.mxu0 %v802
    %953 = vmatpush.bf16.msra.mxu0 %v794
    %954 = vmatpush.bf16.msra.mxu0 %v786
    %955 = vmatpush.bf16.msra.mxu0 %v778
    %956 = vmatpush.bf16.msra.mxu0 %v770
    %957 = vmatpush.bf16.msra.mxu0 %v762
    %958 = vmatpush.bf16.msra.mxu0 %v754
    %959 = vmatpush.bf16.msra.mxu0 %v746
    %960 = vmatmul.bf16.gmra.mxu0 %v295
    %v961 = vpop.f32.mrf.mxu0
    %v962 = vadd.f32 %v948, %v961
    %v963 = vpop.f32.mrf.mxu0
    %v964 = vadd.f32 %v950, %v963
    %965 = vdwg.mxu0
    %966 = vmatpush.bf16.msra.mxu0 %v739
    %967 = vmatpush.bf16.msra.mxu0 %v731
    %968 = vmatpush.bf16.msra.mxu0 %v723
    %969 = vmatpush.bf16.msra.mxu0 %v715
    %970 = vmatpush.bf16.msra.mxu0 %v707
    %971 = vmatpush.bf16.msra.mxu0 %v699
    %972 = vmatpush.bf16.msra.mxu0 %v691
    %973 = vmatpush.bf16.msra.mxu0 %v683
    %974 = vmatmul.bf16.gmra.mxu0 %v294
    %v975 = vpop.f32.mrf.mxu0
    %v976 = vadd.f32 %v273, %v975
    %v977 = vpop.f32.mrf.mxu0
    %v978 = vadd.f32 %v273, %v977
    %979 = vdwg.mxu0
    %980 = vmatpush.bf16.msra.mxu0 %v803
    %981 = vmatpush.bf16.msra.mxu0 %v795
    %982 = vmatpush.bf16.msra.mxu0 %v787
    %983 = vmatpush.bf16.msra.mxu0 %v779
    %984 = vmatpush.bf16.msra.mxu0 %v771
    %985 = vmatpush.bf16.msra.mxu0 %v763
    %986 = vmatpush.bf16.msra.mxu0 %v755
    %987 = vmatpush.bf16.msra.mxu0 %v747
    %988 = vmatmul.bf16.gmra.mxu0 %v295
    %v989 = vpop.f32.mrf.mxu0
    %v990 = vadd.f32 %v976, %v989
    %v991 = vpop.f32.mrf.mxu0
    %v992 = vadd.f32 %v978, %v991
    %993 = vdwg.mxu0
    %994 = vmatpush.bf16.msra.mxu0 %v740
    %995 = vmatpush.bf16.msra.mxu0 %v732
    %996 = vmatpush.bf16.msra.mxu0 %v724
    %997 = vmatpush.bf16.msra.mxu0 %v716
    %998 = vmatpush.bf16.msra.mxu0 %v708
    %999 = vmatpush.bf16.msra.mxu0 %v700
    %1000 = vmatpush.bf16.msra.mxu0 %v692
    %1001 = vmatpush.bf16.msra.mxu0 %v684
    %1002 = vmatmul.bf16.gmra.mxu0 %v294
    %v1003 = vpop.f32.mrf.mxu0
    %v1004 = vadd.f32 %v274, %v1003
    %v1005 = vpop.f32.mrf.mxu0
    %v1006 = vadd.f32 %v274, %v1005
    %1007 = vdwg.mxu0
    %1008 = vmatpush.bf16.msra.mxu0 %v804
    %1009 = vmatpush.bf16.msra.mxu0 %v796
    %1010 = vmatpush.bf16.msra.mxu0 %v788
    %1011 = vmatpush.bf16.msra.mxu0 %v780
    %1012 = vmatpush.bf16.msra.mxu0 %v772
    %1013 = vmatpush.bf16.msra.mxu0 %v764
    %1014 = vmatpush.bf16.msra.mxu0 %v756
    %1015 = vmatpush.bf16.msra.mxu0 %v748
    %1016 = vmatmul.bf16.gmra.mxu0 %v295
    %v1017 = vpop.f32.mrf.mxu0
    %v1018 = vadd.f32 %v1004, %v1017
    %v1019 = vpop.f32.mrf.mxu0
    %v1020 = vadd.f32 %v1006, %v1019
    %1021 = vdwg.mxu0
    %1022 = vmatpush.bf16.msra.mxu0 %v741
    %1023 = vmatpush.bf16.msra.mxu0 %v733
    %1024 = vmatpush.bf16.msra.mxu0 %v725
    %1025 = vmatpush.bf16.msra.mxu0 %v717
    %1026 = vmatpush.bf16.msra.mxu0 %v709
    %1027 = vmatpush.bf16.msra.mxu0 %v701
    %1028 = vmatpush.bf16.msra.mxu0 %v693
    %1029 = vmatpush.bf16.msra.mxu0 %v685
    %1030 = vmatmul.bf16.gmra.mxu0 %v294
    %v1031 = vpop.f32.mrf.mxu0
    %v1032 = vadd.f32 %v275, %v1031
    %v1033 = vpop.f32.mrf.mxu0
    %v1034 = vadd.f32 %v275, %v1033
    %1035 = vdwg.mxu0
    %1036 = vmatpush.bf16.msra.mxu0 %v805
    %1037 = vmatpush.bf16.msra.mxu0 %v797
    %1038 = vmatpush.bf16.msra.mxu0 %v789
    %1039 = vmatpush.bf16.msra.mxu0 %v781
    %1040 = vmatpush.bf16.msra.mxu0 %v773
    %1041 = vmatpush.bf16.msra.mxu0 %v765
    %1042 = vmatpush.bf16.msra.mxu0 %v757
    %1043 = vmatpush.bf16.msra.mxu0 %v749
    %1044 = vmatmul.bf16.gmra.mxu0 %v295
    %v1045 = vpop.f32.mrf.mxu0
    %v1046 = vadd.f32 %v1032, %v1045
    %v1047 = vpop.f32.mrf.mxu0
    %v1048 = vadd.f32 %v1034, %v1047
    %1049 = vdwg.mxu0
    %1050 = vmatpush.bf16.msra.mxu0 %v742
    %1051 = vmatpush.bf16.msra.mxu0 %v734
    %1052 = vmatpush.bf16.msra.mxu0 %v726
    %1053 = vmatpush.bf16.msra.mxu0 %v718
    %1054 = vmatpush.bf16.msra.mxu0 %v710
    %1055 = vmatpush.bf16.msra.mxu0 %v702
    %1056 = vmatpush.bf16.msra.mxu0 %v694
    %1057 = vmatpush.bf16.msra.mxu0 %v686
    %1058 = vmatmul.bf16.gmra.mxu0 %v294
    %v1059 = vpop.f32.mrf.mxu0
    %v1060 = vadd.f32 %v276, %v1059
    %v1061 = vpop.f32.mrf.mxu0
    %v1062 = vadd.f32 %v276, %v1061
    %1063 = vdwg.mxu0
    %1064 = vmatpush.bf16.msra.mxu0 %v806
    %1065 = vmatpush.bf16.msra.mxu0 %v798
    %1066 = vmatpush.bf16.msra.mxu0 %v790
    %1067 = vmatpush.bf16.msra.mxu0 %v782
    %1068 = vmatpush.bf16.msra.mxu0 %v774
    %1069 = vmatpush.bf16.msra.mxu0 %v766
    %1070 = vmatpush.bf16.msra.mxu0 %v758
    %1071 = vmatpush.bf16.msra.mxu0 %v750
    %1072 = vmatmul.bf16.gmra.mxu0 %v295
    %v1073 = vpop.f32.mrf.mxu0
    %v1074 = vadd.f32 %v1060, %v1073
    %v1075 = vpop.f32.mrf.mxu0
    %v1076 = vadd.f32 %v1062, %v1075
    %1077 = vdwg.mxu0
    %1078 = vmatpush.bf16.msra.mxu0 %v743
    %1079 = vmatpush.bf16.msra.mxu0 %v735
    %1080 = vmatpush.bf16.msra.mxu0 %v727
    %1081 = vmatpush.bf16.msra.mxu0 %v719
    %1082 = vmatpush.bf16.msra.mxu0 %v711
    %1083 = vmatpush.bf16.msra.mxu0 %v703
    %1084 = vmatpush.bf16.msra.mxu0 %v695
    %1085 = vmatpush.bf16.msra.mxu0 %v687
    %1086 = vmatmul.bf16.gmra.mxu0 %v294
    %v1087 = vpop.f32.mrf.mxu0
    %v1088 = vadd.f32 %v277, %v1087
    %v1089 = vpop.f32.mrf.mxu0
    %v1090 = vadd.f32 %v277, %v1089
    %1091 = vdwg.mxu0
    %1092 = vmatpush.bf16.msra.mxu0 %v807
    %1093 = vmatpush.bf16.msra.mxu0 %v799
    %1094 = vmatpush.bf16.msra.mxu0 %v791
    %1095 = vmatpush.bf16.msra.mxu0 %v783
    %1096 = vmatpush.bf16.msra.mxu0 %v775
    %1097 = vmatpush.bf16.msra.mxu0 %v767
    %1098 = vmatpush.bf16.msra.mxu0 %v759
    %1099 = vmatpush.bf16.msra.mxu0 %v751
    %1100 = vmatmul.bf16.gmra.mxu0 %v295
    %v1101 = vpop.f32.mrf.mxu0
    %v1102 = vadd.f32 %v1088, %v1101
    %v1103 = vpop.f32.mrf.mxu0
    %v1104 = vadd.f32 %v1090, %v1103
    %1105 = vdwg.mxu0
    %1106 = vmatpush.bf16.msra.mxu0 %v744
    %1107 = vmatpush.bf16.msra.mxu0 %v736
    %1108 = vmatpush.bf16.msra.mxu0 %v728
    %1109 = vmatpush.bf16.msra.mxu0 %v720
    %1110 = vmatpush.bf16.msra.mxu0 %v712
    %1111 = vmatpush.bf16.msra.mxu0 %v704
    %1112 = vmatpush.bf16.msra.mxu0 %v696
    %1113 = vmatpush.bf16.msra.mxu0 %v688
    %1114 = vmatmul.bf16.gmra.mxu0 %v294
    %v1115 = vpop.f32.mrf.mxu0
    %v1116 = vadd.f32 %v278, %v1115
    %v1117 = vpop.f32.mrf.mxu0
    %v1118 = vadd.f32 %v278, %v1117
    %1119 = vdwg.mxu0
    %1120 = vmatpush.bf16.msra.mxu0 %v808
    %1121 = vmatpush.bf16.msra.mxu0 %v800
    %1122 = vmatpush.bf16.msra.mxu0 %v792
    %1123 = vmatpush.bf16.msra.mxu0 %v784
    %1124 = vmatpush.bf16.msra.mxu0 %v776
    %1125 = vmatpush.bf16.msra.mxu0 %v768
    %1126 = vmatpush.bf16.msra.mxu0 %v760
    %1127 = vmatpush.bf16.msra.mxu0 %v752
    %1128 = vmatmul.bf16.gmra.mxu0 %v295
    %v1129 = vpop.f32.mrf.mxu0
    %v1130 = vadd.f32 %v1116, %v1129
    %v1131 = vpop.f32.mrf.mxu0
    %v1132 = vadd.f32 %v1118, %v1131
    %1133 = vdwg.mxu0
    %1134 = vmatpush.bf16.msra.mxu0 %v745
    %1135 = vmatpush.bf16.msra.mxu0 %v737
    %1136 = vmatpush.bf16.msra.mxu0 %v729
    %1137 = vmatpush.bf16.msra.mxu0 %v721
    %1138 = vmatpush.bf16.msra.mxu0 %v713
    %1139 = vmatpush.bf16.msra.mxu0 %v705
    %1140 = vmatpush.bf16.msra.mxu0 %v697
    %1141 = vmatpush.bf16.msra.mxu0 %v689
    %1142 = vmatmul.bf16.gmra.mxu0 %v294
    %v1143 = vpop.f32.mrf.mxu0
    %v1144 = vadd.f32 %v279, %v1143
    %v1145 = vpop.f32.mrf.mxu0
    %v1146 = vadd.f32 %v279, %v1145
    %1147 = vdwg.mxu0
    %1148 = vmatpush.bf16.msra.mxu0 %v809
    %1149 = vmatpush.bf16.msra.mxu0 %v801
    %1150 = vmatpush.bf16.msra.mxu0 %v793
    %1151 = vmatpush.bf16.msra.mxu0 %v785
    %1152 = vmatpush.bf16.msra.mxu0 %v777
    %1153 = vmatpush.bf16.msra.mxu0 %v769
    %1154 = vmatpush.bf16.msra.mxu0 %v761
    %1155 = vmatpush.bf16.msra.mxu0 %v753
    %1156 = vmatmul.bf16.gmra.mxu0 %v295
    %v1157 = vpop.f32.mrf.mxu0
    %v1158 = vadd.f32 %v1144, %v1157
    %v1159 = vpop.f32.mrf.mxu0
    %v1160 = vadd.f32 %v1146, %v1159
    %1161 = vdwg.mxu0
    %vm1162 = vcmp.gt.f32.partialorder %v962, 0.0
    %vm1163 = vcmp.gt.f32.partialorder %v990, 0.0
    %vm1164 = vcmp.gt.f32.partialorder %v1018, 0.0
    %vm1165 = vcmp.gt.f32.partialorder %v1046, 0.0
    %vm1166 = vcmp.gt.f32.partialorder %v1074, 0.0
    %vm1167 = vcmp.gt.f32.partialorder %v1102, 0.0
    %vm1168 = vcmp.gt.f32.partialorder %v1130, 0.0
    %vm1169 = vcmp.gt.f32.partialorder %v1158, 0.0
    %vm1170 = vcmp.gt.f32.partialorder %v964, 0.0
    %vm1171 = vcmp.gt.f32.partialorder %v992, 0.0
    %vm1172 = vcmp.gt.f32.partialorder %v1020, 0.0
    %vm1173 = vcmp.gt.f32.partialorder %v1048, 0.0
    %vm1174 = vcmp.gt.f32.partialorder %v1076, 0.0
    %vm1175 = vcmp.gt.f32.partialorder %v1104, 0.0
    %vm1176 = vcmp.gt.f32.partialorder %v1132, 0.0
    %vm1177 = vcmp.gt.f32.partialorder %v1160, 0.0
    %v1178 = vmul.f32 %v962, 0.01
    %v1179 = vmul.f32 %v990, 0.01
    %v1180 = vmul.f32 %v1018, 0.01
    %v1181 = vmul.f32 %v1046, 0.01
    %v1182 = vmul.f32 %v1074, 0.01
    %v1183 = vmul.f32 %v1102, 0.01
    %v1184 = vmul.f32 %v1130, 0.01
    %v1185 = vmul.f32 %v1158, 0.01
    %v1186 = vmul.f32 %v964, 0.01
    %v1187 = vmul.f32 %v992, 0.01
    %v1188 = vmul.f32 %v1020, 0.01
    %v1189 = vmul.f32 %v1048, 0.01
    %v1190 = vmul.f32 %v1076, 0.01
    %v1191 = vmul.f32 %v1104, 0.01
    %v1192 = vmul.f32 %v1132, 0.01
    %v1193 = vmul.f32 %v1160, 0.01
    %v1194 = vsel %vm1162, %v962, %v1178
    %v1195 = vsel %vm1163, %v990, %v1179
    %v1196 = vsel %vm1164, %v1018, %v1180
    %v1197 = vsel %vm1165, %v1046, %v1181
    %v1198 = vsel %vm1166, %v1074, %v1182
    %v1199 = vsel %vm1167, %v1102, %v1183
    %v1200 = vsel %vm1168, %v1130, %v1184
    %v1201 = vsel %vm1169, %v1158, %v1185
    %v1202 = vsel %vm1170, %v964, %v1186
    %v1203 = vsel %vm1171, %v992, %v1187
    %v1204 = vsel %vm1172, %v1020, %v1188
    %v1205 = vsel %vm1173, %v1048, %v1189
    %v1206 = vsel %vm1174, %v1076, %v1190
    %v1207 = vsel %vm1175, %v1104, %v1191
    %v1208 = vsel %vm1176, %v1132, %v1192
    %v1209 = vsel %vm1177, %v1160, %v1193
    %v1210 = vpack.c.bf16 %v1202, %v1194
    %v1211 = vpack.c.bf16 %v1203, %v1195
    %v1212 = vpack.c.bf16 %v1204, %v1196
    %v1213 = vpack.c.bf16 %v1205, %v1197
    %v1214 = vpack.c.bf16 %v1206, %v1198
    %v1215 = vpack.c.bf16 %v1207, %v1199
    %v1216 = vpack.c.bf16 %v1208, %v1200
    %v1217 = vpack.c.bf16 %v1209, %v1201
    %v1218 = vld [vmem:[#allocation4] sm:$0xff]
    %v1219 = vld [vmem:[#allocation4 + $0x8] sm:$0xff]
    %v1220 = vld [vmem:[#allocation4 + $0x10] sm:$0xff]
    %v1221 = vld [vmem:[#allocation4 + $0x18] sm:$0xff]
    %v1222 = vld [vmem:[#allocation4 + $0x20] sm:$0xff]
    %v1223 = vld [vmem:[#allocation4 + $0x28] sm:$0xff]
    %v1224 = vld [vmem:[#allocation4 + $0x30] sm:$0xff]
    %v1225 = vld [vmem:[#allocation4 + $0x38] sm:$0xff]
    %v1226 = vld [vmem:[#allocation4 + $0x40] sm:$0xff]
    %v1227 = vld [vmem:[#allocation4 + $0x48] sm:$0xff]
    %v1228 = vld [vmem:[#allocation4 + $0x50] sm:$0xff]
    %v1229 = vld [vmem:[#allocation4 + $0x58] sm:$0xff]
    %v1230 = vld [vmem:[#allocation4 + $0x60] sm:$0xff]
    %v1231 = vld [vmem:[#allocation4 + $0x68] sm:$0xff]
    %v1232 = vld [vmem:[#allocation4 + $0x70] sm:$0xff]
    %v1233 = vld [vmem:[#allocation4 + $0x78] sm:$0xff]
    %v1234 = vld [vmem:[#allocation4 + $0x80] sm:$0xff]
    %v1235 = vld [vmem:[#allocation4 + $0x88] sm:$0xff]
    %v1236 = vld [vmem:[#allocation4 + $0x90] sm:$0xff]
    %v1237 = vld [vmem:[#allocation4 + $0x98] sm:$0xff]
    %v1238 = vld [vmem:[#allocation4 + $0xa0] sm:$0xff]
    %v1239 = vld [vmem:[#allocation4 + $0xa8] sm:$0xff]
    %v1240 = vld [vmem:[#allocation4 + $0xb0] sm:$0xff]
    %v1241 = vld [vmem:[#allocation4 + $0xb8] sm:$0xff]
    %v1242 = vld [vmem:[#allocation4 + $0xc0] sm:$0xff]
    %v1243 = vld [vmem:[#allocation4 + $0xc8] sm:$0xff]
    %v1244 = vld [vmem:[#allocation4 + $0xd0] sm:$0xff]
    %v1245 = vld [vmem:[#allocation4 + $0xd8] sm:$0xff]
    %v1246 = vld [vmem:[#allocation4 + $0xe0] sm:$0xff]
    %v1247 = vld [vmem:[#allocation4 + $0xe8] sm:$0xff]
    %v1248 = vld [vmem:[#allocation4 + $0xf0] sm:$0xff]
    %v1249 = vld [vmem:[#allocation4 + $0xf8] sm:$0xff]
    %v1250 = vld [vmem:[#allocation4 + $0x100] sm:$0xff]
    %v1251 = vld [vmem:[#allocation4 + $0x108] sm:$0xff]
    %v1252 = vld [vmem:[#allocation4 + $0x110] sm:$0xff]
    %v1253 = vld [vmem:[#allocation4 + $0x118] sm:$0xff]
    %v1254 = vld [vmem:[#allocation4 + $0x120] sm:$0xff]
    %v1255 = vld [vmem:[#allocation4 + $0x128] sm:$0xff]
    %v1256 = vld [vmem:[#allocation4 + $0x130] sm:$0xff]
    %v1257 = vld [vmem:[#allocation4 + $0x138] sm:$0xff]
    %v1258 = vld [vmem:[#allocation4 + $0x140] sm:$0xff]
    %v1259 = vld [vmem:[#allocation4 + $0x148] sm:$0xff]
    %v1260 = vld [vmem:[#allocation4 + $0x150] sm:$0xff]
    %v1261 = vld [vmem:[#allocation4 + $0x158] sm:$0xff]
    %v1262 = vld [vmem:[#allocation4 + $0x160] sm:$0xff]
    %v1263 = vld [vmem:[#allocation4 + $0x168] sm:$0xff]
    %v1264 = vld [vmem:[#allocation4 + $0x170] sm:$0xff]
    %v1265 = vld [vmem:[#allocation4 + $0x178] sm:$0xff]
    %v1266 = vld [vmem:[#allocation4 + $0x180] sm:$0xff]
    %v1267 = vld [vmem:[#allocation4 + $0x188] sm:$0xff]
    %v1268 = vld [vmem:[#allocation4 + $0x190] sm:$0xff]
    %v1269 = vld [vmem:[#allocation4 + $0x198] sm:$0xff]
    %v1270 = vld [vmem:[#allocation4 + $0x1a0] sm:$0xff]
    %v1271 = vld [vmem:[#allocation4 + $0x1a8] sm:$0xff]
    %v1272 = vld [vmem:[#allocation4 + $0x1b0] sm:$0xff]
    %v1273 = vld [vmem:[#allocation4 + $0x1b8] sm:$0xff]
    %v1274 = vld [vmem:[#allocation4 + $0x1c0] sm:$0xff]
    %v1275 = vld [vmem:[#allocation4 + $0x1c8] sm:$0xff]
    %v1276 = vld [vmem:[#allocation4 + $0x1d0] sm:$0xff]
    %v1277 = vld [vmem:[#allocation4 + $0x1d8] sm:$0xff]
    %v1278 = vld [vmem:[#allocation4 + $0x1e0] sm:$0xff]
    %v1279 = vld [vmem:[#allocation4 + $0x1e8] sm:$0xff]
    %v1280 = vld [vmem:[#allocation4 + $0x1f0] sm:$0xff]
    %v1281 = vld [vmem:[#allocation4 + $0x1f8] sm:$0xff]
    %v1282 = vld [vmem:[#allocation4 + $0x200] sm:$0xff]
    %v1283 = vld [vmem:[#allocation4 + $0x208] sm:$0xff]
    %v1284 = vld [vmem:[#allocation4 + $0x210] sm:$0xff]
    %v1285 = vld [vmem:[#allocation4 + $0x218] sm:$0xff]
    %v1286 = vld [vmem:[#allocation4 + $0x220] sm:$0xff]
    %v1287 = vld [vmem:[#allocation4 + $0x228] sm:$0xff]
    %v1288 = vld [vmem:[#allocation4 + $0x230] sm:$0xff]
    %v1289 = vld [vmem:[#allocation4 + $0x238] sm:$0xff]
    %v1290 = vld [vmem:[#allocation4 + $0x240] sm:$0xff]
    %v1291 = vld [vmem:[#allocation4 + $0x248] sm:$0xff]
    %v1292 = vld [vmem:[#allocation4 + $0x250] sm:$0xff]
    %v1293 = vld [vmem:[#allocation4 + $0x258] sm:$0xff]
    %v1294 = vld [vmem:[#allocation4 + $0x260] sm:$0xff]
    %v1295 = vld [vmem:[#allocation4 + $0x268] sm:$0xff]
    %v1296 = vld [vmem:[#allocation4 + $0x270] sm:$0xff]
    %v1297 = vld [vmem:[#allocation4 + $0x278] sm:$0xff]
    %v1298 = vld [vmem:[#allocation4 + $0x280] sm:$0xff]
    %v1299 = vld [vmem:[#allocation4 + $0x288] sm:$0xff]
    %v1300 = vld [vmem:[#allocation4 + $0x290] sm:$0xff]
    %v1301 = vld [vmem:[#allocation4 + $0x298] sm:$0xff]
    %v1302 = vld [vmem:[#allocation4 + $0x2a0] sm:$0xff]
    %v1303 = vld [vmem:[#allocation4 + $0x2a8] sm:$0xff]
    %v1304 = vld [vmem:[#allocation4 + $0x2b0] sm:$0xff]
    %v1305 = vld [vmem:[#allocation4 + $0x2b8] sm:$0xff]
    %v1306 = vld [vmem:[#allocation4 + $0x2c0] sm:$0xff]
    %v1307 = vld [vmem:[#allocation4 + $0x2c8] sm:$0xff]
    %v1308 = vld [vmem:[#allocation4 + $0x2d0] sm:$0xff]
    %v1309 = vld [vmem:[#allocation4 + $0x2d8] sm:$0xff]
    %v1310 = vld [vmem:[#allocation4 + $0x2e0] sm:$0xff]
    %v1311 = vld [vmem:[#allocation4 + $0x2e8] sm:$0xff]
    %v1312 = vld [vmem:[#allocation4 + $0x2f0] sm:$0xff]
    %v1313 = vld [vmem:[#allocation4 + $0x2f8] sm:$0xff]
    %v1314 = vld [vmem:[#allocation4 + $0x300] sm:$0xff]
    %v1315 = vld [vmem:[#allocation4 + $0x308] sm:$0xff]
    %v1316 = vld [vmem:[#allocation4 + $0x310] sm:$0xff]
    %v1317 = vld [vmem:[#allocation4 + $0x318] sm:$0xff]
    %v1318 = vld [vmem:[#allocation4 + $0x320] sm:$0xff]
    %v1319 = vld [vmem:[#allocation4 + $0x328] sm:$0xff]
    %v1320 = vld [vmem:[#allocation4 + $0x330] sm:$0xff]
    %v1321 = vld [vmem:[#allocation4 + $0x338] sm:$0xff]
    %v1322 = vld [vmem:[#allocation4 + $0x340] sm:$0xff]
    %v1323 = vld [vmem:[#allocation4 + $0x348] sm:$0xff]
    %v1324 = vld [vmem:[#allocation4 + $0x350] sm:$0xff]
    %v1325 = vld [vmem:[#allocation4 + $0x358] sm:$0xff]
    %v1326 = vld [vmem:[#allocation4 + $0x360] sm:$0xff]
    %v1327 = vld [vmem:[#allocation4 + $0x368] sm:$0xff]
    %v1328 = vld [vmem:[#allocation4 + $0x370] sm:$0xff]
    %v1329 = vld [vmem:[#allocation4 + $0x378] sm:$0xff]
    %v1330 = vld [vmem:[#allocation4 + $0x380] sm:$0xff]
    %v1331 = vld [vmem:[#allocation4 + $0x388] sm:$0xff]
    %v1332 = vld [vmem:[#allocation4 + $0x390] sm:$0xff]
    %v1333 = vld [vmem:[#allocation4 + $0x398] sm:$0xff]
    %v1334 = vld [vmem:[#allocation4 + $0x3a0] sm:$0xff]
    %v1335 = vld [vmem:[#allocation4 + $0x3a8] sm:$0xff]
    %v1336 = vld [vmem:[#allocation4 + $0x3b0] sm:$0xff]
    %v1337 = vld [vmem:[#allocation4 + $0x3b8] sm:$0xff]
    %v1338 = vld [vmem:[#allocation4 + $0x3c0] sm:$0xff]
    %v1339 = vld [vmem:[#allocation4 + $0x3c8] sm:$0xff]
    %v1340 = vld [vmem:[#allocation4 + $0x3d0] sm:$0xff]
    %v1341 = vld [vmem:[#allocation4 + $0x3d8] sm:$0xff]
    %v1342 = vld [vmem:[#allocation4 + $0x3e0] sm:$0xff]
    %v1343 = vld [vmem:[#allocation4 + $0x3e8] sm:$0xff]
    %v1344 = vld [vmem:[#allocation4 + $0x3f0] sm:$0xff]
    %v1345 = vld [vmem:[#allocation4 + $0x3f8] sm:$0xff]
    %v1346 = vld [vmem:[#allocation4 + $0x400] sm:$0xff]
    %v1347 = vld [vmem:[#allocation4 + $0x408] sm:$0xff]
    %v1348 = vld [vmem:[#allocation4 + $0x410] sm:$0xff]
    %v1349 = vld [vmem:[#allocation4 + $0x418] sm:$0xff]
    %v1350 = vld [vmem:[#allocation4 + $0x420] sm:$0xff]
    %v1351 = vld [vmem:[#allocation4 + $0x428] sm:$0xff]
    %v1352 = vld [vmem:[#allocation4 + $0x430] sm:$0xff]
    %v1353 = vld [vmem:[#allocation4 + $0x438] sm:$0xff]
    %v1354 = vld [vmem:[#allocation4 + $0x440] sm:$0xff]
    %v1355 = vld [vmem:[#allocation4 + $0x448] sm:$0xff]
    %v1356 = vld [vmem:[#allocation4 + $0x450] sm:$0xff]
    %v1357 = vld [vmem:[#allocation4 + $0x458] sm:$0xff]
    %v1358 = vld [vmem:[#allocation4 + $0x460] sm:$0xff]
    %v1359 = vld [vmem:[#allocation4 + $0x468] sm:$0xff]
    %v1360 = vld [vmem:[#allocation4 + $0x470] sm:$0xff]
    %v1361 = vld [vmem:[#allocation4 + $0x478] sm:$0xff]
    %v1362 = vld [vmem:[#allocation4 + $0x480] sm:$0xff]
    %v1363 = vld [vmem:[#allocation4 + $0x488] sm:$0xff]
    %v1364 = vld [vmem:[#allocation4 + $0x490] sm:$0xff]
    %v1365 = vld [vmem:[#allocation4 + $0x498] sm:$0xff]
    %v1366 = vld [vmem:[#allocation4 + $0x4a0] sm:$0xff]
    %v1367 = vld [vmem:[#allocation4 + $0x4a8] sm:$0xff]
    %v1368 = vld [vmem:[#allocation4 + $0x4b0] sm:$0xff]
    %v1369 = vld [vmem:[#allocation4 + $0x4b8] sm:$0xff]
    %v1370 = vld [vmem:[#allocation4 + $0x4c0] sm:$0xff]
    %v1371 = vld [vmem:[#allocation4 + $0x4c8] sm:$0xff]
    %v1372 = vld [vmem:[#allocation4 + $0x4d0] sm:$0xff]
    %v1373 = vld [vmem:[#allocation4 + $0x4d8] sm:$0xff]
    %v1374 = vld [vmem:[#allocation4 + $0x4e0] sm:$0xff]
    %v1375 = vld [vmem:[#allocation4 + $0x4e8] sm:$0xff]
    %v1376 = vld [vmem:[#allocation4 + $0x4f0] sm:$0xff]
    %v1377 = vld [vmem:[#allocation4 + $0x4f8] sm:$0xff]
    %v1378 = vld [vmem:[#allocation4 + $0x500] sm:$0xff]
    %v1379 = vld [vmem:[#allocation4 + $0x508] sm:$0xff]
    %v1380 = vld [vmem:[#allocation4 + $0x510] sm:$0xff]
    %v1381 = vld [vmem:[#allocation4 + $0x518] sm:$0xff]
    %v1382 = vld [vmem:[#allocation4 + $0x520] sm:$0xff]
    %v1383 = vld [vmem:[#allocation4 + $0x528] sm:$0xff]
    %v1384 = vld [vmem:[#allocation4 + $0x530] sm:$0xff]
    %v1385 = vld [vmem:[#allocation4 + $0x538] sm:$0xff]
    %v1386 = vld [vmem:[#allocation4 + $0x540] sm:$0xff]
    %v1387 = vld [vmem:[#allocation4 + $0x548] sm:$0xff]
    %v1388 = vld [vmem:[#allocation4 + $0x550] sm:$0xff]
    %v1389 = vld [vmem:[#allocation4 + $0x558] sm:$0xff]
    %v1390 = vld [vmem:[#allocation4 + $0x560] sm:$0xff]
    %v1391 = vld [vmem:[#allocation4 + $0x568] sm:$0xff]
    %v1392 = vld [vmem:[#allocation4 + $0x570] sm:$0xff]
    %v1393 = vld [vmem:[#allocation4 + $0x578] sm:$0xff]
    %v1394 = vld [vmem:[#allocation4 + $0x580] sm:$0xff]
    %v1395 = vld [vmem:[#allocation4 + $0x588] sm:$0xff]
    %v1396 = vld [vmem:[#allocation4 + $0x590] sm:$0xff]
    %v1397 = vld [vmem:[#allocation4 + $0x598] sm:$0xff]
    %v1398 = vld [vmem:[#allocation4 + $0x5a0] sm:$0xff]
    %v1399 = vld [vmem:[#allocation4 + $0x5a8] sm:$0xff]
    %v1400 = vld [vmem:[#allocation4 + $0x5b0] sm:$0xff]
    %v1401 = vld [vmem:[#allocation4 + $0x5b8] sm:$0xff]
    %v1402 = vld [vmem:[#allocation4 + $0x5c0] sm:$0xff]
    %v1403 = vld [vmem:[#allocation4 + $0x5c8] sm:$0xff]
    %v1404 = vld [vmem:[#allocation4 + $0x5d0] sm:$0xff]
    %v1405 = vld [vmem:[#allocation4 + $0x5d8] sm:$0xff]
    %v1406 = vld [vmem:[#allocation4 + $0x5e0] sm:$0xff]
    %v1407 = vld [vmem:[#allocation4 + $0x5e8] sm:$0xff]
    %v1408 = vld [vmem:[#allocation4 + $0x5f0] sm:$0xff]
    %v1409 = vld [vmem:[#allocation4 + $0x5f8] sm:$0xff]
    %v1410 = vld [vmem:[#allocation4 + $0x600] sm:$0xff]
    %v1411 = vld [vmem:[#allocation4 + $0x608] sm:$0xff]
    %v1412 = vld [vmem:[#allocation4 + $0x610] sm:$0xff]
    %v1413 = vld [vmem:[#allocation4 + $0x618] sm:$0xff]
    %v1414 = vld [vmem:[#allocation4 + $0x620] sm:$0xff]
    %v1415 = vld [vmem:[#allocation4 + $0x628] sm:$0xff]
    %v1416 = vld [vmem:[#allocation4 + $0x630] sm:$0xff]
    %v1417 = vld [vmem:[#allocation4 + $0x638] sm:$0xff]
    %v1418 = vld [vmem:[#allocation4 + $0x640] sm:$0xff]
    %v1419 = vld [vmem:[#allocation4 + $0x648] sm:$0xff]
    %v1420 = vld [vmem:[#allocation4 + $0x650] sm:$0xff]
    %v1421 = vld [vmem:[#allocation4 + $0x658] sm:$0xff]
    %v1422 = vld [vmem:[#allocation4 + $0x660] sm:$0xff]
    %v1423 = vld [vmem:[#allocation4 + $0x668] sm:$0xff]
    %v1424 = vld [vmem:[#allocation4 + $0x670] sm:$0xff]
    %v1425 = vld [vmem:[#allocation4 + $0x678] sm:$0xff]
    %v1426 = vld [vmem:[#allocation4 + $0x680] sm:$0xff]
    %v1427 = vld [vmem:[#allocation4 + $0x688] sm:$0xff]
    %v1428 = vld [vmem:[#allocation4 + $0x690] sm:$0xff]
    %v1429 = vld [vmem:[#allocation4 + $0x698] sm:$0xff]
    %v1430 = vld [vmem:[#allocation4 + $0x6a0] sm:$0xff]
    %v1431 = vld [vmem:[#allocation4 + $0x6a8] sm:$0xff]
    %v1432 = vld [vmem:[#allocation4 + $0x6b0] sm:$0xff]
    %v1433 = vld [vmem:[#allocation4 + $0x6b8] sm:$0xff]
    %v1434 = vld [vmem:[#allocation4 + $0x6c0] sm:$0xff]
    %v1435 = vld [vmem:[#allocation4 + $0x6c8] sm:$0xff]
    %v1436 = vld [vmem:[#allocation4 + $0x6d0] sm:$0xff]
    %v1437 = vld [vmem:[#allocation4 + $0x6d8] sm:$0xff]
    %v1438 = vld [vmem:[#allocation4 + $0x6e0] sm:$0xff]
    %v1439 = vld [vmem:[#allocation4 + $0x6e8] sm:$0xff]
    %v1440 = vld [vmem:[#allocation4 + $0x6f0] sm:$0xff]
    %v1441 = vld [vmem:[#allocation4 + $0x6f8] sm:$0xff]
    %v1442 = vld [vmem:[#allocation4 + $0x700] sm:$0xff]
    %v1443 = vld [vmem:[#allocation4 + $0x708] sm:$0xff]
    %v1444 = vld [vmem:[#allocation4 + $0x710] sm:$0xff]
    %v1445 = vld [vmem:[#allocation4 + $0x718] sm:$0xff]
    %v1446 = vld [vmem:[#allocation4 + $0x720] sm:$0xff]
    %v1447 = vld [vmem:[#allocation4 + $0x728] sm:$0xff]
    %v1448 = vld [vmem:[#allocation4 + $0x730] sm:$0xff]
    %v1449 = vld [vmem:[#allocation4 + $0x738] sm:$0xff]
    %v1450 = vld [vmem:[#allocation4 + $0x740] sm:$0xff]
    %v1451 = vld [vmem:[#allocation4 + $0x748] sm:$0xff]
    %v1452 = vld [vmem:[#allocation4 + $0x750] sm:$0xff]
    %v1453 = vld [vmem:[#allocation4 + $0x758] sm:$0xff]
    %v1454 = vld [vmem:[#allocation4 + $0x760] sm:$0xff]
    %v1455 = vld [vmem:[#allocation4 + $0x768] sm:$0xff]
    %v1456 = vld [vmem:[#allocation4 + $0x770] sm:$0xff]
    %v1457 = vld [vmem:[#allocation4 + $0x778] sm:$0xff]
    %v1458 = vld [vmem:[#allocation4 + $0x780] sm:$0xff]
    %v1459 = vld [vmem:[#allocation4 + $0x788] sm:$0xff]
    %v1460 = vld [vmem:[#allocation4 + $0x790] sm:$0xff]
    %v1461 = vld [vmem:[#allocation4 + $0x798] sm:$0xff]
    %v1462 = vld [vmem:[#allocation4 + $0x7a0] sm:$0xff]
    %v1463 = vld [vmem:[#allocation4 + $0x7a8] sm:$0xff]
    %v1464 = vld [vmem:[#allocation4 + $0x7b0] sm:$0xff]
    %v1465 = vld [vmem:[#allocation4 + $0x7b8] sm:$0xff]
    %v1466 = vld [vmem:[#allocation4 + $0x7c0] sm:$0xff]
    %v1467 = vld [vmem:[#allocation4 + $0x7c8] sm:$0xff]
    %v1468 = vld [vmem:[#allocation4 + $0x7d0] sm:$0xff]
    %v1469 = vld [vmem:[#allocation4 + $0x7d8] sm:$0xff]
    %v1470 = vld [vmem:[#allocation4 + $0x7e0] sm:$0xff]
    %v1471 = vld [vmem:[#allocation4 + $0x7e8] sm:$0xff]
    %v1472 = vld [vmem:[#allocation4 + $0x7f0] sm:$0xff]
    %v1473 = vld [vmem:[#allocation4 + $0x7f8] sm:$0xff]
    %v1474 = vld [vmem:[%s4] sm:$0xf]
    %v1476 = vperm.slane %v1474, 0
    %v1477 = vperm.slane %v1474, 1
    %v1478 = vperm.slane %v1474, 2
    %v1479 = vperm.slane %v1474, 3
    %v1740 = vunpack.c.l.b16 %v1218
    %v1741 = vunpack.c.h.b16 %v1218
    %v1742 = vunpack.c.l.b16 %v1219
    %v1743 = vunpack.c.h.b16 %v1219
    %v1744 = vunpack.c.l.b16 %v1220
    %v1745 = vunpack.c.h.b16 %v1220
    %v1746 = vunpack.c.l.b16 %v1221
    %v1747 = vunpack.c.h.b16 %v1221
    %v1748 = vunpack.c.l.b16 %v1222
    %v1749 = vunpack.c.h.b16 %v1222
    %v1750 = vunpack.c.l.b16 %v1223
    %v1751 = vunpack.c.h.b16 %v1223
    %v1752 = vunpack.c.l.b16 %v1224
    %v1753 = vunpack.c.h.b16 %v1224
    %v1754 = vunpack.c.l.b16 %v1225
    %v1755 = vunpack.c.h.b16 %v1225
    %v1756 = vunpack.c.l.b16 %v1226
    %v1757 = vunpack.c.h.b16 %v1226
    %v1758 = vunpack.c.l.b16 %v1227
    %v1759 = vunpack.c.h.b16 %v1227
    %v1760 = vunpack.c.l.b16 %v1228
    %v1761 = vunpack.c.h.b16 %v1228
    %v1762 = vunpack.c.l.b16 %v1229
    %v1763 = vunpack.c.h.b16 %v1229
    %v1764 = vunpack.c.l.b16 %v1230
    %v1765 = vunpack.c.h.b16 %v1230
    %v1766 = vunpack.c.l.b16 %v1231
    %v1767 = vunpack.c.h.b16 %v1231
    %v1768 = vunpack.c.l.b16 %v1232
    %v1769 = vunpack.c.h.b16 %v1232
    %v1770 = vunpack.c.l.b16 %v1233
    %v1771 = vunpack.c.h.b16 %v1233
    %v1772 = vunpack.c.l.b16 %v1234
    %v1773 = vunpack.c.h.b16 %v1234
    %v1774 = vunpack.c.l.b16 %v1235
    %v1775 = vunpack.c.h.b16 %v1235
    %v1776 = vunpack.c.l.b16 %v1236
    %v1777 = vunpack.c.h.b16 %v1236
    %v1778 = vunpack.c.l.b16 %v1237
    %v1779 = vunpack.c.h.b16 %v1237
    %v1780 = vunpack.c.l.b16 %v1238
    %v1781 = vunpack.c.h.b16 %v1238
    %v1782 = vunpack.c.l.b16 %v1239
    %v1783 = vunpack.c.h.b16 %v1239
    %v1784 = vunpack.c.l.b16 %v1240
    %v1785 = vunpack.c.h.b16 %v1240
    %v1786 = vunpack.c.l.b16 %v1241
    %v1787 = vunpack.c.h.b16 %v1241
    %v1788 = vunpack.c.l.b16 %v1242
    %v1789 = vunpack.c.h.b16 %v1242
    %v1790 = vunpack.c.l.b16 %v1243
    %v1791 = vunpack.c.h.b16 %v1243
    %v1792 = vunpack.c.l.b16 %v1244
    %v1793 = vunpack.c.h.b16 %v1244
    %v1794 = vunpack.c.l.b16 %v1245
    %v1795 = vunpack.c.h.b16 %v1245
    %v1796 = vunpack.c.l.b16 %v1246
    %v1797 = vunpack.c.h.b16 %v1246
    %v1798 = vunpack.c.l.b16 %v1247
    %v1799 = vunpack.c.h.b16 %v1247
    %v1800 = vunpack.c.l.b16 %v1248
    %v1801 = vunpack.c.h.b16 %v1248
    %v1802 = vunpack.c.l.b16 %v1249
    %v1803 = vunpack.c.h.b16 %v1249
    %v1804 = vunpack.c.l.b16 %v1250
    %v1805 = vunpack.c.h.b16 %v1250
    %v1806 = vunpack.c.l.b16 %v1251
    %v1807 = vunpack.c.h.b16 %v1251
    %v1808 = vunpack.c.l.b16 %v1252
    %v1809 = vunpack.c.h.b16 %v1252
    %v1810 = vunpack.c.l.b16 %v1253
    %v1811 = vunpack.c.h.b16 %v1253
    %v1812 = vunpack.c.l.b16 %v1254
    %v1813 = vunpack.c.h.b16 %v1254
    %v1814 = vunpack.c.l.b16 %v1255
    %v1815 = vunpack.c.h.b16 %v1255
    %v1816 = vunpack.c.l.b16 %v1256
    %v1817 = vunpack.c.h.b16 %v1256
    %v1818 = vunpack.c.l.b16 %v1257
    %v1819 = vunpack.c.h.b16 %v1257
    %v1820 = vunpack.c.l.b16 %v1258
    %v1821 = vunpack.c.h.b16 %v1258
    %v1822 = vunpack.c.l.b16 %v1259
    %v1823 = vunpack.c.h.b16 %v1259
    %v1824 = vunpack.c.l.b16 %v1260
    %v1825 = vunpack.c.h.b16 %v1260
    %v1826 = vunpack.c.l.b16 %v1261
    %v1827 = vunpack.c.h.b16 %v1261
    %v1828 = vunpack.c.l.b16 %v1262
    %v1829 = vunpack.c.h.b16 %v1262
    %v1830 = vunpack.c.l.b16 %v1263
    %v1831 = vunpack.c.h.b16 %v1263
    %v1832 = vunpack.c.l.b16 %v1264
    %v1833 = vunpack.c.h.b16 %v1264
    %v1834 = vunpack.c.l.b16 %v1265
    %v1835 = vunpack.c.h.b16 %v1265
    %v1836 = vunpack.c.l.b16 %v1266
    %v1837 = vunpack.c.h.b16 %v1266
    %v1838 = vunpack.c.l.b16 %v1267
    %v1839 = vunpack.c.h.b16 %v1267
    %v1840 = vunpack.c.l.b16 %v1268
    %v1841 = vunpack.c.h.b16 %v1268
    %v1842 = vunpack.c.l.b16 %v1269
    %v1843 = vunpack.c.h.b16 %v1269
    %v1844 = vunpack.c.l.b16 %v1270
    %v1845 = vunpack.c.h.b16 %v1270
    %v1846 = vunpack.c.l.b16 %v1271
    %v1847 = vunpack.c.h.b16 %v1271
    %v1848 = vunpack.c.l.b16 %v1272
    %v1849 = vunpack.c.h.b16 %v1272
    %v1850 = vunpack.c.l.b16 %v1273
    %v1851 = vunpack.c.h.b16 %v1273
    %v1852 = vunpack.c.l.b16 %v1274
    %v1853 = vunpack.c.h.b16 %v1274
    %v1854 = vunpack.c.l.b16 %v1275
    %v1855 = vunpack.c.h.b16 %v1275
    %v1856 = vunpack.c.l.b16 %v1276
    %v1857 = vunpack.c.h.b16 %v1276
    %v1858 = vunpack.c.l.b16 %v1277
    %v1859 = vunpack.c.h.b16 %v1277
    %v1860 = vunpack.c.l.b16 %v1278
    %v1861 = vunpack.c.h.b16 %v1278
    %v1862 = vunpack.c.l.b16 %v1279
    %v1863 = vunpack.c.h.b16 %v1279
    %v1864 = vunpack.c.l.b16 %v1280
    %v1865 = vunpack.c.h.b16 %v1280
    %v1866 = vunpack.c.l.b16 %v1281
    %v1867 = vunpack.c.h.b16 %v1281
    %v1868 = vunpack.c.l.b16 %v1282
    %v1869 = vunpack.c.h.b16 %v1282
    %v1870 = vunpack.c.l.b16 %v1283
    %v1871 = vunpack.c.h.b16 %v1283
    %v1872 = vunpack.c.l.b16 %v1284
    %v1873 = vunpack.c.h.b16 %v1284
    %v1874 = vunpack.c.l.b16 %v1285
    %v1875 = vunpack.c.h.b16 %v1285
    %v1876 = vunpack.c.l.b16 %v1286
    %v1877 = vunpack.c.h.b16 %v1286
    %v1878 = vunpack.c.l.b16 %v1287
    %v1879 = vunpack.c.h.b16 %v1287
    %v1880 = vunpack.c.l.b16 %v1288
    %v1881 = vunpack.c.h.b16 %v1288
    %v1882 = vunpack.c.l.b16 %v1289
    %v1883 = vunpack.c.h.b16 %v1289
    %v1884 = vunpack.c.l.b16 %v1290
    %v1885 = vunpack.c.h.b16 %v1290
    %v1886 = vunpack.c.l.b16 %v1291
    %v1887 = vunpack.c.h.b16 %v1291
    %v1888 = vunpack.c.l.b16 %v1292
    %v1889 = vunpack.c.h.b16 %v1292
    %v1890 = vunpack.c.l.b16 %v1293
    %v1891 = vunpack.c.h.b16 %v1293
    %v1892 = vunpack.c.l.b16 %v1294
    %v1893 = vunpack.c.h.b16 %v1294
    %v1894 = vunpack.c.l.b16 %v1295
    %v1895 = vunpack.c.h.b16 %v1295
    %v1896 = vunpack.c.l.b16 %v1296
    %v1897 = vunpack.c.h.b16 %v1296
    %v1898 = vunpack.c.l.b16 %v1297
    %v1899 = vunpack.c.h.b16 %v1297
    %v1900 = vunpack.c.l.b16 %v1298
    %v1901 = vunpack.c.h.b16 %v1298
    %v1902 = vunpack.c.l.b16 %v1299
    %v1903 = vunpack.c.h.b16 %v1299
    %v1904 = vunpack.c.l.b16 %v1300
    %v1905 = vunpack.c.h.b16 %v1300
    %v1906 = vunpack.c.l.b16 %v1301
    %v1907 = vunpack.c.h.b16 %v1301
    %v1908 = vunpack.c.l.b16 %v1302
    %v1909 = vunpack.c.h.b16 %v1302
    %v1910 = vunpack.c.l.b16 %v1303
    %v1911 = vunpack.c.h.b16 %v1303
    %v1912 = vunpack.c.l.b16 %v1304
    %v1913 = vunpack.c.h.b16 %v1304
    %v1914 = vunpack.c.l.b16 %v1305
    %v1915 = vunpack.c.h.b16 %v1305
    %v1916 = vunpack.c.l.b16 %v1306
    %v1917 = vunpack.c.h.b16 %v1306
    %v1918 = vunpack.c.l.b16 %v1307
    %v1919 = vunpack.c.h.b16 %v1307
    %v1920 = vunpack.c.l.b16 %v1308
    %v1921 = vunpack.c.h.b16 %v1308
    %v1922 = vunpack.c.l.b16 %v1309
    %v1923 = vunpack.c.h.b16 %v1309
    %v1924 = vunpack.c.l.b16 %v1310
    %v1925 = vunpack.c.h.b16 %v1310
    %v1926 = vunpack.c.l.b16 %v1311
    %v1927 = vunpack.c.h.b16 %v1311
    %v1928 = vunpack.c.l.b16 %v1312
    %v1929 = vunpack.c.h.b16 %v1312
    %v1930 = vunpack.c.l.b16 %v1313
    %v1931 = vunpack.c.h.b16 %v1313
    %v1932 = vunpack.c.l.b16 %v1314
    %v1933 = vunpack.c.h.b16 %v1314
    %v1934 = vunpack.c.l.b16 %v1315
    %v1935 = vunpack.c.h.b16 %v1315
    %v1936 = vunpack.c.l.b16 %v1316
    %v1937 = vunpack.c.h.b16 %v1316
    %v1938 = vunpack.c.l.b16 %v1317
    %v1939 = vunpack.c.h.b16 %v1317
    %v1940 = vunpack.c.l.b16 %v1318
    %v1941 = vunpack.c.h.b16 %v1318
    %v1942 = vunpack.c.l.b16 %v1319
    %v1943 = vunpack.c.h.b16 %v1319
    %v1944 = vunpack.c.l.b16 %v1320
    %v1945 = vunpack.c.h.b16 %v1320
    %v1946 = vunpack.c.l.b16 %v1321
    %v1947 = vunpack.c.h.b16 %v1321
    %v1948 = vunpack.c.l.b16 %v1322
    %v1949 = vunpack.c.h.b16 %v1322
    %v1950 = vunpack.c.l.b16 %v1323
    %v1951 = vunpack.c.h.b16 %v1323
    %v1952 = vunpack.c.l.b16 %v1324
    %v1953 = vunpack.c.h.b16 %v1324
    %v1954 = vunpack.c.l.b16 %v1325
    %v1955 = vunpack.c.h.b16 %v1325
    %v1956 = vunpack.c.l.b16 %v1326
    %v1957 = vunpack.c.h.b16 %v1326
    %v1958 = vunpack.c.l.b16 %v1327
    %v1959 = vunpack.c.h.b16 %v1327
    %v1960 = vunpack.c.l.b16 %v1328
    %v1961 = vunpack.c.h.b16 %v1328
    %v1962 = vunpack.c.l.b16 %v1329
    %v1963 = vunpack.c.h.b16 %v1329
    %v1964 = vunpack.c.l.b16 %v1330
    %v1965 = vunpack.c.h.b16 %v1330
    %v1966 = vunpack.c.l.b16 %v1331
    %v1967 = vunpack.c.h.b16 %v1331
    %v1968 = vunpack.c.l.b16 %v1332
    %v1969 = vunpack.c.h.b16 %v1332
    %v1970 = vunpack.c.l.b16 %v1333
    %v1971 = vunpack.c.h.b16 %v1333
    %v1972 = vunpack.c.l.b16 %v1334
    %v1973 = vunpack.c.h.b16 %v1334
    %v1974 = vunpack.c.l.b16 %v1335
    %v1975 = vunpack.c.h.b16 %v1335
    %v1976 = vunpack.c.l.b16 %v1336
    %v1977 = vunpack.c.h.b16 %v1336
    %v1978 = vunpack.c.l.b16 %v1337
    %v1979 = vunpack.c.h.b16 %v1337
    %v1980 = vunpack.c.l.b16 %v1338
    %v1981 = vunpack.c.h.b16 %v1338
    %v1982 = vunpack.c.l.b16 %v1339
    %v1983 = vunpack.c.h.b16 %v1339
    %v1984 = vunpack.c.l.b16 %v1340
    %v1985 = vunpack.c.h.b16 %v1340
    %v1986 = vunpack.c.l.b16 %v1341
    %v1987 = vunpack.c.h.b16 %v1341
    %v1988 = vunpack.c.l.b16 %v1342
    %v1989 = vunpack.c.h.b16 %v1342
    %v1990 = vunpack.c.l.b16 %v1343
    %v1991 = vunpack.c.h.b16 %v1343
    %v1992 = vunpack.c.l.b16 %v1344
    %v1993 = vunpack.c.h.b16 %v1344
    %v1994 = vunpack.c.l.b16 %v1345
    %v1995 = vunpack.c.h.b16 %v1345
    %v1996 = vunpack.c.l.b16 %v1346
    %v1997 = vunpack.c.h.b16 %v1346
    %v1998 = vunpack.c.l.b16 %v1347
    %v1999 = vunpack.c.h.b16 %v1347
    %v2000 = vunpack.c.l.b16 %v1348
    %v2001 = vunpack.c.h.b16 %v1348
    %v2002 = vunpack.c.l.b16 %v1349
    %v2003 = vunpack.c.h.b16 %v1349
    %v2004 = vunpack.c.l.b16 %v1350
    %v2005 = vunpack.c.h.b16 %v1350
    %v2006 = vunpack.c.l.b16 %v1351
    %v2007 = vunpack.c.h.b16 %v1351
    %v2008 = vunpack.c.l.b16 %v1352
    %v2009 = vunpack.c.h.b16 %v1352
    %v2010 = vunpack.c.l.b16 %v1353
    %v2011 = vunpack.c.h.b16 %v1353
    %v2012 = vunpack.c.l.b16 %v1354
    %v2013 = vunpack.c.h.b16 %v1354
    %v2014 = vunpack.c.l.b16 %v1355
    %v2015 = vunpack.c.h.b16 %v1355
    %v2016 = vunpack.c.l.b16 %v1356
    %v2017 = vunpack.c.h.b16 %v1356
    %v2018 = vunpack.c.l.b16 %v1357
    %v2019 = vunpack.c.h.b16 %v1357
    %v2020 = vunpack.c.l.b16 %v1358
    %v2021 = vunpack.c.h.b16 %v1358
    %v2022 = vunpack.c.l.b16 %v1359
    %v2023 = vunpack.c.h.b16 %v1359
    %v2024 = vunpack.c.l.b16 %v1360
    %v2025 = vunpack.c.h.b16 %v1360
    %v2026 = vunpack.c.l.b16 %v1361
    %v2027 = vunpack.c.h.b16 %v1361
    %v2028 = vunpack.c.l.b16 %v1362
    %v2029 = vunpack.c.h.b16 %v1362
    %v2030 = vunpack.c.l.b16 %v1363
    %v2031 = vunpack.c.h.b16 %v1363
    %v2032 = vunpack.c.l.b16 %v1364
    %v2033 = vunpack.c.h.b16 %v1364
    %v2034 = vunpack.c.l.b16 %v1365
    %v2035 = vunpack.c.h.b16 %v1365
    %v2036 = vunpack.c.l.b16 %v1366
    %v2037 = vunpack.c.h.b16 %v1366
    %v2038 = vunpack.c.l.b16 %v1367
    %v2039 = vunpack.c.h.b16 %v1367
    %v2040 = vunpack.c.l.b16 %v1368
    %v2041 = vunpack.c.h.b16 %v1368
    %v2042 = vunpack.c.l.b16 %v1369
    %v2043 = vunpack.c.h.b16 %v1369
    %v2044 = vunpack.c.l.b16 %v1370
    %v2045 = vunpack.c.h.b16 %v1370
    %v2046 = vunpack.c.l.b16 %v1371
    %v2047 = vunpack.c.h.b16 %v1371
    %v2048 = vunpack.c.l.b16 %v1372
    %v2049 = vunpack.c.h.b16 %v1372
    %v2050 = vunpack.c.l.b16 %v1373
    %v2051 = vunpack.c.h.b16 %v1373
    %v2052 = vunpack.c.l.b16 %v1374
    %v2053 = vunpack.c.h.b16 %v1374
    %v2054 = vunpack.c.l.b16 %v1375
    %v2055 = vunpack.c.h.b16 %v1375
    %v2056 = vunpack.c.l.b16 %v1376
    %v2057 = vunpack.c.h.b16 %v1376
    %v2058 = vunpack.c.l.b16 %v1377
    %v2059 = vunpack.c.h.b16 %v1377
    %v2060 = vunpack.c.l.b16 %v1378
    %v2061 = vunpack.c.h.b16 %v1378
    %v2062 = vunpack.c.l.b16 %v1379
    %v2063 = vunpack.c.h.b16 %v1379
    %v2064 = vunpack.c.l.b16 %v1380
    %v2065 = vunpack.c.h.b16 %v1380
    %v2066 = vunpack.c.l.b16 %v1381
    %v2067 = vunpack.c.h.b16 %v1381
    %v2068 = vunpack.c.l.b16 %v1382
    %v2069 = vunpack.c.h.b16 %v1382
    %v2070 = vunpack.c.l.b16 %v1383
    %v2071 = vunpack.c.h.b16 %v1383
    %v2072 = vunpack.c.l.b16 %v1384
    %v2073 = vunpack.c.h.b16 %v1384
    %v2074 = vunpack.c.l.b16 %v1385
    %v2075 = vunpack.c.h.b16 %v1385
    %v2076 = vunpack.c.l.b16 %v1386
    %v2077 = vunpack.c.h.b16 %v1386
    %v2078 = vunpack.c.l.b16 %v1387
    %v2079 = vunpack.c.h.b16 %v1387
    %v2080 = vunpack.c.l.b16 %v1388
    %v2081 = vunpack.c.h.b16 %v1388
    %v2082 = vunpack.c.l.b16 %v1389
    %v2083 = vunpack.c.h.b16 %v1389
    %v2084 = vunpack.c.l.b16 %v1390
    %v2085 = vunpack.c.h.b16 %v1390
    %v2086 = vunpack.c.l.b16 %v1391
    %v2087 = vunpack.c.h.b16 %v1391
    %v2088 = vunpack.c.l.b16 %v1392
    %v2089 = vunpack.c.h.b16 %v1392
    %v2090 = vunpack.c.l.b16 %v1393
    %v2091 = vunpack.c.h.b16 %v1393
    %v2092 = vunpack.c.l.b16 %v1394
    %v2093 = vunpack.c.h.b16 %v1394
    %v2094 = vunpack.c.l.b16 %v1395
    %v2095 = vunpack.c.h.b16 %v1395
    %v2096 = vunpack.c.l.b16 %v1396
    %v2097 = vunpack.c.h.b16 %v1396
    %v2098 = vunpack.c.l.b16 %v1397
    %v2099 = vunpack.c.h.b16 %v1397
    %v2100 = vunpack.c.l.b16 %v1398
    %v2101 = vunpack.c.h.b16 %v1398
    %v2102 = vunpack.c.l.b16 %v1399
    %v2103 = vunpack.c.h.b16 %v1399
    %v2104 = vunpack.c.l.b16 %v1400
    %v2105 = vunpack.c.h.b16 %v1400
    %v2106 = vunpack.c.l.b16 %v1401
    %v2107 = vunpack.c.h.b16 %v1401
    %v2108 = vunpack.c.l.b16 %v1402
    %v2109 = vunpack.c.h.b16 %v1402
    %v2110 = vunpack.c.l.b16 %v1403
    %v2111 = vunpack.c.h.b16 %v1403
    %v2112 = vunpack.c.l.b16 %v1404
    %v2113 = vunpack.c.h.b16 %v1404
    %v2114 = vunpack.c.l.b16 %v1405
    %v2115 = vunpack.c.h.b16 %v1405
    %v2116 = vunpack.c.l.b16 %v1406
    %v2117 = vunpack.c.h.b16 %v1406
    %v2118 = vunpack.c.l.b16 %v1407
    %v2119 = vunpack.c.h.b16 %v1407
    %v2120 = vunpack.c.l.b16 %v1408
    %v2121 = vunpack.c.h.b16 %v1408
    %v2122 = vunpack.c.l.b16 %v1409
    %v2123 = vunpack.c.h.b16 %v1409
    %v2124 = vunpack.c.l.b16 %v1410
    %v2125 = vunpack.c.h.b16 %v1410
    %v2126 = vunpack.c.l.b16 %v1411
    %v2127 = vunpack.c.h.b16 %v1411
    %v2128 = vunpack.c.l.b16 %v1412
    %v2129 = vunpack.c.h.b16 %v1412
    %v2130 = vunpack.c.l.b16 %v1413
    %v2131 = vunpack.c.h.b16 %v1413
    %v2132 = vunpack.c.l.b16 %v1414
    %v2133 = vunpack.c.h.b16 %v1414
    %v2134 = vunpack.c.l.b16 %v1415
    %v2135 = vunpack.c.h.b16 %v1415
    %v2136 = vunpack.c.l.b16 %v1416
    %v2137 = vunpack.c.h.b16 %v1416
    %v2138 = vunpack.c.l.b16 %v1417
    %v2139 = vunpack.c.h.b16 %v1417
    %v2140 = vunpack.c.l.b16 %v1418
    %v2141 = vunpack.c.h.b16 %v1418
    %v2142 = vunpack.c.l.b16 %v1419
    %v2143 = vunpack.c.h.b16 %v1419
    %v2144 = vunpack.c.l.b16 %v1420
    %v2145 = vunpack.c.h.b16 %v1420
    %v2146 = vunpack.c.l.b16 %v1421
    %v2147 = vunpack.c.h.b16 %v1421
    %v2148 = vunpack.c.l.b16 %v1422
    %v2149 = vunpack.c.h.b16 %v1422
    %v2150 = vunpack.c.l.b16 %v1423
    %v2151 = vunpack.c.h.b16 %v1423
    %v2152 = vunpack.c.l.b16 %v1424
    %v2153 = vunpack.c.h.b16 %v1424
    %v2154 = vunpack.c.l.b16 %v1425
    %v2155 = vunpack.c.h.b16 %v1425
    %v2156 = vunpack.c.l.b16 %v1426
    %v2157 = vunpack.c.h.b16 %v1426
    %v2158 = vunpack.c.l.b16 %v1427
    %v2159 = vunpack.c.h.b16 %v1427
    %v2160 = vunpack.c.l.b16 %v1428
    %v2161 = vunpack.c.h.b16 %v1428
    %v2162 = vunpack.c.l.b16 %v1429
    %v2163 = vunpack.c.h.b16 %v1429
    %v2164 = vunpack.c.l.b16 %v1430
    %v2165 = vunpack.c.h.b16 %v1430
    %v2166 = vunpack.c.l.b16 %v1431
    %v2167 = vunpack.c.h.b16 %v1431
    %v2168 = vunpack.c.l.b16 %v1432
    %v2169 = vunpack.c.h.b16 %v1432
    %v2170 = vunpack.c.l.b16 %v1433
    %v2171 = vunpack.c.h.b16 %v1433
    %v2172 = vunpack.c.l.b16 %v1434
    %v2173 = vunpack.c.h.b16 %v1434
    %v2174 = vunpack.c.l.b16 %v1435
    %v2175 = vunpack.c.h.b16 %v1435
    %v2176 = vunpack.c.l.b16 %v1436
    %v2177 = vunpack.c.h.b16 %v1436
    %v2178 = vunpack.c.l.b16 %v1437
    %v2179 = vunpack.c.h.b16 %v1437
    %v2180 = vunpack.c.l.b16 %v1438
    %v2181 = vunpack.c.h.b16 %v1438
    %v2182 = vunpack.c.l.b16 %v1439
    %v2183 = vunpack.c.h.b16 %v1439
    %v2184 = vunpack.c.l.b16 %v1440
    %v2185 = vunpack.c.h.b16 %v1440
    %v2186 = vunpack.c.l.b16 %v1441
    %v2187 = vunpack.c.h.b16 %v1441
    %v2188 = vunpack.c.l.b16 %v1442
    %v2189 = vunpack.c.h.b16 %v1442
    %v2190 = vunpack.c.l.b16 %v1443
    %v2191 = vunpack.c.h.b16 %v1443
    %v2192 = vunpack.c.l.b16 %v1444
    %v2193 = vunpack.c.h.b16 %v1444
    %v2194 = vunpack.c.l.b16 %v1445
    %v2195 = vunpack.c.h.b16 %v1445
    %v2196 = vunpack.c.l.b16 %v1446
    %v2197 = vunpack.c.h.b16 %v1446
    %v2198 = vunpack.c.l.b16 %v1447
    %v2199 = vunpack.c.h.b16 %v1447
    %v2200 = vunpack.c.l.b16 %v1448
    %v2201 = vunpack.c.h.b16 %v1448
    %v2202 = vunpack.c.l.b16 %v1449
    %v2203 = vunpack.c.h.b16 %v1449
    %v2204 = vunpack.c.l.b16 %v1450
    %v2205 = vunpack.c.h.b16 %v1450
    %v2206 = vunpack.c.l.b16 %v1451
    %v2207 = vunpack.c.h.b16 %v1451
    %v2208 = vunpack.c.l.b16 %v1452
    %v2209 = vunpack.c.h.b16 %v1452
    %v2210 = vunpack.c.l.b16 %v1453
    %v2211 = vunpack.c.h.b16 %v1453
    %v2212 = vunpack.c.l.b16 %v1454
    %v2213 = vunpack.c.h.b16 %v1454
    %v2214 = vunpack.c.l.b16 %v1455
    %v2215 = vunpack.c.h.b16 %v1455
    %v2216 = vunpack.c.l.b16 %v1456
    %v2217 = vunpack.c.h.b16 %v1456
    %v2218 = vunpack.c.l.b16 %v1457
    %v2219 = vunpack.c.h.b16 %v1457
    %v2220 = vunpack.c.l.b16 %v1458
    %v2221 = vunpack.c.h.b16 %v1458
    %v2222 = vunpack.c.l.b16 %v1459
    %v2223 = vunpack.c.h.b16 %v1459
    %v2224 = vunpack.c.l.b16 %v1460
    %v2225 = vunpack.c.h.b16 %v1460
    %v2226 = vunpack.c.l.b16 %v1461
    %v2227 = vunpack.c.h.b16 %v1461
    %v2228 = vunpack.c.l.b16 %v1462
    %v2229 = vunpack.c.h.b16 %v1462
    %v2230 = vunpack.c.l.b16 %v1463
    %v2231 = vunpack.c.h.b16 %v1463
    %v2232 = vunpack.c.l.b16 %v1464
    %v2233 = vunpack.c.h.b16 %v1464
    %v2234 = vunpack.c.l.b16 %v1465
    %v2235 = vunpack.c.h.b16 %v1465
    %v2236 = vunpack.c.l.b16 %v1466
    %v2237 = vunpack.c.h.b16 %v1466
    %v2238 = vunpack.c.l.b16 %v1467
    %v2239 = vunpack.c.h.b16 %v1467
    %v2240 = vunpack.c.l.b16 %v1468
    %v2241 = vunpack.c.h.b16 %v1468
    %v2242 = vunpack.c.l.b16 %v1469
    %v2243 = vunpack.c.h.b16 %v1469
    %v2244 = vunpack.c.l.b16 %v1470
    %v2245 = vunpack.c.h.b16 %v1470
    %v2246 = vunpack.c.l.b16 %v1471
    %v2247 = vunpack.c.h.b16 %v1471
    %v2248 = vunpack.c.l.b16 %v1472
    %v2249 = vunpack.c.h.b16 %v1472
    %v2250 = vunpack.c.l.b16 %v1473
    %v2251 = vunpack.c.h.b16 %v1473
    %v2252 = vpack.c.b16 %v1744, %v1740
    %v2253 = vpack.c.b16 %v1745, %v1741
    %v2254 = vpack.c.b16 %v1746, %v1742
    %v2255 = vpack.c.b16 %v1747, %v1743
    %v2256 = vpack.c.b16 %v1752, %v1748
    %v2257 = vpack.c.b16 %v1753, %v1749
    %v2258 = vpack.c.b16 %v1754, %v1750
    %v2259 = vpack.c.b16 %v1755, %v1751
    %v2260 = vpack.c.b16 %v1760, %v1756
    %v2261 = vpack.c.b16 %v1761, %v1757
    %v2262 = vpack.c.b16 %v1762, %v1758
    %v2263 = vpack.c.b16 %v1763, %v1759
    %v2264 = vpack.c.b16 %v1768, %v1764
    %v2265 = vpack.c.b16 %v1769, %v1765
    %v2266 = vpack.c.b16 %v1770, %v1766
    %v2267 = vpack.c.b16 %v1771, %v1767
    %v2268 = vpack.c.b16 %v1776, %v1772
    %v2269 = vpack.c.b16 %v1777, %v1773
    %v2270 = vpack.c.b16 %v1778, %v1774
    %v2271 = vpack.c.b16 %v1779, %v1775
    %v2272 = vpack.c.b16 %v1784, %v1780
    %v2273 = vpack.c.b16 %v1785, %v1781
    %v2274 = vpack.c.b16 %v1786, %v1782
    %v2275 = vpack.c.b16 %v1787, %v1783
    %v2276 = vpack.c.b16 %v1792, %v1788
    %v2277 = vpack.c.b16 %v1793, %v1789
    %v2278 = vpack.c.b16 %v1794, %v1790
    %v2279 = vpack.c.b16 %v1795, %v1791
    %v2280 = vpack.c.b16 %v1800, %v1796
    %v2281 = vpack.c.b16 %v1801, %v1797
    %v2282 = vpack.c.b16 %v1802, %v1798
    %v2283 = vpack.c.b16 %v1803, %v1799
    %v2284 = vpack.c.b16 %v1808, %v1804
    %v2285 = vpack.c.b16 %v1809, %v1805
    %v2286 = vpack.c.b16 %v1810, %v1806
    %v2287 = vpack.c.b16 %v1811, %v1807
    %v2288 = vpack.c.b16 %v1816, %v1812
    %v2289 = vpack.c.b16 %v1817, %v1813
    %v2290 = vpack.c.b16 %v1818, %v1814
    %v2291 = vpack.c.b16 %v1819, %v1815
    %v2292 = vpack.c.b16 %v1824, %v1820
    %v2293 = vpack.c.b16 %v1825, %v1821
    %v2294 = vpack.c.b16 %v1826, %v1822
    %v2295 = vpack.c.b16 %v1827, %v1823
    %v2296 = vpack.c.b16 %v1832, %v1828
    %v2297 = vpack.c.b16 %v1833, %v1829
    %v2298 = vpack.c.b16 %v1834, %v1830
    %v2299 = vpack.c.b16 %v1835, %v1831
    %v2300 = vpack.c.b16 %v1840, %v1836
    %v2301 = vpack.c.b16 %v1841, %v1837
    %v2302 = vpack.c.b16 %v1842, %v1838
    %v2303 = vpack.c.b16 %v1843, %v1839
    %v2304 = vpack.c.b16 %v1848, %v1844
    %v2305 = vpack.c.b16 %v1849, %v1845
    %v2306 = vpack.c.b16 %v1850, %v1846
    %v2307 = vpack.c.b16 %v1851, %v1847
    %v2308 = vpack.c.b16 %v1856, %v1852
    %v2309 = vpack.c.b16 %v1857, %v1853
    %v2310 = vpack.c.b16 %v1858, %v1854
    %v2311 = vpack.c.b16 %v1859, %v1855
    %v2312 = vpack.c.b16 %v1864, %v1860
    %v2313 = vpack.c.b16 %v1865, %v1861
    %v2314 = vpack.c.b16 %v1866, %v1862
    %v2315 = vpack.c.b16 %v1867, %v1863
    %v2316 = vpack.c.b16 %v1872, %v1868
    %v2317 = vpack.c.b16 %v1873, %v1869
    %v2318 = vpack.c.b16 %v1874, %v1870
    %v2319 = vpack.c.b16 %v1875, %v1871
    %v2320 = vpack.c.b16 %v1880, %v1876
    %v2321 = vpack.c.b16 %v1881, %v1877
    %v2322 = vpack.c.b16 %v1882, %v1878
    %v2323 = vpack.c.b16 %v1883, %v1879
    %v2324 = vpack.c.b16 %v1888, %v1884
    %v2325 = vpack.c.b16 %v1889, %v1885
    %v2326 = vpack.c.b16 %v1890, %v1886
    %v2327 = vpack.c.b16 %v1891, %v1887
    %v2328 = vpack.c.b16 %v1896, %v1892
    %v2329 = vpack.c.b16 %v1897, %v1893
    %v2330 = vpack.c.b16 %v1898, %v1894
    %v2331 = vpack.c.b16 %v1899, %v1895
    %v2332 = vpack.c.b16 %v1904, %v1900
    %v2333 = vpack.c.b16 %v1905, %v1901
    %v2334 = vpack.c.b16 %v1906, %v1902
    %v2335 = vpack.c.b16 %v1907, %v1903
    %v2336 = vpack.c.b16 %v1912, %v1908
    %v2337 = vpack.c.b16 %v1913, %v1909
    %v2338 = vpack.c.b16 %v1914, %v1910
    %v2339 = vpack.c.b16 %v1915, %v1911
    %v2340 = vpack.c.b16 %v1920, %v1916
    %v2341 = vpack.c.b16 %v1921, %v1917
    %v2342 = vpack.c.b16 %v1922, %v1918
    %v2343 = vpack.c.b16 %v1923, %v1919
    %v2344 = vpack.c.b16 %v1928, %v1924
    %v2345 = vpack.c.b16 %v1929, %v1925
    %v2346 = vpack.c.b16 %v1930, %v1926
    %v2347 = vpack.c.b16 %v1931, %v1927
    %v2348 = vpack.c.b16 %v1936, %v1932
    %v2349 = vpack.c.b16 %v1937, %v1933
    %v2350 = vpack.c.b16 %v1938, %v1934
    %v2351 = vpack.c.b16 %v1939, %v1935
    %v2352 = vpack.c.b16 %v1944, %v1940
    %v2353 = vpack.c.b16 %v1945, %v1941
    %v2354 = vpack.c.b16 %v1946, %v1942
    %v2355 = vpack.c.b16 %v1947, %v1943
    %v2356 = vpack.c.b16 %v1952, %v1948
    %v2357 = vpack.c.b16 %v1953, %v1949
    %v2358 = vpack.c.b16 %v1954, %v1950
    %v2359 = vpack.c.b16 %v1955, %v1951
    %v2360 = vpack.c.b16 %v1960, %v1956
    %v2361 = vpack.c.b16 %v1961, %v1957
    %v2362 = vpack.c.b16 %v1962, %v1958
    %v2363 = vpack.c.b16 %v1963, %v1959
    %v2364 = vpack.c.b16 %v1968, %v1964
    %v2365 = vpack.c.b16 %v1969, %v1965
    %v2366 = vpack.c.b16 %v1970, %v1966
    %v2367 = vpack.c.b16 %v1971, %v1967
    %v2368 = vpack.c.b16 %v1976, %v1972
    %v2369 = vpack.c.b16 %v1977, %v1973
    %v2370 = vpack.c.b16 %v1978, %v1974
    %v2371 = vpack.c.b16 %v1979, %v1975
    %v2372 = vpack.c.b16 %v1984, %v1980
    %v2373 = vpack.c.b16 %v1985, %v1981
    %v2374 = vpack.c.b16 %v1986, %v1982
    %v2375 = vpack.c.b16 %v1987, %v1983
    %v2376 = vpack.c.b16 %v1992, %v1988
    %v2377 = vpack.c.b16 %v1993, %v1989
    %v2378 = vpack.c.b16 %v1994, %v1990
    %v2379 = vpack.c.b16 %v1995, %v1991
    %v2380 = vpack.c.b16 %v2000, %v1996
    %v2381 = vpack.c.b16 %v2001, %v1997
    %v2382 = vpack.c.b16 %v2002, %v1998
    %v2383 = vpack.c.b16 %v2003, %v1999
    %v2384 = vpack.c.b16 %v2008, %v2004
    %v2385 = vpack.c.b16 %v2009, %v2005
    %v2386 = vpack.c.b16 %v2010, %v2006
    %v2387 = vpack.c.b16 %v2011, %v2007
    %v2388 = vpack.c.b16 %v2016, %v2012
    %v2389 = vpack.c.b16 %v2017, %v2013
    %v2390 = vpack.c.b16 %v2018, %v2014
    %v2391 = vpack.c.b16 %v2019, %v2015
    %v2392 = vpack.c.b16 %v2024, %v2020
    %v2393 = vpack.c.b16 %v2025, %v2021
    %v2394 = vpack.c.b16 %v2026, %v2022
    %v2395 = vpack.c.b16 %v2027, %v2023
    %v2396 = vpack.c.b16 %v2032, %v2028
    %v2397 = vpack.c.b16 %v2033, %v2029
    %v2398 = vpack.c.b16 %v2034, %v2030
    %v2399 = vpack.c.b16 %v2035, %v2031
    %v2400 = vpack.c.b16 %v2040, %v2036
    %v2401 = vpack.c.b16 %v2041, %v2037
    %v2402 = vpack.c.b16 %v2042, %v2038
    %v2403 = vpack.c.b16 %v2043, %v2039
    %v2404 = vpack.c.b16 %v2048, %v2044
    %v2405 = vpack.c.b16 %v2049, %v2045
    %v2406 = vpack.c.b16 %v2050, %v2046
    %v2407 = vpack.c.b16 %v2051, %v2047
    %v2408 = vpack.c.b16 %v2056, %v2052
    %v2409 = vpack.c.b16 %v2057, %v2053
    %v2410 = vpack.c.b16 %v2058, %v2054
    %v2411 = vpack.c.b16 %v2059, %v2055
    %v2412 = vpack.c.b16 %v2064, %v2060
    %v2413 = vpack.c.b16 %v2065, %v2061
    %v2414 = vpack.c.b16 %v2066, %v2062
    %v2415 = vpack.c.b16 %v2067, %v2063
    %v2416 = vpack.c.b16 %v2072, %v2068
    %v2417 = vpack.c.b16 %v2073, %v2069
    %v2418 = vpack.c.b16 %v2074, %v2070
    %v2419 = vpack.c.b16 %v2075, %v2071
    %v2420 = vpack.c.b16 %v2080, %v2076
    %v2421 = vpack.c.b16 %v2081, %v2077
    %v2422 = vpack.c.b16 %v2082, %v2078
    %v2423 = vpack.c.b16 %v2083, %v2079
    %v2424 = vpack.c.b16 %v2088, %v2084
    %v2425 = vpack.c.b16 %v2089, %v2085
    %v2426 = vpack.c.b16 %v2090, %v2086
    %v2427 = vpack.c.b16 %v2091, %v2087
    %v2428 = vpack.c.b16 %v2096, %v2092
    %v2429 = vpack.c.b16 %v2097, %v2093
    %v2430 = vpack.c.b16 %v2098, %v2094
    %v2431 = vpack.c.b16 %v2099, %v2095
    %v2432 = vpack.c.b16 %v2104, %v2100
    %v2433 = vpack.c.b16 %v2105, %v2101
    %v2434 = vpack.c.b16 %v2106, %v2102
    %v2435 = vpack.c.b16 %v2107, %v2103
    %v2436 = vpack.c.b16 %v2112, %v2108
    %v2437 = vpack.c.b16 %v2113, %v2109
    %v2438 = vpack.c.b16 %v2114, %v2110
    %v2439 = vpack.c.b16 %v2115, %v2111
    %v2440 = vpack.c.b16 %v2120, %v2116
    %v2441 = vpack.c.b16 %v2121, %v2117
    %v2442 = vpack.c.b16 %v2122, %v2118
    %v2443 = vpack.c.b16 %v2123, %v2119
    %v2444 = vpack.c.b16 %v2128, %v2124
    %v2445 = vpack.c.b16 %v2129, %v2125
    %v2446 = vpack.c.b16 %v2130, %v2126
    %v2447 = vpack.c.b16 %v2131, %v2127
    %v2448 = vpack.c.b16 %v2136, %v2132
    %v2449 = vpack.c.b16 %v2137, %v2133
    %v2450 = vpack.c.b16 %v2138, %v2134
    %v2451 = vpack.c.b16 %v2139, %v2135
    %v2452 = vpack.c.b16 %v2144, %v2140
    %v2453 = vpack.c.b16 %v2145, %v2141
    %v2454 = vpack.c.b16 %v2146, %v2142
    %v2455 = vpack.c.b16 %v2147, %v2143
    %v2456 = vpack.c.b16 %v2152, %v2148
    %v2457 = vpack.c.b16 %v2153, %v2149
    %v2458 = vpack.c.b16 %v2154, %v2150
    %v2459 = vpack.c.b16 %v2155, %v2151
    %v2460 = vpack.c.b16 %v2160, %v2156
    %v2461 = vpack.c.b16 %v2161, %v2157
    %v2462 = vpack.c.b16 %v2162, %v2158
    %v2463 = vpack.c.b16 %v2163, %v2159
    %v2464 = vpack.c.b16 %v2168, %v2164
    %v2465 = vpack.c.b16 %v2169, %v2165
    %v2466 = vpack.c.b16 %v2170, %v2166
    %v2467 = vpack.c.b16 %v2171, %v2167
    %v2468 = vpack.c.b16 %v2176, %v2172
    %v2469 = vpack.c.b16 %v2177, %v2173
    %v2470 = vpack.c.b16 %v2178, %v2174
    %v2471 = vpack.c.b16 %v2179, %v2175
    %v2472 = vpack.c.b16 %v2184, %v2180
    %v2473 = vpack.c.b16 %v2185, %v2181
    %v2474 = vpack.c.b16 %v2186, %v2182
    %v2475 = vpack.c.b16 %v2187, %v2183
    %v2476 = vpack.c.b16 %v2192, %v2188
    %v2477 = vpack.c.b16 %v2193, %v2189
    %v2478 = vpack.c.b16 %v2194, %v2190
    %v2479 = vpack.c.b16 %v2195, %v2191
    %v2480 = vpack.c.b16 %v2200, %v2196
    %v2481 = vpack.c.b16 %v2201, %v2197
    %v2482 = vpack.c.b16 %v2202, %v2198
    %v2483 = vpack.c.b16 %v2203, %v2199
    %v2484 = vpack.c.b16 %v2208, %v2204
    %v2485 = vpack.c.b16 %v2209, %v2205
    %v2486 = vpack.c.b16 %v2210, %v2206
    %v2487 = vpack.c.b16 %v2211, %v2207
    %v2488 = vpack.c.b16 %v2216, %v2212
    %v2489 = vpack.c.b16 %v2217, %v2213
    %v2490 = vpack.c.b16 %v2218, %v2214
    %v2491 = vpack.c.b16 %v2219, %v2215
    %v2492 = vpack.c.b16 %v2224, %v2220
    %v2493 = vpack.c.b16 %v2225, %v2221
    %v2494 = vpack.c.b16 %v2226, %v2222
    %v2495 = vpack.c.b16 %v2227, %v2223
    %v2496 = vpack.c.b16 %v2232, %v2228
    %v2497 = vpack.c.b16 %v2233, %v2229
    %v2498 = vpack.c.b16 %v2234, %v2230
    %v2499 = vpack.c.b16 %v2235, %v2231
    %v2500 = vpack.c.b16 %v2240, %v2236
    %v2501 = vpack.c.b16 %v2241, %v2237
    %v2502 = vpack.c.b16 %v2242, %v2238
    %v2503 = vpack.c.b16 %v2243, %v2239
    %v2504 = vpack.c.b16 %v2248, %v2244
    %v2505 = vpack.c.b16 %v2249, %v2245
    %v2506 = vpack.c.b16 %v2250, %v2246
    %v2507 = vpack.c.b16 %v2251, %v2247
    %2764 = vmatpush.bf16.msra.mxu0 %v2280
    %2765 = vmatpush.bf16.msra.mxu0 %v2276
    %2766 = vmatpush.bf16.msra.mxu0 %v2272
    %2767 = vmatpush.bf16.msra.mxu0 %v2268
    %2768 = vmatpush.bf16.msra.mxu0 %v2264
    %2769 = vmatpush.bf16.msra.mxu0 %v2260
    %2770 = vmatpush.bf16.msra.mxu0 %v2256
    %2771 = vmatpush.bf16.msra.mxu0 %v2252
    %2772 = vmatmul.bf16.gmra.mxu0 %v1210
    %v2773 = vpop.f32.mrf.mxu0
    %v2774 = vadd.f32 %v1476, %v2773
    %v2775 = vpop.f32.mrf.mxu0
    %v2776 = vadd.f32 %v1476, %v2775
    %2777 = vdwg.mxu0
    %2778 = vmatpush.bf16.msra.mxu0 %v2312
    %2779 = vmatpush.bf16.msra.mxu0 %v2308
    %2780 = vmatpush.bf16.msra.mxu0 %v2304
    %2781 = vmatpush.bf16.msra.mxu0 %v2300
    %2782 = vmatpush.bf16.msra.mxu0 %v2296
    %2783 = vmatpush.bf16.msra.mxu0 %v2292
    %2784 = vmatpush.bf16.msra.mxu0 %v2288
    %2785 = vmatpush.bf16.msra.mxu0 %v2284
    %2786 = vmatmul.bf16.gmra.mxu0 %v1211
    %v2787 = vpop.f32.mrf.mxu0
    %v2788 = vadd.f32 %v2774, %v2787
    %v2789 = vpop.f32.mrf.mxu0
    %v2790 = vadd.f32 %v2776, %v2789
    %2791 = vdwg.mxu0
    %2792 = vmatpush.bf16.msra.mxu0 %v2344
    %2793 = vmatpush.bf16.msra.mxu0 %v2340
    %2794 = vmatpush.bf16.msra.mxu0 %v2336
    %2795 = vmatpush.bf16.msra.mxu0 %v2332
    %2796 = vmatpush.bf16.msra.mxu0 %v2328
    %2797 = vmatpush.bf16.msra.mxu0 %v2324
    %2798 = vmatpush.bf16.msra.mxu0 %v2320
    %2799 = vmatpush.bf16.msra.mxu0 %v2316
    %2800 = vmatmul.bf16.gmra.mxu0 %v1212
    %v2801 = vpop.f32.mrf.mxu0
    %v2802 = vadd.f32 %v2788, %v2801
    %v2803 = vpop.f32.mrf.mxu0
    %v2804 = vadd.f32 %v2790, %v2803
    %2805 = vdwg.mxu0
    %2806 = vmatpush.bf16.msra.mxu0 %v2376
    %2807 = vmatpush.bf16.msra.mxu0 %v2372
    %2808 = vmatpush.bf16.msra.mxu0 %v2368
    %2809 = vmatpush.bf16.msra.mxu0 %v2364
    %2810 = vmatpush.bf16.msra.mxu0 %v2360
    %2811 = vmatpush.bf16.msra.mxu0 %v2356
    %2812 = vmatpush.bf16.msra.mxu0 %v2352
    %2813 = vmatpush.bf16.msra.mxu0 %v2348
    %2814 = vmatmul.bf16.gmra.mxu0 %v1213
    %v2815 = vpop.f32.mrf.mxu0
    %v2816 = vadd.f32 %v2802, %v2815
    %v2817 = vpop.f32.mrf.mxu0
    %v2818 = vadd.f32 %v2804, %v2817
    %2819 = vdwg.mxu0
    %2820 = vmatpush.bf16.msra.mxu0 %v2408
    %2821 = vmatpush.bf16.msra.mxu0 %v2404
    %2822 = vmatpush.bf16.msra.mxu0 %v2400
    %2823 = vmatpush.bf16.msra.mxu0 %v2396
    %2824 = vmatpush.bf16.msra.mxu0 %v2392
    %2825 = vmatpush.bf16.msra.mxu0 %v2388
    %2826 = vmatpush.bf16.msra.mxu0 %v2384
    %2827 = vmatpush.bf16.msra.mxu0 %v2380
    %2828 = vmatmul.bf16.gmra.mxu0 %v1214
    %v2829 = vpop.f32.mrf.mxu0
    %v2830 = vadd.f32 %v2816, %v2829
    %v2831 = vpop.f32.mrf.mxu0
    %v2832 = vadd.f32 %v2818, %v2831
    %2833 = vdwg.mxu0
    %2834 = vmatpush.bf16.msra.mxu0 %v2440
    %2835 = vmatpush.bf16.msra.mxu0 %v2436
    %2836 = vmatpush.bf16.msra.mxu0 %v2432
    %2837 = vmatpush.bf16.msra.mxu0 %v2428
    %2838 = vmatpush.bf16.msra.mxu0 %v2424
    %2839 = vmatpush.bf16.msra.mxu0 %v2420
    %2840 = vmatpush.bf16.msra.mxu0 %v2416
    %2841 = vmatpush.bf16.msra.mxu0 %v2412
    %2842 = vmatmul.bf16.gmra.mxu0 %v1215
    %v2843 = vpop.f32.mrf.mxu0
    %v2844 = vadd.f32 %v2830, %v2843
    %v2845 = vpop.f32.mrf.mxu0
    %v2846 = vadd.f32 %v2832, %v2845
    %2847 = vdwg.mxu0
    %2848 = vmatpush.bf16.msra.mxu0 %v2472
    %2849 = vmatpush.bf16.msra.mxu0 %v2468
    %2850 = vmatpush.bf16.msra.mxu0 %v2464
    %2851 = vmatpush.bf16.msra.mxu0 %v2460
    %2852 = vmatpush.bf16.msra.mxu0 %v2456
    %2853 = vmatpush.bf16.msra.mxu0 %v2452
    %2854 = vmatpush.bf16.msra.mxu0 %v2448
    %2855 = vmatpush.bf16.msra.mxu0 %v2444
    %2856 = vmatmul.bf16.gmra.mxu0 %v1216
    %v2857 = vpop.f32.mrf.mxu0
    %v2858 = vadd.f32 %v2844, %v2857
    %v2859 = vpop.f32.mrf.mxu0
    %v2860 = vadd.f32 %v2846, %v2859
    %2861 = vdwg.mxu0
    %2862 = vmatpush.bf16.msra.mxu0 %v2504
    %2863 = vmatpush.bf16.msra.mxu0 %v2500
    %2864 = vmatpush.bf16.msra.mxu0 %v2496
    %2865 = vmatpush.bf16.msra.mxu0 %v2492
    %2866 = vmatpush.bf16.msra.mxu0 %v2488
    %2867 = vmatpush.bf16.msra.mxu0 %v2484
    %2868 = vmatpush.bf16.msra.mxu0 %v2480
    %2869 = vmatpush.bf16.msra.mxu0 %v2476
    %2870 = vmatmul.bf16.gmra.mxu0 %v1217
    %v2871 = vpop.f32.mrf.mxu0
    %v2872 = vadd.f32 %v2858, %v2871
    %v2873 = vpop.f32.mrf.mxu0
    %v2874 = vadd.f32 %v2860, %v2873
    %2875 = vdwg.mxu0
    %2876 = vmatpush.bf16.msra.mxu0 %v2281
    %2877 = vmatpush.bf16.msra.mxu0 %v2277
    %2878 = vmatpush.bf16.msra.mxu0 %v2273
    %2879 = vmatpush.bf16.msra.mxu0 %v2269
    %2880 = vmatpush.bf16.msra.mxu0 %v2265
    %2881 = vmatpush.bf16.msra.mxu0 %v2261
    %2882 = vmatpush.bf16.msra.mxu0 %v2257
    %2883 = vmatpush.bf16.msra.mxu0 %v2253
    %2884 = vmatmul.bf16.gmra.mxu0 %v1210
    %v2885 = vpop.f32.mrf.mxu0
    %v2886 = vadd.f32 %v1477, %v2885
    %v2887 = vpop.f32.mrf.mxu0
    %v2888 = vadd.f32 %v1477, %v2887
    %2889 = vdwg.mxu0
    %2890 = vmatpush.bf16.msra.mxu0 %v2313
    %2891 = vmatpush.bf16.msra.mxu0 %v2309
    %2892 = vmatpush.bf16.msra.mxu0 %v2305
    %2893 = vmatpush.bf16.msra.mxu0 %v2301
    %2894 = vmatpush.bf16.msra.mxu0 %v2297
    %2895 = vmatpush.bf16.msra.mxu0 %v2293
    %2896 = vmatpush.bf16.msra.mxu0 %v2289
    %2897 = vmatpush.bf16.msra.mxu0 %v2285
    %2898 = vmatmul.bf16.gmra.mxu0 %v1211
    %v2899 = vpop.f32.mrf.mxu0
    %v2900 = vadd.f32 %v2886, %v2899
    %v2901 = vpop.f32.mrf.mxu0
    %v2902 = vadd.f32 %v2888, %v2901
    %2903 = vdwg.mxu0
    %2904 = vmatpush.bf16.msra.mxu0 %v2345
    %2905 = vmatpush.bf16.msra.mxu0 %v2341
    %2906 = vmatpush.bf16.msra.mxu0 %v2337
    %2907 = vmatpush.bf16.msra.mxu0 %v2333
    %2908 = vmatpush.bf16.msra.mxu0 %v2329
    %2909 = vmatpush.bf16.msra.mxu0 %v2325
    %2910 = vmatpush.bf16.msra.mxu0 %v2321
    %2911 = vmatpush.bf16.msra.mxu0 %v2317
    %2912 = vmatmul.bf16.gmra.mxu0 %v1212
    %v2913 = vpop.f32.mrf.mxu0
    %v2914 = vadd.f32 %v2900, %v2913
    %v2915 = vpop.f32.mrf.mxu0
    %v2916 = vadd.f32 %v2902, %v2915
    %2917 = vdwg.mxu0
    %2918 = vmatpush.bf16.msra.mxu0 %v2377
    %2919 = vmatpush.bf16.msra.mxu0 %v2373
    %2920 = vmatpush.bf16.msra.mxu0 %v2369
    %2921 = vmatpush.bf16.msra.mxu0 %v2365
    %2922 = vmatpush.bf16.msra.mxu0 %v2361
    %2923 = vmatpush.bf16.msra.mxu0 %v2357
    %2924 = vmatpush.bf16.msra.mxu0 %v2353
    %2925 = vmatpush.bf16.msra.mxu0 %v2349
    %2926 = vmatmul.bf16.gmra.mxu0 %v1213
    %v2927 = vpop.f32.mrf.mxu0
    %v2928 = vadd.f32 %v2914, %v2927
    %v2929 = vpop.f32.mrf.mxu0
    %v2930 = vadd.f32 %v2916, %v2929
    %2931 = vdwg.mxu0
    %2932 = vmatpush.bf16.msra.mxu0 %v2409
    %2933 = vmatpush.bf16.msra.mxu0 %v2405
    %2934 = vmatpush.bf16.msra.mxu0 %v2401
    %2935 = vmatpush.bf16.msra.mxu0 %v2397
    %2936 = vmatpush.bf16.msra.mxu0 %v2393
    %2937 = vmatpush.bf16.msra.mxu0 %v2389
    %2938 = vmatpush.bf16.msra.mxu0 %v2385
    %2939 = vmatpush.bf16.msra.mxu0 %v2381
    %2940 = vmatmul.bf16.gmra.mxu0 %v1214
    %v2941 = vpop.f32.mrf.mxu0
    %v2942 = vadd.f32 %v2928, %v2941
    %v2943 = vpop.f32.mrf.mxu0
    %v2944 = vadd.f32 %v2930, %v2943
    %2945 = vdwg.mxu0
    %2946 = vmatpush.bf16.msra.mxu0 %v2441
    %2947 = vmatpush.bf16.msra.mxu0 %v2437
    %2948 = vmatpush.bf16.msra.mxu0 %v2433
    %2949 = vmatpush.bf16.msra.mxu0 %v2429
    %2950 = vmatpush.bf16.msra.mxu0 %v2425
    %2951 = vmatpush.bf16.msra.mxu0 %v2421
    %2952 = vmatpush.bf16.msra.mxu0 %v2417
    %2953 = vmatpush.bf16.msra.mxu0 %v2413
    %2954 = vmatmul.bf16.gmra.mxu0 %v1215
    %v2955 = vpop.f32.mrf.mxu0
    %v2956 = vadd.f32 %v2942, %v2955
    %v2957 = vpop.f32.mrf.mxu0
    %v2958 = vadd.f32 %v2944, %v2957
    %2959 = vdwg.mxu0
    %2960 = vmatpush.bf16.msra.mxu0 %v2473
    %2961 = vmatpush.bf16.msra.mxu0 %v2469
    %2962 = vmatpush.bf16.msra.mxu0 %v2465
    %2963 = vmatpush.bf16.msra.mxu0 %v2461
    %2964 = vmatpush.bf16.msra.mxu0 %v2457
    %2965 = vmatpush.bf16.msra.mxu0 %v2453
    %2966 = vmatpush.bf16.msra.mxu0 %v2449
    %2967 = vmatpush.bf16.msra.mxu0 %v2445
    %2968 = vmatmul.bf16.gmra.mxu0 %v1216
    %v2969 = vpop.f32.mrf.mxu0
    %v2970 = vadd.f32 %v2956, %v2969
    %v2971 = vpop.f32.mrf.mxu0
    %v2972 = vadd.f32 %v2958, %v2971
    %2973 = vdwg.mxu0
    %2974 = vmatpush.bf16.msra.mxu0 %v2505
    %2975 = vmatpush.bf16.msra.mxu0 %v2501
    %2976 = vmatpush.bf16.msra.mxu0 %v2497
    %2977 = vmatpush.bf16.msra.mxu0 %v2493
    %2978 = vmatpush.bf16.msra.mxu0 %v2489
    %2979 = vmatpush.bf16.msra.mxu0 %v2485
    %2980 = vmatpush.bf16.msra.mxu0 %v2481
    %2981 = vmatpush.bf16.msra.mxu0 %v2477
    %2982 = vmatmul.bf16.gmra.mxu0 %v1217
    %v2983 = vpop.f32.mrf.mxu0
    %v2984 = vadd.f32 %v2970, %v2983
    %v2985 = vpop.f32.mrf.mxu0
    %v2986 = vadd.f32 %v2972, %v2985
    %2987 = vdwg.mxu0
    %2988 = vmatpush.bf16.msra.mxu0 %v2282
    %2989 = vmatpush.bf16.msra.mxu0 %v2278
    %2990 = vmatpush.bf16.msra.mxu0 %v2274
    %2991 = vmatpush.bf16.msra.mxu0 %v2270
    %2992 = vmatpush.bf16.msra.mxu0 %v2266
    %2993 = vmatpush.bf16.msra.mxu0 %v2262
    %2994 = vmatpush.bf16.msra.mxu0 %v2258
    %2995 = vmatpush.bf16.msra.mxu0 %v2254
    %2996 = vmatmul.bf16.gmra.mxu0 %v1210
    %v2997 = vpop.f32.mrf.mxu0
    %v2998 = vadd.f32 %v1478, %v2997
    %v2999 = vpop.f32.mrf.mxu0
    %v3000 = vadd.f32 %v1478, %v2999
    %3001 = vdwg.mxu0
    %3002 = vmatpush.bf16.msra.mxu0 %v2314
    %3003 = vmatpush.bf16.msra.mxu0 %v2310
    %3004 = vmatpush.bf16.msra.mxu0 %v2306
    %3005 = vmatpush.bf16.msra.mxu0 %v2302
    %3006 = vmatpush.bf16.msra.mxu0 %v2298
    %3007 = vmatpush.bf16.msra.mxu0 %v2294
    %3008 = vmatpush.bf16.msra.mxu0 %v2290
    %3009 = vmatpush.bf16.msra.mxu0 %v2286
    %3010 = vmatmul.bf16.gmra.mxu0 %v1211
    %v3011 = vpop.f32.mrf.mxu0
    %v3012 = vadd.f32 %v2998, %v3011
    %v3013 = vpop.f32.mrf.mxu0
    %v3014 = vadd.f32 %v3000, %v3013
    %3015 = vdwg.mxu0
    %3016 = vmatpush.bf16.msra.mxu0 %v2346
    %3017 = vmatpush.bf16.msra.mxu0 %v2342
    %3018 = vmatpush.bf16.msra.mxu0 %v2338
    %3019 = vmatpush.bf16.msra.mxu0 %v2334
    %3020 = vmatpush.bf16.msra.mxu0 %v2330
    %3021 = vmatpush.bf16.msra.mxu0 %v2326
    %3022 = vmatpush.bf16.msra.mxu0 %v2322
    %3023 = vmatpush.bf16.msra.mxu0 %v2318
    %3024 = vmatmul.bf16.gmra.mxu0 %v1212
    %v3025 = vpop.f32.mrf.mxu0
    %v3026 = vadd.f32 %v3012, %v3025
    %v3027 = vpop.f32.mrf.mxu0
    %v3028 = vadd.f32 %v3014, %v3027
    %3029 = vdwg.mxu0
    %3030 = vmatpush.bf16.msra.mxu0 %v2378
    %3031 = vmatpush.bf16.msra.mxu0 %v2374
    %3032 = vmatpush.bf16.msra.mxu0 %v2370
    %3033 = vmatpush.bf16.msra.mxu0 %v2366
    %3034 = vmatpush.bf16.msra.mxu0 %v2362
    %3035 = vmatpush.bf16.msra.mxu0 %v2358
    %3036 = vmatpush.bf16.msra.mxu0 %v2354
    %3037 = vmatpush.bf16.msra.mxu0 %v2350
    %3038 = vmatmul.bf16.gmra.mxu0 %v1213
    %v3039 = vpop.f32.mrf.mxu0
    %v3040 = vadd.f32 %v3026, %v3039
    %v3041 = vpop.f32.mrf.mxu0
    %v3042 = vadd.f32 %v3028, %v3041
    %3043 = vdwg.mxu0
    %3044 = vmatpush.bf16.msra.mxu0 %v2410
    %3045 = vmatpush.bf16.msra.mxu0 %v2406
    %3046 = vmatpush.bf16.msra.mxu0 %v2402
    %3047 = vmatpush.bf16.msra.mxu0 %v2398
    %3048 = vmatpush.bf16.msra.mxu0 %v2394
    %3049 = vmatpush.bf16.msra.mxu0 %v2390
    %3050 = vmatpush.bf16.msra.mxu0 %v2386
    %3051 = vmatpush.bf16.msra.mxu0 %v2382
    %3052 = vmatmul.bf16.gmra.mxu0 %v1214
    %v3053 = vpop.f32.mrf.mxu0
    %v3054 = vadd.f32 %v3040, %v3053
    %v3055 = vpop.f32.mrf.mxu0
    %v3056 = vadd.f32 %v3042, %v3055
    %3057 = vdwg.mxu0
    %3058 = vmatpush.bf16.msra.mxu0 %v2442
    %3059 = vmatpush.bf16.msra.mxu0 %v2438
    %3060 = vmatpush.bf16.msra.mxu0 %v2434
    %3061 = vmatpush.bf16.msra.mxu0 %v2430
    %3062 = vmatpush.bf16.msra.mxu0 %v2426
    %3063 = vmatpush.bf16.msra.mxu0 %v2422
    %3064 = vmatpush.bf16.msra.mxu0 %v2418
    %3065 = vmatpush.bf16.msra.mxu0 %v2414
    %3066 = vmatmul.bf16.gmra.mxu0 %v1215
    %v3067 = vpop.f32.mrf.mxu0
    %v3068 = vadd.f32 %v3054, %v3067
    %v3069 = vpop.f32.mrf.mxu0
    %v3070 = vadd.f32 %v3056, %v3069
    %3071 = vdwg.mxu0
    %3072 = vmatpush.bf16.msra.mxu0 %v2474
    %3073 = vmatpush.bf16.msra.mxu0 %v2470
    %3074 = vmatpush.bf16.msra.mxu0 %v2466
    %3075 = vmatpush.bf16.msra.mxu0 %v2462
    %3076 = vmatpush.bf16.msra.mxu0 %v2458
    %3077 = vmatpush.bf16.msra.mxu0 %v2454
    %3078 = vmatpush.bf16.msra.mxu0 %v2450
    %3079 = vmatpush.bf16.msra.mxu0 %v2446
    %3080 = vmatmul.bf16.gmra.mxu0 %v1216
    %v3081 = vpop.f32.mrf.mxu0
    %v3082 = vadd.f32 %v3068, %v3081
    %v3083 = vpop.f32.mrf.mxu0
    %v3084 = vadd.f32 %v3070, %v3083
    %3085 = vdwg.mxu0
    %3086 = vmatpush.bf16.msra.mxu0 %v2506
    %3087 = vmatpush.bf16.msra.mxu0 %v2502
    %3088 = vmatpush.bf16.msra.mxu0 %v2498
    %3089 = vmatpush.bf16.msra.mxu0 %v2494
    %3090 = vmatpush.bf16.msra.mxu0 %v2490
    %3091 = vmatpush.bf16.msra.mxu0 %v2486
    %3092 = vmatpush.bf16.msra.mxu0 %v2482
    %3093 = vmatpush.bf16.msra.mxu0 %v2478
    %3094 = vmatmul.bf16.gmra.mxu0 %v1217
    %v3095 = vpop.f32.mrf.mxu0
    %v3096 = vadd.f32 %v3082, %v3095
    %v3097 = vpop.f32.mrf.mxu0
    %v3098 = vadd.f32 %v3084, %v3097
    %3099 = vdwg.mxu0
    %3100 = vmatpush.bf16.msra.mxu0 %v2283
    %3101 = vmatpush.bf16.msra.mxu0 %v2279
    %3102 = vmatpush.bf16.msra.mxu0 %v2275
    %3103 = vmatpush.bf16.msra.mxu0 %v2271
    %3104 = vmatpush.bf16.msra.mxu0 %v2267
    %3105 = vmatpush.bf16.msra.mxu0 %v2263
    %3106 = vmatpush.bf16.msra.mxu0 %v2259
    %3107 = vmatpush.bf16.msra.mxu0 %v2255
    %3108 = vmatmul.bf16.gmra.mxu0 %v1210
    %v3109 = vpop.f32.mrf.mxu0
    %v3110 = vadd.f32 %v1479, %v3109
    %v3111 = vpop.f32.mrf.mxu0
    %v3112 = vadd.f32 %v1479, %v3111
    %3113 = vdwg.mxu0
    %3114 = vmatpush.bf16.msra.mxu0 %v2315
    %3115 = vmatpush.bf16.msra.mxu0 %v2311
    %3116 = vmatpush.bf16.msra.mxu0 %v2307
    %3117 = vmatpush.bf16.msra.mxu0 %v2303
    %3118 = vmatpush.bf16.msra.mxu0 %v2299
    %3119 = vmatpush.bf16.msra.mxu0 %v2295
    %3120 = vmatpush.bf16.msra.mxu0 %v2291
    %3121 = vmatpush.bf16.msra.mxu0 %v2287
    %3122 = vmatmul.bf16.gmra.mxu0 %v1211
    %v3123 = vpop.f32.mrf.mxu0
    %v3124 = vadd.f32 %v3110, %v3123
    %v3125 = vpop.f32.mrf.mxu0
    %v3126 = vadd.f32 %v3112, %v3125
    %3127 = vdwg.mxu0
    %3128 = vmatpush.bf16.msra.mxu0 %v2347
    %3129 = vmatpush.bf16.msra.mxu0 %v2343
    %3130 = vmatpush.bf16.msra.mxu0 %v2339
    %3131 = vmatpush.bf16.msra.mxu0 %v2335
    %3132 = vmatpush.bf16.msra.mxu0 %v2331
    %3133 = vmatpush.bf16.msra.mxu0 %v2327
    %3134 = vmatpush.bf16.msra.mxu0 %v2323
    %3135 = vmatpush.bf16.msra.mxu0 %v2319
    %3136 = vmatmul.bf16.gmra.mxu0 %v1212
    %v3137 = vpop.f32.mrf.mxu0
    %v3138 = vadd.f32 %v3124, %v3137
    %v3139 = vpop.f32.mrf.mxu0
    %v3140 = vadd.f32 %v3126, %v3139
    %3141 = vdwg.mxu0
    %3142 = vmatpush.bf16.msra.mxu0 %v2379
    %3143 = vmatpush.bf16.msra.mxu0 %v2375
    %3144 = vmatpush.bf16.msra.mxu0 %v2371
    %3145 = vmatpush.bf16.msra.mxu0 %v2367
    %3146 = vmatpush.bf16.msra.mxu0 %v2363
    %3147 = vmatpush.bf16.msra.mxu0 %v2359
    %3148 = vmatpush.bf16.msra.mxu0 %v2355
    %3149 = vmatpush.bf16.msra.mxu0 %v2351
    %3150 = vmatmul.bf16.gmra.mxu0 %v1213
    %v3151 = vpop.f32.mrf.mxu0
    %v3152 = vadd.f32 %v3138, %v3151
    %v3153 = vpop.f32.mrf.mxu0
    %v3154 = vadd.f32 %v3140, %v3153
    %3155 = vdwg.mxu0
    %3156 = vmatpush.bf16.msra.mxu0 %v2411
    %3157 = vmatpush.bf16.msra.mxu0 %v2407
    %3158 = vmatpush.bf16.msra.mxu0 %v2403
    %3159 = vmatpush.bf16.msra.mxu0 %v2399
    %3160 = vmatpush.bf16.msra.mxu0 %v2395
    %3161 = vmatpush.bf16.msra.mxu0 %v2391
    %3162 = vmatpush.bf16.msra.mxu0 %v2387
    %3163 = vmatpush.bf16.msra.mxu0 %v2383
    %3164 = vmatmul.bf16.gmra.mxu0 %v1214
    %v3165 = vpop.f32.mrf.mxu0
    %v3166 = vadd.f32 %v3152, %v3165
    %v3167 = vpop.f32.mrf.mxu0
    %v3168 = vadd.f32 %v3154, %v3167
    %3169 = vdwg.mxu0
    %3170 = vmatpush.bf16.msra.mxu0 %v2443
    %3171 = vmatpush.bf16.msra.mxu0 %v2439
    %3172 = vmatpush.bf16.msra.mxu0 %v2435
    %3173 = vmatpush.bf16.msra.mxu0 %v2431
    %3174 = vmatpush.bf16.msra.mxu0 %v2427
    %3175 = vmatpush.bf16.msra.mxu0 %v2423
    %3176 = vmatpush.bf16.msra.mxu0 %v2419
    %3177 = vmatpush.bf16.msra.mxu0 %v2415
    %3178 = vmatmul.bf16.gmra.mxu0 %v1215
    %v3179 = vpop.f32.mrf.mxu0
    %v3180 = vadd.f32 %v3166, %v3179
    %v3181 = vpop.f32.mrf.mxu0
    %v3182 = vadd.f32 %v3168, %v3181
    %3183 = vdwg.mxu0
    %3184 = vmatpush.bf16.msra.mxu0 %v2475
    %3185 = vmatpush.bf16.msra.mxu0 %v2471
    %3186 = vmatpush.bf16.msra.mxu0 %v2467
    %3187 = vmatpush.bf16.msra.mxu0 %v2463
    %3188 = vmatpush.bf16.msra.mxu0 %v2459
    %3189 = vmatpush.bf16.msra.mxu0 %v2455
    %3190 = vmatpush.bf16.msra.mxu0 %v2451
    %3191 = vmatpush.bf16.msra.mxu0 %v2447
    %3192 = vmatmul.bf16.gmra.mxu0 %v1216
    %v3193 = vpop.f32.mrf.mxu0
    %v3194 = vadd.f32 %v3180, %v3193
    %v3195 = vpop.f32.mrf.mxu0
    %v3196 = vadd.f32 %v3182, %v3195
    %3197 = vdwg.mxu0
    %3198 = vmatpush.bf16.msra.mxu0 %v2507
    %3199 = vmatpush.bf16.msra.mxu0 %v2503
    %3200 = vmatpush.bf16.msra.mxu0 %v2499
    %3201 = vmatpush.bf16.msra.mxu0 %v2495
    %3202 = vmatpush.bf16.msra.mxu0 %v2491
    %3203 = vmatpush.bf16.msra.mxu0 %v2487
    %3204 = vmatpush.bf16.msra.mxu0 %v2483
    %3205 = vmatpush.bf16.msra.mxu0 %v2479
    %3206 = vmatmul.bf16.gmra.mxu0 %v1217
    %v3207 = vpop.f32.mrf.mxu0
    %v3208 = vadd.f32 %v3194, %v3207
    %v3209 = vpop.f32.mrf.mxu0
    %v3210 = vadd.f32 %v3196, %v3209
    %3211 = vdwg.mxu0
    %vm3212 = vcmp.gt.f32.partialorder %v2872, 0.0
    %vm3213 = vcmp.gt.f32.partialorder %v2984, 0.0
    %vm3214 = vcmp.gt.f32.partialorder %v3096, 0.0
    %vm3215 = vcmp.gt.f32.partialorder %v3208, 0.0
    %vm3216 = vcmp.gt.f32.partialorder %v2874, 0.0
    %vm3217 = vcmp.gt.f32.partialorder %v2986, 0.0
    %vm3218 = vcmp.gt.f32.partialorder %v3098, 0.0
    %vm3219 = vcmp.gt.f32.partialorder %v3210, 0.0
    %v3220 = vmul.f32 %v2872, 0.01
    %v3221 = vmul.f32 %v2984, 0.01
    %v3222 = vmul.f32 %v3096, 0.01
    %v3223 = vmul.f32 %v3208, 0.01
    %v3224 = vmul.f32 %v2874, 0.01
    %v3225 = vmul.f32 %v2986, 0.01
    %v3226 = vmul.f32 %v3098, 0.01
    %v3227 = vmul.f32 %v3210, 0.01
    %v3228 = vsel %vm3212, %v2872, %v3220
    %v3229 = vsel %vm3213, %v2984, %v3221
    %v3230 = vsel %vm3214, %v3096, %v3222
    %v3231 = vsel %vm3215, %v3208, %v3223
    %v3232 = vsel %vm3216, %v2874, %v3224
    %v3233 = vsel %vm3217, %v2986, %v3225
    %v3234 = vsel %vm3218, %v3098, %v3226
    %v3235 = vsel %vm3219, %v3210, %v3227
    %v3236 = vpack.c.bf16 %v3232, %v3228
    %v3237 = vpack.c.bf16 %v3233, %v3229
    %v3238 = vpack.c.bf16 %v3234, %v3230
    %v3239 = vpack.c.bf16 %v3235, %v3231
    %v3240 = vld [vmem:[#allocation6] sm:$0xf]
    %v3241 = vld [vmem:[#allocation6 + $0x4] sm:$0xf]
    %v3242 = vld [vmem:[#allocation6 + $0x8] sm:$0xf]
    %v3243 = vld [vmem:[#allocation6 + $0xc] sm:$0xf]
    %v3244 = vld [vmem:[#allocation6 + $0x10] sm:$0xf]
    %v3245 = vld [vmem:[#allocation6 + $0x14] sm:$0xf]
    %v3246 = vld [vmem:[#allocation6 + $0x18] sm:$0xf]
    %v3247 = vld [vmem:[#allocation6 + $0x1c] sm:$0xf]
    %v3248 = vld [vmem:[#allocation6 + $0x20] sm:$0xf]
    %v3249 = vld [vmem:[#allocation6 + $0x24] sm:$0xf]
    %v3250 = vld [vmem:[#allocation6 + $0x28] sm:$0xf]
    %v3251 = vld [vmem:[#allocation6 + $0x2c] sm:$0xf]
    %v3252 = vld [vmem:[#allocation6 + $0x30] sm:$0xf]
    %v3253 = vld [vmem:[#allocation6 + $0x34] sm:$0xf]
    %v3254 = vld [vmem:[#allocation6 + $0x38] sm:$0xf]
    %v3255 = vld [vmem:[#allocation6 + $0x3c] sm:$0xf]
    %v3256 = vld [vmem:[#allocation6 + $0x40] sm:$0xf]
    %v3257 = vld [vmem:[#allocation6 + $0x44] sm:$0xf]
    %v3258 = vld [vmem:[#allocation6 + $0x48] sm:$0xf]
    %v3259 = vld [vmem:[#allocation6 + $0x4c] sm:$0xf]
    %v3260 = vld [vmem:[#allocation6 + $0x50] sm:$0xf]
    %v3261 = vld [vmem:[#allocation6 + $0x54] sm:$0xf]
    %v3262 = vld [vmem:[#allocation6 + $0x58] sm:$0xf]
    %v3263 = vld [vmem:[#allocation6 + $0x5c] sm:$0xf]
    %v3264 = vld [vmem:[#allocation6 + $0x60] sm:$0xf]
    %v3265 = vld [vmem:[#allocation6 + $0x64] sm:$0xf]
    %v3266 = vld [vmem:[#allocation6 + $0x68] sm:$0xf]
    %v3267 = vld [vmem:[#allocation6 + $0x6c] sm:$0xf]
    %v3268 = vld [vmem:[#allocation6 + $0x70] sm:$0xf]
    %v3269 = vld [vmem:[#allocation6 + $0x74] sm:$0xf]
    %v3270 = vld [vmem:[#allocation6 + $0x78] sm:$0xf]
    %v3271 = vld [vmem:[#allocation6 + $0x7c] sm:$0xf]
    %v3272 = vld [vmem:[#allocation6 + $0x80] sm:$0xf]
    %v3273 = vld [vmem:[#allocation6 + $0x84] sm:$0xf]
    %v3274 = vld [vmem:[#allocation6 + $0x88] sm:$0xf]
    %v3275 = vld [vmem:[#allocation6 + $0x8c] sm:$0xf]
    %v3276 = vld [vmem:[#allocation6 + $0x90] sm:$0xf]
    %v3277 = vld [vmem:[#allocation6 + $0x94] sm:$0xf]
    %v3278 = vld [vmem:[#allocation6 + $0x98] sm:$0xf]
    %v3279 = vld [vmem:[#allocation6 + $0x9c] sm:$0xf]
    %v3280 = vld [vmem:[#allocation6 + $0xa0] sm:$0xf]
    %v3281 = vld [vmem:[#allocation6 + $0xa4] sm:$0xf]
    %v3282 = vld [vmem:[#allocation6 + $0xa8] sm:$0xf]
    %v3283 = vld [vmem:[#allocation6 + $0xac] sm:$0xf]
    %v3284 = vld [vmem:[#allocation6 + $0xb0] sm:$0xf]
    %v3285 = vld [vmem:[#allocation6 + $0xb4] sm:$0xf]
    %v3286 = vld [vmem:[#allocation6 + $0xb8] sm:$0xf]
    %v3287 = vld [vmem:[#allocation6 + $0xbc] sm:$0xf]
    %v3288 = vld [vmem:[#allocation6 + $0xc0] sm:$0xf]
    %v3289 = vld [vmem:[#allocation6 + $0xc4] sm:$0xf]
    %v3290 = vld [vmem:[#allocation6 + $0xc8] sm:$0xf]
    %v3291 = vld [vmem:[#allocation6 + $0xcc] sm:$0xf]
    %v3292 = vld [vmem:[#allocation6 + $0xd0] sm:$0xf]
    %v3293 = vld [vmem:[#allocation6 + $0xd4] sm:$0xf]
    %v3294 = vld [vmem:[#allocation6 + $0xd8] sm:$0xf]
    %v3295 = vld [vmem:[#allocation6 + $0xdc] sm:$0xf]
    %v3296 = vld [vmem:[#allocation6 + $0xe0] sm:$0xf]
    %v3297 = vld [vmem:[#allocation6 + $0xe4] sm:$0xf]
    %v3298 = vld [vmem:[#allocation6 + $0xe8] sm:$0xf]
    %v3299 = vld [vmem:[#allocation6 + $0xec] sm:$0xf]
    %v3300 = vld [vmem:[#allocation6 + $0xf0] sm:$0xf]
    %v3301 = vld [vmem:[#allocation6 + $0xf4] sm:$0xf]
    %v3302 = vld [vmem:[#allocation6 + $0xf8] sm:$0xf]
    %v3303 = vld [vmem:[#allocation6 + $0xfc] sm:$0xf]
    %v3304 = vld [vmem:[%s6] sm:$0x1]
    %v3306 = vperm.slane %v3304, 0
    %v3372 = vunpack.c.l.b16 %v3240
    %v3373 = vunpack.c.l.b16 %v3241
    %v3374 = vunpack.c.l.b16 %v3242
    %v3375 = vunpack.c.l.b16 %v3243
    %v3376 = vunpack.c.l.b16 %v3244
    %v3377 = vunpack.c.l.b16 %v3245
    %v3378 = vunpack.c.l.b16 %v3246
    %v3379 = vunpack.c.l.b16 %v3247
    %v3380 = vunpack.c.l.b16 %v3248
    %v3381 = vunpack.c.l.b16 %v3249
    %v3382 = vunpack.c.l.b16 %v3250
    %v3383 = vunpack.c.l.b16 %v3251
    %v3384 = vunpack.c.l.b16 %v3252
    %v3385 = vunpack.c.l.b16 %v3253
    %v3386 = vunpack.c.l.b16 %v3254
    %v3387 = vunpack.c.l.b16 %v3255
    %v3388 = vunpack.c.l.b16 %v3256
    %v3389 = vunpack.c.l.b16 %v3257
    %v3390 = vunpack.c.l.b16 %v3258
    %v3391 = vunpack.c.l.b16 %v3259
    %v3392 = vunpack.c.l.b16 %v3260
    %v3393 = vunpack.c.l.b16 %v3261
    %v3394 = vunpack.c.l.b16 %v3262
    %v3395 = vunpack.c.l.b16 %v3263
    %v3396 = vunpack.c.l.b16 %v3264
    %v3397 = vunpack.c.l.b16 %v3265
    %v3398 = vunpack.c.l.b16 %v3266
    %v3399 = vunpack.c.l.b16 %v3267
    %v3400 = vunpack.c.l.b16 %v3268
    %v3401 = vunpack.c.l.b16 %v3269
    %v3402 = vunpack.c.l.b16 %v3270
    %v3403 = vunpack.c.l.b16 %v3271
    %v3404 = vunpack.c.l.b16 %v3272
    %v3405 = vunpack.c.l.b16 %v3273
    %v3406 = vunpack.c.l.b16 %v3274
    %v3407 = vunpack.c.l.b16 %v3275
    %v3408 = vunpack.c.l.b16 %v3276
    %v3409 = vunpack.c.l.b16 %v3277
    %v3410 = vunpack.c.l.b16 %v3278
    %v3411 = vunpack.c.l.b16 %v3279
    %v3412 = vunpack.c.l.b16 %v3280
    %v3413 = vunpack.c.l.b16 %v3281
    %v3414 = vunpack.c.l.b16 %v3282
    %v3415 = vunpack.c.l.b16 %v3283
    %v3416 = vunpack.c.l.b16 %v3284
    %v3417 = vunpack.c.l.b16 %v3285
    %v3418 = vunpack.c.l.b16 %v3286
    %v3419 = vunpack.c.l.b16 %v3287
    %v3420 = vunpack.c.l.b16 %v3288
    %v3421 = vunpack.c.l.b16 %v3289
    %v3422 = vunpack.c.l.b16 %v3290
    %v3423 = vunpack.c.l.b16 %v3291
    %v3424 = vunpack.c.l.b16 %v3292
    %v3425 = vunpack.c.l.b16 %v3293
    %v3426 = vunpack.c.l.b16 %v3294
    %v3427 = vunpack.c.l.b16 %v3295
    %v3428 = vunpack.c.l.b16 %v3296
    %v3429 = vunpack.c.l.b16 %v3297
    %v3430 = vunpack.c.l.b16 %v3298
    %v3431 = vunpack.c.l.b16 %v3299
    %v3432 = vunpack.c.l.b16 %v3300
    %v3433 = vunpack.c.l.b16 %v3301
    %v3434 = vunpack.c.l.b16 %v3302
    %v3435 = vunpack.c.l.b16 %v3303
    %v3436 = vpack.c.b16 %v3373, %v3372
    %v3437 = vpack.c.b16 %v3375, %v3374
    %v3438 = vpack.c.b16 %v3377, %v3376
    %v3439 = vpack.c.b16 %v3379, %v3378
    %v3440 = vpack.c.b16 %v3381, %v3380
    %v3441 = vpack.c.b16 %v3383, %v3382
    %v3442 = vpack.c.b16 %v3385, %v3384
    %v3443 = vpack.c.b16 %v3387, %v3386
    %v3444 = vpack.c.b16 %v3389, %v3388
    %v3445 = vpack.c.b16 %v3391, %v3390
    %v3446 = vpack.c.b16 %v3393, %v3392
    %v3447 = vpack.c.b16 %v3395, %v3394
    %v3448 = vpack.c.b16 %v3397, %v3396
    %v3449 = vpack.c.b16 %v3399, %v3398
    %v3450 = vpack.c.b16 %v3401, %v3400
    %v3451 = vpack.c.b16 %v3403, %v3402
    %v3452 = vpack.c.b16 %v3405, %v3404
    %v3453 = vpack.c.b16 %v3407, %v3406
    %v3454 = vpack.c.b16 %v3409, %v3408
    %v3455 = vpack.c.b16 %v3411, %v3410
    %v3456 = vpack.c.b16 %v3413, %v3412
    %v3457 = vpack.c.b16 %v3415, %v3414
    %v3458 = vpack.c.b16 %v3417, %v3416
    %v3459 = vpack.c.b16 %v3419, %v3418
    %v3460 = vpack.c.b16 %v3421, %v3420
    %v3461 = vpack.c.b16 %v3423, %v3422
    %v3462 = vpack.c.b16 %v3425, %v3424
    %v3463 = vpack.c.b16 %v3427, %v3426
    %v3464 = vpack.c.b16 %v3429, %v3428
    %v3465 = vpack.c.b16 %v3431, %v3430
    %v3466 = vpack.c.b16 %v3433, %v3432
    %v3467 = vpack.c.b16 %v3435, %v3434
    %3500 = vmatpush.bf16.msra.mxu0 %v3443
    %3501 = vmatpush.bf16.msra.mxu0 %v3442
    %3502 = vmatpush.bf16.msra.mxu0 %v3441
    %3503 = vmatpush.bf16.msra.mxu0 %v3440
    %3504 = vmatpush.bf16.msra.mxu0 %v3439
    %3505 = vmatpush.bf16.msra.mxu0 %v3438
    %3506 = vmatpush.bf16.msra.mxu0 %v3437
    %3507 = vmatpush.bf16.msra.mxu0 %v3436
    %3508 = vmatmul.bf16.gmra.mxu0 %v3236
    %v3509 = vpop.f32.mrf.mxu0
    %v3510 = vadd.f32 %v3306, %v3509
    %v3511 = vpop.f32.mrf.mxu0
    %v3512 = vadd.f32 %v3306, %v3511
    %3513 = vdwg.mxu0
    %3514 = vmatpush.bf16.msra.mxu0 %v3451
    %3515 = vmatpush.bf16.msra.mxu0 %v3450
    %3516 = vmatpush.bf16.msra.mxu0 %v3449
    %3517 = vmatpush.bf16.msra.mxu0 %v3448
    %3518 = vmatpush.bf16.msra.mxu0 %v3447
    %3519 = vmatpush.bf16.msra.mxu0 %v3446
    %3520 = vmatpush.bf16.msra.mxu0 %v3445
    %3521 = vmatpush.bf16.msra.mxu0 %v3444
    %3522 = vmatmul.bf16.gmra.mxu0 %v3237
    %v3523 = vpop.f32.mrf.mxu0
    %v3524 = vadd.f32 %v3510, %v3523
    %v3525 = vpop.f32.mrf.mxu0
    %v3526 = vadd.f32 %v3512, %v3525
    %3527 = vdwg.mxu0
    %3528 = vmatpush.bf16.msra.mxu0 %v3459
    %3529 = vmatpush.bf16.msra.mxu0 %v3458
    %3530 = vmatpush.bf16.msra.mxu0 %v3457
    %3531 = vmatpush.bf16.msra.mxu0 %v3456
    %3532 = vmatpush.bf16.msra.mxu0 %v3455
    %3533 = vmatpush.bf16.msra.mxu0 %v3454
    %3534 = vmatpush.bf16.msra.mxu0 %v3453
    %3535 = vmatpush.bf16.msra.mxu0 %v3452
    %3536 = vmatmul.bf16.gmra.mxu0 %v3238
    %v3537 = vpop.f32.mrf.mxu0
    %v3538 = vadd.f32 %v3524, %v3537
    %v3539 = vpop.f32.mrf.mxu0
    %v3540 = vadd.f32 %v3526, %v3539
    %3541 = vdwg.mxu0
    %3542 = vmatpush.bf16.msra.mxu0 %v3467
    %3543 = vmatpush.bf16.msra.mxu0 %v3466
    %3544 = vmatpush.bf16.msra.mxu0 %v3465
    %3545 = vmatpush.bf16.msra.mxu0 %v3464
    %3546 = vmatpush.bf16.msra.mxu0 %v3463
    %3547 = vmatpush.bf16.msra.mxu0 %v3462
    %3548 = vmatpush.bf16.msra.mxu0 %v3461
    %3549 = vmatpush.bf16.msra.mxu0 %v3460
    %3550 = vmatmul.bf16.gmra.mxu0 %v3239
    %v3551 = vpop.f32.mrf.mxu0
    %v3552 = vadd.f32 %v3538, %v3551
    %v3553 = vpop.f32.mrf.mxu0
    %v3554 = vadd.f32 %v3540, %v3553
    %3555 = vdwg.mxu0
    %3556 = vst [vmem:[%s14] sm:$0xff] %v3552
    %3557 = vst [vmem:[%s14 + $0x8] sm:$0xff] %v3554
    %v3558 = vpack.c.bf16 %v3554, %v3552
    %v3559 = vld [vmem:[#allocation7] sm:$0xff]
    %v3560 = vld [vmem:[#allocation7 + $0x8] sm:$0xff]
    %v3561 = vld [vmem:[#allocation7 + $0x10] sm:$0xff]
    %v3562 = vld [vmem:[#allocation7 + $0x18] sm:$0xff]
    %v3563 = vld [vmem:[#allocation7 + $0x20] sm:$0xff]
    %v3564 = vld [vmem:[#allocation7 + $0x28] sm:$0xff]
    %v3565 = vld [vmem:[#allocation7 + $0x30] sm:$0xff]
    %v3566 = vld [vmem:[#allocation7 + $0x38] sm:$0xff]
    %v3567 = vld [vmem:[#allocation7 + $0x40] sm:$0xff]
    %v3568 = vld [vmem:[#allocation7 + $0x48] sm:$0xff]
    %v3569 = vld [vmem:[#allocation7 + $0x50] sm:$0xff]
    %v3570 = vld [vmem:[#allocation7 + $0x58] sm:$0xff]
    %v3571 = vld [vmem:[#allocation7 + $0x60] sm:$0xff]
    %v3572 = vld [vmem:[#allocation7 + $0x68] sm:$0xff]
    %v3573 = vld [vmem:[#allocation7 + $0x70] sm:$0xff]
    %v3574 = vld [vmem:[#allocation7 + $0x78] sm:$0xff]
    %v3575 = vld [vmem:[#allocation7 + $0x80] sm:$0xff]
    %v3576 = vld [vmem:[#allocation7 + $0x88] sm:$0xff]
    %v3577 = vld [vmem:[#allocation7 + $0x90] sm:$0xff]
    %v3578 = vld [vmem:[#allocation7 + $0x98] sm:$0xff]
    %v3579 = vld [vmem:[#allocation7 + $0xa0] sm:$0xff]
    %v3580 = vld [vmem:[#allocation7 + $0xa8] sm:$0xff]
    %v3581 = vld [vmem:[#allocation7 + $0xb0] sm:$0xff]
    %v3582 = vld [vmem:[#allocation7 + $0xb8] sm:$0xff]
    %v3583 = vld [vmem:[#allocation7 + $0xc0] sm:$0xff]
    %v3584 = vld [vmem:[#allocation7 + $0xc8] sm:$0xff]
    %v3585 = vld [vmem:[#allocation7 + $0xd0] sm:$0xff]
    %v3586 = vld [vmem:[#allocation7 + $0xd8] sm:$0xff]
    %v3587 = vld [vmem:[#allocation7 + $0xe0] sm:$0xff]
    %v3588 = vld [vmem:[#allocation7 + $0xe8] sm:$0xff]
    %v3589 = vld [vmem:[#allocation7 + $0xf0] sm:$0xff]
    %v3590 = vld [vmem:[#allocation7 + $0xf8] sm:$0xff]
    %v3591 = vld [vmem:[%s8] sm:$0xf]
    %v3593 = vperm.slane %v3591, 0
    %v3594 = vperm.slane %v3591, 1
    %v3595 = vperm.slane %v3591, 2
    %v3596 = vperm.slane %v3591, 3
    %v3633 = vunpack.c.l.b16 %v3559
    %v3634 = vunpack.c.h.b16 %v3559
    %v3635 = vunpack.c.l.b16 %v3560
    %v3636 = vunpack.c.h.b16 %v3560
    %v3637 = vunpack.c.l.b16 %v3561
    %v3638 = vunpack.c.h.b16 %v3561
    %v3639 = vunpack.c.l.b16 %v3562
    %v3640 = vunpack.c.h.b16 %v3562
    %v3641 = vunpack.c.l.b16 %v3563
    %v3642 = vunpack.c.h.b16 %v3563
    %v3643 = vunpack.c.l.b16 %v3564
    %v3644 = vunpack.c.h.b16 %v3564
    %v3645 = vunpack.c.l.b16 %v3565
    %v3646 = vunpack.c.h.b16 %v3565
    %v3647 = vunpack.c.l.b16 %v3566
    %v3648 = vunpack.c.h.b16 %v3566
    %v3649 = vunpack.c.l.b16 %v3567
    %v3650 = vunpack.c.h.b16 %v3567
    %v3651 = vunpack.c.l.b16 %v3568
    %v3652 = vunpack.c.h.b16 %v3568
    %v3653 = vunpack.c.l.b16 %v3569
    %v3654 = vunpack.c.h.b16 %v3569
    %v3655 = vunpack.c.l.b16 %v3570
    %v3656 = vunpack.c.h.b16 %v3570
    %v3657 = vunpack.c.l.b16 %v3571
    %v3658 = vunpack.c.h.b16 %v3571
    %v3659 = vunpack.c.l.b16 %v3572
    %v3660 = vunpack.c.h.b16 %v3572
    %v3661 = vunpack.c.l.b16 %v3573
    %v3662 = vunpack.c.h.b16 %v3573
    %v3663 = vunpack.c.l.b16 %v3574
    %v3664 = vunpack.c.h.b16 %v3574
    %v3665 = vunpack.c.l.b16 %v3575
    %v3666 = vunpack.c.h.b16 %v3575
    %v3667 = vunpack.c.l.b16 %v3576
    %v3668 = vunpack.c.h.b16 %v3576
    %v3669 = vunpack.c.l.b16 %v3577
    %v3670 = vunpack.c.h.b16 %v3577
    %v3671 = vunpack.c.l.b16 %v3578
    %v3672 = vunpack.c.h.b16 %v3578
    %v3673 = vunpack.c.l.b16 %v3579
    %v3674 = vunpack.c.h.b16 %v3579
    %v3675 = vunpack.c.l.b16 %v3580
    %v3676 = vunpack.c.h.b16 %v3580
    %v3677 = vunpack.c.l.b16 %v3581
    %v3678 = vunpack.c.h.b16 %v3581
    %v3679 = vunpack.c.l.b16 %v3582
    %v3680 = vunpack.c.h.b16 %v3582
    %v3681 = vunpack.c.l.b16 %v3583
    %v3682 = vunpack.c.h.b16 %v3583
    %v3683 = vunpack.c.l.b16 %v3584
    %v3684 = vunpack.c.h.b16 %v3584
    %v3685 = vunpack.c.l.b16 %v3585
    %v3686 = vunpack.c.h.b16 %v3585
    %v3687 = vunpack.c.l.b16 %v3586
    %v3688 = vunpack.c.h.b16 %v3586
    %v3689 = vunpack.c.l.b16 %v3587
    %v3690 = vunpack.c.h.b16 %v3587
    %v3691 = vunpack.c.l.b16 %v3588
    %v3692 = vunpack.c.h.b16 %v3588
    %v3693 = vunpack.c.l.b16 %v3589
    %v3694 = vunpack.c.h.b16 %v3589
    %v3695 = vunpack.c.l.b16 %v3590
    %v3696 = vunpack.c.h.b16 %v3590
    %v3697 = vpack.c.b16 %v3637, %v3633
    %v3698 = vpack.c.b16 %v3638, %v3634
    %v3699 = vpack.c.b16 %v3639, %v3635
    %v3700 = vpack.c.b16 %v3640, %v3636
    %v3701 = vpack.c.b16 %v3645, %v3641
    %v3702 = vpack.c.b16 %v3646, %v3642
    %v3703 = vpack.c.b16 %v3647, %v3643
    %v3704 = vpack.c.b16 %v3648, %v3644
    %v3705 = vpack.c.b16 %v3653, %v3649
    %v3706 = vpack.c.b16 %v3654, %v3650
    %v3707 = vpack.c.b16 %v3655, %v3651
    %v3708 = vpack.c.b16 %v3656, %v3652
    %v3709 = vpack.c.b16 %v3661, %v3657
    %v3710 = vpack.c.b16 %v3662, %v3658
    %v3711 = vpack.c.b16 %v3663, %v3659
    %v3712 = vpack.c.b16 %v3664, %v3660
    %v3713 = vpack.c.b16 %v3669, %v3665
    %v3714 = vpack.c.b16 %v3670, %v3666
    %v3715 = vpack.c.b16 %v3671, %v3667
    %v3716 = vpack.c.b16 %v3672, %v3668
    %v3717 = vpack.c.b16 %v3677, %v3673
    %v3718 = vpack.c.b16 %v3678, %v3674
    %v3719 = vpack.c.b16 %v3679, %v3675
    %v3720 = vpack.c.b16 %v3680, %v3676
    %v3721 = vpack.c.b16 %v3685, %v3681
    %v3722 = vpack.c.b16 %v3686, %v3682
    %v3723 = vpack.c.b16 %v3687, %v3683
    %v3724 = vpack.c.b16 %v3688, %v3684
    %v3725 = vpack.c.b16 %v3693, %v3689
    %v3726 = vpack.c.b16 %v3694, %v3690
    %v3727 = vpack.c.b16 %v3695, %v3691
    %v3728 = vpack.c.b16 %v3696, %v3692
    %3761 = vmatpush.bf16.msra.mxu0 %v3725
    %3762 = vmatpush.bf16.msra.mxu0 %v3721
    %3763 = vmatpush.bf16.msra.mxu0 %v3717
    %3764 = vmatpush.bf16.msra.mxu0 %v3713
    %3765 = vmatpush.bf16.msra.mxu0 %v3709
    %3766 = vmatpush.bf16.msra.mxu0 %v3705
    %3767 = vmatpush.bf16.msra.mxu0 %v3701
    %3768 = vmatpush.bf16.msra.mxu0 %v3697
    %3769 = vmatmul.bf16.gmra.mxu0 %v3558
    %v3770 = vpop.f32.mrf.mxu0
    %v3771 = vadd.f32 %v3593, %v3770
    %v3772 = vpop.f32.mrf.mxu0
    %v3773 = vadd.f32 %v3593, %v3772
    %3774 = vdwg.mxu0
    %3775 = vmatpush.bf16.msra.mxu0 %v3726
    %3776 = vmatpush.bf16.msra.mxu0 %v3722
    %3777 = vmatpush.bf16.msra.mxu0 %v3718
    %3778 = vmatpush.bf16.msra.mxu0 %v3714
    %3779 = vmatpush.bf16.msra.mxu0 %v3710
    %3780 = vmatpush.bf16.msra.mxu0 %v3706
    %3781 = vmatpush.bf16.msra.mxu0 %v3702
    %3782 = vmatpush.bf16.msra.mxu0 %v3698
    %3783 = vmatmul.bf16.gmra.mxu0 %v3558
    %v3784 = vpop.f32.mrf.mxu0
    %v3785 = vadd.f32 %v3594, %v3784
    %v3786 = vpop.f32.mrf.mxu0
    %v3787 = vadd.f32 %v3594, %v3786
    %3788 = vdwg.mxu0
    %3789 = vmatpush.bf16.msra.mxu0 %v3727
    %3790 = vmatpush.bf16.msra.mxu0 %v3723
    %3791 = vmatpush.bf16.msra.mxu0 %v3719
    %3792 = vmatpush.bf16.msra.mxu0 %v3715
    %3793 = vmatpush.bf16.msra.mxu0 %v3711
    %3794 = vmatpush.bf16.msra.mxu0 %v3707
    %3795 = vmatpush.bf16.msra.mxu0 %v3703
    %3796 = vmatpush.bf16.msra.mxu0 %v3699
    %3797 = vmatmul.bf16.gmra.mxu0 %v3558
    %v3798 = vpop.f32.mrf.mxu0
    %v3799 = vadd.f32 %v3595, %v3798
    %v3800 = vpop.f32.mrf.mxu0
    %v3801 = vadd.f32 %v3595, %v3800
    %3802 = vdwg.mxu0
    %3803 = vmatpush.bf16.msra.mxu0 %v3728
    %3804 = vmatpush.bf16.msra.mxu0 %v3724
    %3805 = vmatpush.bf16.msra.mxu0 %v3720
    %3806 = vmatpush.bf16.msra.mxu0 %v3716
    %3807 = vmatpush.bf16.msra.mxu0 %v3712
    %3808 = vmatpush.bf16.msra.mxu0 %v3708
    %3809 = vmatpush.bf16.msra.mxu0 %v3704
    %3810 = vmatpush.bf16.msra.mxu0 %v3700
    %3811 = vmatmul.bf16.gmra.mxu0 %v3558
    %v3812 = vpop.f32.mrf.mxu0
    %v3813 = vadd.f32 %v3596, %v3812
    %v3814 = vpop.f32.mrf.mxu0
    %v3815 = vadd.f32 %v3596, %v3814
    %3816 = vdwg.mxu0
    %vm3817 = vcmp.gt.f32.partialorder %v3771, 0.0
    %vm3818 = vcmp.gt.f32.partialorder %v3785, 0.0
    %vm3819 = vcmp.gt.f32.partialorder %v3799, 0.0
    %vm3820 = vcmp.gt.f32.partialorder %v3813, 0.0
    %vm3821 = vcmp.gt.f32.partialorder %v3773, 0.0
    %vm3822 = vcmp.gt.f32.partialorder %v3787, 0.0
    %vm3823 = vcmp.gt.f32.partialorder %v3801, 0.0
    %vm3824 = vcmp.gt.f32.partialorder %v3815, 0.0
    %v3825 = vmul.f32 %v3771, 0.01
    %v3826 = vmul.f32 %v3785, 0.01
    %v3827 = vmul.f32 %v3799, 0.01
    %v3828 = vmul.f32 %v3813, 0.01
    %v3829 = vmul.f32 %v3773, 0.01
    %v3830 = vmul.f32 %v3787, 0.01
    %v3831 = vmul.f32 %v3801, 0.01
    %v3832 = vmul.f32 %v3815, 0.01
    %v3833 = vsel %vm3817, %v3771, %v3825
    %v3834 = vsel %vm3818, %v3785, %v3826
    %v3835 = vsel %vm3819, %v3799, %v3827
    %v3836 = vsel %vm3820, %v3813, %v3828
    %v3837 = vsel %vm3821, %v3773, %v3829
    %v3838 = vsel %vm3822, %v3787, %v3830
    %v3839 = vsel %vm3823, %v3801, %v3831
    %v3840 = vsel %vm3824, %v3815, %v3832
    %v3841 = vpack.c.bf16 %v3837, %v3833
    %v3842 = vpack.c.bf16 %v3838, %v3834
    %v3843 = vpack.c.bf16 %v3839, %v3835
    %v3844 = vpack.c.bf16 %v3840, %v3836
    %v3845 = vld [vmem:[#allocation9] sm:$0xff]
    %v3846 = vld [vmem:[#allocation9 + $0x8] sm:$0xff]
    %v3847 = vld [vmem:[#allocation9 + $0x10] sm:$0xff]
    %v3848 = vld [vmem:[#allocation9 + $0x18] sm:$0xff]
    %v3849 = vld [vmem:[#allocation9 + $0x20] sm:$0xff]
    %v3850 = vld [vmem:[#allocation9 + $0x28] sm:$0xff]
    %v3851 = vld [vmem:[#allocation9 + $0x30] sm:$0xff]
    %v3852 = vld [vmem:[#allocation9 + $0x38] sm:$0xff]
    %v3853 = vld [vmem:[#allocation9 + $0x40] sm:$0xff]
    %v3854 = vld [vmem:[#allocation9 + $0x48] sm:$0xff]
    %v3855 = vld [vmem:[#allocation9 + $0x50] sm:$0xff]
    %v3856 = vld [vmem:[#allocation9 + $0x58] sm:$0xff]
    %v3857 = vld [vmem:[#allocation9 + $0x60] sm:$0xff]
    %v3858 = vld [vmem:[#allocation9 + $0x68] sm:$0xff]
    %v3859 = vld [vmem:[#allocation9 + $0x70] sm:$0xff]
    %v3860 = vld [vmem:[#allocation9 + $0x78] sm:$0xff]
    %v3861 = vld [vmem:[#allocation9 + $0x80] sm:$0xff]
    %v3862 = vld [vmem:[#allocation9 + $0x88] sm:$0xff]
    %v3863 = vld [vmem:[#allocation9 + $0x90] sm:$0xff]
    %v3864 = vld [vmem:[#allocation9 + $0x98] sm:$0xff]
    %v3865 = vld [vmem:[#allocation9 + $0xa0] sm:$0xff]
    %v3866 = vld [vmem:[#allocation9 + $0xa8] sm:$0xff]
    %v3867 = vld [vmem:[#allocation9 + $0xb0] sm:$0xff]
    %v3868 = vld [vmem:[#allocation9 + $0xb8] sm:$0xff]
    %v3869 = vld [vmem:[#allocation9 + $0xc0] sm:$0xff]
    %v3870 = vld [vmem:[#allocation9 + $0xc8] sm:$0xff]
    %v3871 = vld [vmem:[#allocation9 + $0xd0] sm:$0xff]
    %v3872 = vld [vmem:[#allocation9 + $0xd8] sm:$0xff]
    %v3873 = vld [vmem:[#allocation9 + $0xe0] sm:$0xff]
    %v3874 = vld [vmem:[#allocation9 + $0xe8] sm:$0xff]
    %v3875 = vld [vmem:[#allocation9 + $0xf0] sm:$0xff]
    %v3876 = vld [vmem:[#allocation9 + $0xf8] sm:$0xff]
    %v3877 = vld [vmem:[#allocation9 + $0x100] sm:$0xff]
    %v3878 = vld [vmem:[#allocation9 + $0x108] sm:$0xff]
    %v3879 = vld [vmem:[#allocation9 + $0x110] sm:$0xff]
    %v3880 = vld [vmem:[#allocation9 + $0x118] sm:$0xff]
    %v3881 = vld [vmem:[#allocation9 + $0x120] sm:$0xff]
    %v3882 = vld [vmem:[#allocation9 + $0x128] sm:$0xff]
    %v3883 = vld [vmem:[#allocation9 + $0x130] sm:$0xff]
    %v3884 = vld [vmem:[#allocation9 + $0x138] sm:$0xff]
    %v3885 = vld [vmem:[#allocation9 + $0x140] sm:$0xff]
    %v3886 = vld [vmem:[#allocation9 + $0x148] sm:$0xff]
    %v3887 = vld [vmem:[#allocation9 + $0x150] sm:$0xff]
    %v3888 = vld [vmem:[#allocation9 + $0x158] sm:$0xff]
    %v3889 = vld [vmem:[#allocation9 + $0x160] sm:$0xff]
    %v3890 = vld [vmem:[#allocation9 + $0x168] sm:$0xff]
    %v3891 = vld [vmem:[#allocation9 + $0x170] sm:$0xff]
    %v3892 = vld [vmem:[#allocation9 + $0x178] sm:$0xff]
    %v3893 = vld [vmem:[#allocation9 + $0x180] sm:$0xff]
    %v3894 = vld [vmem:[#allocation9 + $0x188] sm:$0xff]
    %v3895 = vld [vmem:[#allocation9 + $0x190] sm:$0xff]
    %v3896 = vld [vmem:[#allocation9 + $0x198] sm:$0xff]
    %v3897 = vld [vmem:[#allocation9 + $0x1a0] sm:$0xff]
    %v3898 = vld [vmem:[#allocation9 + $0x1a8] sm:$0xff]
    %v3899 = vld [vmem:[#allocation9 + $0x1b0] sm:$0xff]
    %v3900 = vld [vmem:[#allocation9 + $0x1b8] sm:$0xff]
    %v3901 = vld [vmem:[#allocation9 + $0x1c0] sm:$0xff]
    %v3902 = vld [vmem:[#allocation9 + $0x1c8] sm:$0xff]
    %v3903 = vld [vmem:[#allocation9 + $0x1d0] sm:$0xff]
    %v3904 = vld [vmem:[#allocation9 + $0x1d8] sm:$0xff]
    %v3905 = vld [vmem:[#allocation9 + $0x1e0] sm:$0xff]
    %v3906 = vld [vmem:[#allocation9 + $0x1e8] sm:$0xff]
    %v3907 = vld [vmem:[#allocation9 + $0x1f0] sm:$0xff]
    %v3908 = vld [vmem:[#allocation9 + $0x1f8] sm:$0xff]
    %v3909 = vld [vmem:[#allocation9 + $0x200] sm:$0xff]
    %v3910 = vld [vmem:[#allocation9 + $0x208] sm:$0xff]
    %v3911 = vld [vmem:[#allocation9 + $0x210] sm:$0xff]
    %v3912 = vld [vmem:[#allocation9 + $0x218] sm:$0xff]
    %v3913 = vld [vmem:[#allocation9 + $0x220] sm:$0xff]
    %v3914 = vld [vmem:[#allocation9 + $0x228] sm:$0xff]
    %v3915 = vld [vmem:[#allocation9 + $0x230] sm:$0xff]
    %v3916 = vld [vmem:[#allocation9 + $0x238] sm:$0xff]
    %v3917 = vld [vmem:[#allocation9 + $0x240] sm:$0xff]
    %v3918 = vld [vmem:[#allocation9 + $0x248] sm:$0xff]
    %v3919 = vld [vmem:[#allocation9 + $0x250] sm:$0xff]
    %v3920 = vld [vmem:[#allocation9 + $0x258] sm:$0xff]
    %v3921 = vld [vmem:[#allocation9 + $0x260] sm:$0xff]
    %v3922 = vld [vmem:[#allocation9 + $0x268] sm:$0xff]
    %v3923 = vld [vmem:[#allocation9 + $0x270] sm:$0xff]
    %v3924 = vld [vmem:[#allocation9 + $0x278] sm:$0xff]
    %v3925 = vld [vmem:[#allocation9 + $0x280] sm:$0xff]
    %v3926 = vld [vmem:[#allocation9 + $0x288] sm:$0xff]
    %v3927 = vld [vmem:[#allocation9 + $0x290] sm:$0xff]
    %v3928 = vld [vmem:[#allocation9 + $0x298] sm:$0xff]
    %v3929 = vld [vmem:[#allocation9 + $0x2a0] sm:$0xff]
    %v3930 = vld [vmem:[#allocation9 + $0x2a8] sm:$0xff]
    %v3931 = vld [vmem:[#allocation9 + $0x2b0] sm:$0xff]
    %v3932 = vld [vmem:[#allocation9 + $0x2b8] sm:$0xff]
    %v3933 = vld [vmem:[#allocation9 + $0x2c0] sm:$0xff]
    %v3934 = vld [vmem:[#allocation9 + $0x2c8] sm:$0xff]
    %v3935 = vld [vmem:[#allocation9 + $0x2d0] sm:$0xff]
    %v3936 = vld [vmem:[#allocation9 + $0x2d8] sm:$0xff]
    %v3937 = vld [vmem:[#allocation9 + $0x2e0] sm:$0xff]
    %v3938 = vld [vmem:[#allocation9 + $0x2e8] sm:$0xff]
    %v3939 = vld [vmem:[#allocation9 + $0x2f0] sm:$0xff]
    %v3940 = vld [vmem:[#allocation9 + $0x2f8] sm:$0xff]
    %v3941 = vld [vmem:[#allocation9 + $0x300] sm:$0xff]
    %v3942 = vld [vmem:[#allocation9 + $0x308] sm:$0xff]
    %v3943 = vld [vmem:[#allocation9 + $0x310] sm:$0xff]
    %v3944 = vld [vmem:[#allocation9 + $0x318] sm:$0xff]
    %v3945 = vld [vmem:[#allocation9 + $0x320] sm:$0xff]
    %v3946 = vld [vmem:[#allocation9 + $0x328] sm:$0xff]
    %v3947 = vld [vmem:[#allocation9 + $0x330] sm:$0xff]
    %v3948 = vld [vmem:[#allocation9 + $0x338] sm:$0xff]
    %v3949 = vld [vmem:[#allocation9 + $0x340] sm:$0xff]
    %v3950 = vld [vmem:[#allocation9 + $0x348] sm:$0xff]
    %v3951 = vld [vmem:[#allocation9 + $0x350] sm:$0xff]
    %v3952 = vld [vmem:[#allocation9 + $0x358] sm:$0xff]
    %v3953 = vld [vmem:[#allocation9 + $0x360] sm:$0xff]
    %v3954 = vld [vmem:[#allocation9 + $0x368] sm:$0xff]
    %v3955 = vld [vmem:[#allocation9 + $0x370] sm:$0xff]
    %v3956 = vld [vmem:[#allocation9 + $0x378] sm:$0xff]
    %v3957 = vld [vmem:[#allocation9 + $0x380] sm:$0xff]
    %v3958 = vld [vmem:[#allocation9 + $0x388] sm:$0xff]
    %v3959 = vld [vmem:[#allocation9 + $0x390] sm:$0xff]
    %v3960 = vld [vmem:[#allocation9 + $0x398] sm:$0xff]
    %v3961 = vld [vmem:[#allocation9 + $0x3a0] sm:$0xff]
    %v3962 = vld [vmem:[#allocation9 + $0x3a8] sm:$0xff]
    %v3963 = vld [vmem:[#allocation9 + $0x3b0] sm:$0xff]
    %v3964 = vld [vmem:[#allocation9 + $0x3b8] sm:$0xff]
    %v3965 = vld [vmem:[#allocation9 + $0x3c0] sm:$0xff]
    %v3966 = vld [vmem:[#allocation9 + $0x3c8] sm:$0xff]
    %v3967 = vld [vmem:[#allocation9 + $0x3d0] sm:$0xff]
    %v3968 = vld [vmem:[#allocation9 + $0x3d8] sm:$0xff]
    %v3969 = vld [vmem:[#allocation9 + $0x3e0] sm:$0xff]
    %v3970 = vld [vmem:[#allocation9 + $0x3e8] sm:$0xff]
    %v3971 = vld [vmem:[#allocation9 + $0x3f0] sm:$0xff]
    %v3972 = vld [vmem:[#allocation9 + $0x3f8] sm:$0xff]
    %v3973 = vld [vmem:[#allocation9 + $0x400] sm:$0xff]
    %v3974 = vld [vmem:[#allocation9 + $0x408] sm:$0xff]
    %v3975 = vld [vmem:[#allocation9 + $0x410] sm:$0xff]
    %v3976 = vld [vmem:[#allocation9 + $0x418] sm:$0xff]
    %v3977 = vld [vmem:[#allocation9 + $0x420] sm:$0xff]
    %v3978 = vld [vmem:[#allocation9 + $0x428] sm:$0xff]
    %v3979 = vld [vmem:[#allocation9 + $0x430] sm:$0xff]
    %v3980 = vld [vmem:[#allocation9 + $0x438] sm:$0xff]
    %v3981 = vld [vmem:[#allocation9 + $0x440] sm:$0xff]
    %v3982 = vld [vmem:[#allocation9 + $0x448] sm:$0xff]
    %v3983 = vld [vmem:[#allocation9 + $0x450] sm:$0xff]
    %v3984 = vld [vmem:[#allocation9 + $0x458] sm:$0xff]
    %v3985 = vld [vmem:[#allocation9 + $0x460] sm:$0xff]
    %v3986 = vld [vmem:[#allocation9 + $0x468] sm:$0xff]
    %v3987 = vld [vmem:[#allocation9 + $0x470] sm:$0xff]
    %v3988 = vld [vmem:[#allocation9 + $0x478] sm:$0xff]
    %v3989 = vld [vmem:[#allocation9 + $0x480] sm:$0xff]
    %v3990 = vld [vmem:[#allocation9 + $0x488] sm:$0xff]
    %v3991 = vld [vmem:[#allocation9 + $0x490] sm:$0xff]
    %v3992 = vld [vmem:[#allocation9 + $0x498] sm:$0xff]
    %v3993 = vld [vmem:[#allocation9 + $0x4a0] sm:$0xff]
    %v3994 = vld [vmem:[#allocation9 + $0x4a8] sm:$0xff]
    %v3995 = vld [vmem:[#allocation9 + $0x4b0] sm:$0xff]
    %v3996 = vld [vmem:[#allocation9 + $0x4b8] sm:$0xff]
    %v3997 = vld [vmem:[#allocation9 + $0x4c0] sm:$0xff]
    %v3998 = vld [vmem:[#allocation9 + $0x4c8] sm:$0xff]
    %v3999 = vld [vmem:[#allocation9 + $0x4d0] sm:$0xff]
    %v4000 = vld [vmem:[#allocation9 + $0x4d8] sm:$0xff]
    %v4001 = vld [vmem:[#allocation9 + $0x4e0] sm:$0xff]
    %v4002 = vld [vmem:[#allocation9 + $0x4e8] sm:$0xff]
    %v4003 = vld [vmem:[#allocation9 + $0x4f0] sm:$0xff]
    %v4004 = vld [vmem:[#allocation9 + $0x4f8] sm:$0xff]
    %v4005 = vld [vmem:[#allocation9 + $0x500] sm:$0xff]
    %v4006 = vld [vmem:[#allocation9 + $0x508] sm:$0xff]
    %v4007 = vld [vmem:[#allocation9 + $0x510] sm:$0xff]
    %v4008 = vld [vmem:[#allocation9 + $0x518] sm:$0xff]
    %v4009 = vld [vmem:[#allocation9 + $0x520] sm:$0xff]
    %v4010 = vld [vmem:[#allocation9 + $0x528] sm:$0xff]
    %v4011 = vld [vmem:[#allocation9 + $0x530] sm:$0xff]
    %v4012 = vld [vmem:[#allocation9 + $0x538] sm:$0xff]
    %v4013 = vld [vmem:[#allocation9 + $0x540] sm:$0xff]
    %v4014 = vld [vmem:[#allocation9 + $0x548] sm:$0xff]
    %v4015 = vld [vmem:[#allocation9 + $0x550] sm:$0xff]
    %v4016 = vld [vmem:[#allocation9 + $0x558] sm:$0xff]
    %v4017 = vld [vmem:[#allocation9 + $0x560] sm:$0xff]
    %v4018 = vld [vmem:[#allocation9 + $0x568] sm:$0xff]
    %v4019 = vld [vmem:[#allocation9 + $0x570] sm:$0xff]
    %v4020 = vld [vmem:[#allocation9 + $0x578] sm:$0xff]
    %v4021 = vld [vmem:[#allocation9 + $0x580] sm:$0xff]
    %v4022 = vld [vmem:[#allocation9 + $0x588] sm:$0xff]
    %v4023 = vld [vmem:[#allocation9 + $0x590] sm:$0xff]
    %v4024 = vld [vmem:[#allocation9 + $0x598] sm:$0xff]
    %v4025 = vld [vmem:[#allocation9 + $0x5a0] sm:$0xff]
    %v4026 = vld [vmem:[#allocation9 + $0x5a8] sm:$0xff]
    %v4027 = vld [vmem:[#allocation9 + $0x5b0] sm:$0xff]
    %v4028 = vld [vmem:[#allocation9 + $0x5b8] sm:$0xff]
    %v4029 = vld [vmem:[#allocation9 + $0x5c0] sm:$0xff]
    %v4030 = vld [vmem:[#allocation9 + $0x5c8] sm:$0xff]
    %v4031 = vld [vmem:[#allocation9 + $0x5d0] sm:$0xff]
    %v4032 = vld [vmem:[#allocation9 + $0x5d8] sm:$0xff]
    %v4033 = vld [vmem:[#allocation9 + $0x5e0] sm:$0xff]
    %v4034 = vld [vmem:[#allocation9 + $0x5e8] sm:$0xff]
    %v4035 = vld [vmem:[#allocation9 + $0x5f0] sm:$0xff]
    %v4036 = vld [vmem:[#allocation9 + $0x5f8] sm:$0xff]
    %v4037 = vld [vmem:[#allocation9 + $0x600] sm:$0xff]
    %v4038 = vld [vmem:[#allocation9 + $0x608] sm:$0xff]
    %v4039 = vld [vmem:[#allocation9 + $0x610] sm:$0xff]
    %v4040 = vld [vmem:[#allocation9 + $0x618] sm:$0xff]
    %v4041 = vld [vmem:[#allocation9 + $0x620] sm:$0xff]
    %v4042 = vld [vmem:[#allocation9 + $0x628] sm:$0xff]
    %v4043 = vld [vmem:[#allocation9 + $0x630] sm:$0xff]
    %v4044 = vld [vmem:[#allocation9 + $0x638] sm:$0xff]
    %v4045 = vld [vmem:[#allocation9 + $0x640] sm:$0xff]
    %v4046 = vld [vmem:[#allocation9 + $0x648] sm:$0xff]
    %v4047 = vld [vmem:[#allocation9 + $0x650] sm:$0xff]
    %v4048 = vld [vmem:[#allocation9 + $0x658] sm:$0xff]
    %v4049 = vld [vmem:[#allocation9 + $0x660] sm:$0xff]
    %v4050 = vld [vmem:[#allocation9 + $0x668] sm:$0xff]
    %v4051 = vld [vmem:[#allocation9 + $0x670] sm:$0xff]
    %v4052 = vld [vmem:[#allocation9 + $0x678] sm:$0xff]
    %v4053 = vld [vmem:[#allocation9 + $0x680] sm:$0xff]
    %v4054 = vld [vmem:[#allocation9 + $0x688] sm:$0xff]
    %v4055 = vld [vmem:[#allocation9 + $0x690] sm:$0xff]
    %v4056 = vld [vmem:[#allocation9 + $0x698] sm:$0xff]
    %v4057 = vld [vmem:[#allocation9 + $0x6a0] sm:$0xff]
    %v4058 = vld [vmem:[#allocation9 + $0x6a8] sm:$0xff]
    %v4059 = vld [vmem:[#allocation9 + $0x6b0] sm:$0xff]
    %v4060 = vld [vmem:[#allocation9 + $0x6b8] sm:$0xff]
    %v4061 = vld [vmem:[#allocation9 + $0x6c0] sm:$0xff]
    %v4062 = vld [vmem:[#allocation9 + $0x6c8] sm:$0xff]
    %v4063 = vld [vmem:[#allocation9 + $0x6d0] sm:$0xff]
    %v4064 = vld [vmem:[#allocation9 + $0x6d8] sm:$0xff]
    %v4065 = vld [vmem:[#allocation9 + $0x6e0] sm:$0xff]
    %v4066 = vld [vmem:[#allocation9 + $0x6e8] sm:$0xff]
    %v4067 = vld [vmem:[#allocation9 + $0x6f0] sm:$0xff]
    %v4068 = vld [vmem:[#allocation9 + $0x6f8] sm:$0xff]
    %v4069 = vld [vmem:[#allocation9 + $0x700] sm:$0xff]
    %v4070 = vld [vmem:[#allocation9 + $0x708] sm:$0xff]
    %v4071 = vld [vmem:[#allocation9 + $0x710] sm:$0xff]
    %v4072 = vld [vmem:[#allocation9 + $0x718] sm:$0xff]
    %v4073 = vld [vmem:[#allocation9 + $0x720] sm:$0xff]
    %v4074 = vld [vmem:[#allocation9 + $0x728] sm:$0xff]
    %v4075 = vld [vmem:[#allocation9 + $0x730] sm:$0xff]
    %v4076 = vld [vmem:[#allocation9 + $0x738] sm:$0xff]
    %v4077 = vld [vmem:[#allocation9 + $0x740] sm:$0xff]
    %v4078 = vld [vmem:[#allocation9 + $0x748] sm:$0xff]
    %v4079 = vld [vmem:[#allocation9 + $0x750] sm:$0xff]
    %v4080 = vld [vmem:[#allocation9 + $0x758] sm:$0xff]
    %v4081 = vld [vmem:[#allocation9 + $0x760] sm:$0xff]
    %v4082 = vld [vmem:[#allocation9 + $0x768] sm:$0xff]
    %v4083 = vld [vmem:[#allocation9 + $0x770] sm:$0xff]
    %v4084 = vld [vmem:[#allocation9 + $0x778] sm:$0xff]
    %v4085 = vld [vmem:[#allocation9 + $0x780] sm:$0xff]
    %v4086 = vld [vmem:[#allocation9 + $0x788] sm:$0xff]
    %v4087 = vld [vmem:[#allocation9 + $0x790] sm:$0xff]
    %v4088 = vld [vmem:[#allocation9 + $0x798] sm:$0xff]
    %v4089 = vld [vmem:[#allocation9 + $0x7a0] sm:$0xff]
    %v4090 = vld [vmem:[#allocation9 + $0x7a8] sm:$0xff]
    %v4091 = vld [vmem:[#allocation9 + $0x7b0] sm:$0xff]
    %v4092 = vld [vmem:[#allocation9 + $0x7b8] sm:$0xff]
    %v4093 = vld [vmem:[#allocation9 + $0x7c0] sm:$0xff]
    %v4094 = vld [vmem:[#allocation9 + $0x7c8] sm:$0xff]
    %v4095 = vld [vmem:[#allocation9 + $0x7d0] sm:$0xff]
    %v4096 = vld [vmem:[#allocation9 + $0x7d8] sm:$0xff]
    %v4097 = vld [vmem:[#allocation9 + $0x7e0] sm:$0xff]
    %v4098 = vld [vmem:[#allocation9 + $0x7e8] sm:$0xff]
    %v4099 = vld [vmem:[#allocation9 + $0x7f0] sm:$0xff]
    %v4100 = vld [vmem:[#allocation9 + $0x7f8] sm:$0xff]
    %v4101 = vld [vmem:[%s10] sm:$0xff]
    %v4103 = vperm.slane %v4101, 0
    %v4104 = vperm.slane %v4101, 1
    %v4105 = vperm.slane %v4101, 2
    %v4106 = vperm.slane %v4101, 3
    %v4107 = vperm.slane %v4101, 4
    %v4108 = vperm.slane %v4101, 5
    %v4109 = vperm.slane %v4101, 6
    %v4110 = vperm.slane %v4101, 7
    %v4375 = vunpack.c.l.b16 %v3845
    %v4376 = vunpack.c.h.b16 %v3845
    %v4377 = vunpack.c.l.b16 %v3846
    %v4378 = vunpack.c.h.b16 %v3846
    %v4379 = vunpack.c.l.b16 %v3847
    %v4380 = vunpack.c.h.b16 %v3847
    %v4381 = vunpack.c.l.b16 %v3848
    %v4382 = vunpack.c.h.b16 %v3848
    %v4383 = vunpack.c.l.b16 %v3849
    %v4384 = vunpack.c.h.b16 %v3849
    %v4385 = vunpack.c.l.b16 %v3850
    %v4386 = vunpack.c.h.b16 %v3850
    %v4387 = vunpack.c.l.b16 %v3851
    %v4388 = vunpack.c.h.b16 %v3851
    %v4389 = vunpack.c.l.b16 %v3852
    %v4390 = vunpack.c.h.b16 %v3852
    %v4391 = vunpack.c.l.b16 %v3853
    %v4392 = vunpack.c.h.b16 %v3853
    %v4393 = vunpack.c.l.b16 %v3854
    %v4394 = vunpack.c.h.b16 %v3854
    %v4395 = vunpack.c.l.b16 %v3855
    %v4396 = vunpack.c.h.b16 %v3855
    %v4397 = vunpack.c.l.b16 %v3856
    %v4398 = vunpack.c.h.b16 %v3856
    %v4399 = vunpack.c.l.b16 %v3857
    %v4400 = vunpack.c.h.b16 %v3857
    %v4401 = vunpack.c.l.b16 %v3858
    %v4402 = vunpack.c.h.b16 %v3858
    %v4403 = vunpack.c.l.b16 %v3859
    %v4404 = vunpack.c.h.b16 %v3859
    %v4405 = vunpack.c.l.b16 %v3860
    %v4406 = vunpack.c.h.b16 %v3860
    %v4407 = vunpack.c.l.b16 %v3861
    %v4408 = vunpack.c.h.b16 %v3861
    %v4409 = vunpack.c.l.b16 %v3862
    %v4410 = vunpack.c.h.b16 %v3862
    %v4411 = vunpack.c.l.b16 %v3863
    %v4412 = vunpack.c.h.b16 %v3863
    %v4413 = vunpack.c.l.b16 %v3864
    %v4414 = vunpack.c.h.b16 %v3864
    %v4415 = vunpack.c.l.b16 %v3865
    %v4416 = vunpack.c.h.b16 %v3865
    %v4417 = vunpack.c.l.b16 %v3866
    %v4418 = vunpack.c.h.b16 %v3866
    %v4419 = vunpack.c.l.b16 %v3867
    %v4420 = vunpack.c.h.b16 %v3867
    %v4421 = vunpack.c.l.b16 %v3868
    %v4422 = vunpack.c.h.b16 %v3868
    %v4423 = vunpack.c.l.b16 %v3869
    %v4424 = vunpack.c.h.b16 %v3869
    %v4425 = vunpack.c.l.b16 %v3870
    %v4426 = vunpack.c.h.b16 %v3870
    %v4427 = vunpack.c.l.b16 %v3871
    %v4428 = vunpack.c.h.b16 %v3871
    %v4429 = vunpack.c.l.b16 %v3872
    %v4430 = vunpack.c.h.b16 %v3872
    %v4431 = vunpack.c.l.b16 %v3873
    %v4432 = vunpack.c.h.b16 %v3873
    %v4433 = vunpack.c.l.b16 %v3874
    %v4434 = vunpack.c.h.b16 %v3874
    %v4435 = vunpack.c.l.b16 %v3875
    %v4436 = vunpack.c.h.b16 %v3875
    %v4437 = vunpack.c.l.b16 %v3876
    %v4438 = vunpack.c.h.b16 %v3876
    %v4439 = vunpack.c.l.b16 %v3877
    %v4440 = vunpack.c.h.b16 %v3877
    %v4441 = vunpack.c.l.b16 %v3878
    %v4442 = vunpack.c.h.b16 %v3878
    %v4443 = vunpack.c.l.b16 %v3879
    %v4444 = vunpack.c.h.b16 %v3879
    %v4445 = vunpack.c.l.b16 %v3880
    %v4446 = vunpack.c.h.b16 %v3880
    %v4447 = vunpack.c.l.b16 %v3881
    %v4448 = vunpack.c.h.b16 %v3881
    %v4449 = vunpack.c.l.b16 %v3882
    %v4450 = vunpack.c.h.b16 %v3882
    %v4451 = vunpack.c.l.b16 %v3883
    %v4452 = vunpack.c.h.b16 %v3883
    %v4453 = vunpack.c.l.b16 %v3884
    %v4454 = vunpack.c.h.b16 %v3884
    %v4455 = vunpack.c.l.b16 %v3885
    %v4456 = vunpack.c.h.b16 %v3885
    %v4457 = vunpack.c.l.b16 %v3886
    %v4458 = vunpack.c.h.b16 %v3886
    %v4459 = vunpack.c.l.b16 %v3887
    %v4460 = vunpack.c.h.b16 %v3887
    %v4461 = vunpack.c.l.b16 %v3888
    %v4462 = vunpack.c.h.b16 %v3888
    %v4463 = vunpack.c.l.b16 %v3889
    %v4464 = vunpack.c.h.b16 %v3889
    %v4465 = vunpack.c.l.b16 %v3890
    %v4466 = vunpack.c.h.b16 %v3890
    %v4467 = vunpack.c.l.b16 %v3891
    %v4468 = vunpack.c.h.b16 %v3891
    %v4469 = vunpack.c.l.b16 %v3892
    %v4470 = vunpack.c.h.b16 %v3892
    %v4471 = vunpack.c.l.b16 %v3893
    %v4472 = vunpack.c.h.b16 %v3893
    %v4473 = vunpack.c.l.b16 %v3894
    %v4474 = vunpack.c.h.b16 %v3894
    %v4475 = vunpack.c.l.b16 %v3895
    %v4476 = vunpack.c.h.b16 %v3895
    %v4477 = vunpack.c.l.b16 %v3896
    %v4478 = vunpack.c.h.b16 %v3896
    %v4479 = vunpack.c.l.b16 %v3897
    %v4480 = vunpack.c.h.b16 %v3897
    %v4481 = vunpack.c.l.b16 %v3898
    %v4482 = vunpack.c.h.b16 %v3898
    %v4483 = vunpack.c.l.b16 %v3899
    %v4484 = vunpack.c.h.b16 %v3899
    %v4485 = vunpack.c.l.b16 %v3900
    %v4486 = vunpack.c.h.b16 %v3900
    %v4487 = vunpack.c.l.b16 %v3901
    %v4488 = vunpack.c.h.b16 %v3901
    %v4489 = vunpack.c.l.b16 %v3902
    %v4490 = vunpack.c.h.b16 %v3902
    %v4491 = vunpack.c.l.b16 %v3903
    %v4492 = vunpack.c.h.b16 %v3903
    %v4493 = vunpack.c.l.b16 %v3904
    %v4494 = vunpack.c.h.b16 %v3904
    %v4495 = vunpack.c.l.b16 %v3905
    %v4496 = vunpack.c.h.b16 %v3905
    %v4497 = vunpack.c.l.b16 %v3906
    %v4498 = vunpack.c.h.b16 %v3906
    %v4499 = vunpack.c.l.b16 %v3907
    %v4500 = vunpack.c.h.b16 %v3907
    %v4501 = vunpack.c.l.b16 %v3908
    %v4502 = vunpack.c.h.b16 %v3908
    %v4503 = vunpack.c.l.b16 %v3909
    %v4504 = vunpack.c.h.b16 %v3909
    %v4505 = vunpack.c.l.b16 %v3910
    %v4506 = vunpack.c.h.b16 %v3910
    %v4507 = vunpack.c.l.b16 %v3911
    %v4508 = vunpack.c.h.b16 %v3911
    %v4509 = vunpack.c.l.b16 %v3912
    %v4510 = vunpack.c.h.b16 %v3912
    %v4511 = vunpack.c.l.b16 %v3913
    %v4512 = vunpack.c.h.b16 %v3913
    %v4513 = vunpack.c.l.b16 %v3914
    %v4514 = vunpack.c.h.b16 %v3914
    %v4515 = vunpack.c.l.b16 %v3915
    %v4516 = vunpack.c.h.b16 %v3915
    %v4517 = vunpack.c.l.b16 %v3916
    %v4518 = vunpack.c.h.b16 %v3916
    %v4519 = vunpack.c.l.b16 %v3917
    %v4520 = vunpack.c.h.b16 %v3917
    %v4521 = vunpack.c.l.b16 %v3918
    %v4522 = vunpack.c.h.b16 %v3918
    %v4523 = vunpack.c.l.b16 %v3919
    %v4524 = vunpack.c.h.b16 %v3919
    %v4525 = vunpack.c.l.b16 %v3920
    %v4526 = vunpack.c.h.b16 %v3920
    %v4527 = vunpack.c.l.b16 %v3921
    %v4528 = vunpack.c.h.b16 %v3921
    %v4529 = vunpack.c.l.b16 %v3922
    %v4530 = vunpack.c.h.b16 %v3922
    %v4531 = vunpack.c.l.b16 %v3923
    %v4532 = vunpack.c.h.b16 %v3923
    %v4533 = vunpack.c.l.b16 %v3924
    %v4534 = vunpack.c.h.b16 %v3924
    %v4535 = vunpack.c.l.b16 %v3925
    %v4536 = vunpack.c.h.b16 %v3925
    %v4537 = vunpack.c.l.b16 %v3926
    %v4538 = vunpack.c.h.b16 %v3926
    %v4539 = vunpack.c.l.b16 %v3927
    %v4540 = vunpack.c.h.b16 %v3927
    %v4541 = vunpack.c.l.b16 %v3928
    %v4542 = vunpack.c.h.b16 %v3928
    %v4543 = vunpack.c.l.b16 %v3929
    %v4544 = vunpack.c.h.b16 %v3929
    %v4545 = vunpack.c.l.b16 %v3930
    %v4546 = vunpack.c.h.b16 %v3930
    %v4547 = vunpack.c.l.b16 %v3931
    %v4548 = vunpack.c.h.b16 %v3931
    %v4549 = vunpack.c.l.b16 %v3932
    %v4550 = vunpack.c.h.b16 %v3932
    %v4551 = vunpack.c.l.b16 %v3933
    %v4552 = vunpack.c.h.b16 %v3933
    %v4553 = vunpack.c.l.b16 %v3934
    %v4554 = vunpack.c.h.b16 %v3934
    %v4555 = vunpack.c.l.b16 %v3935
    %v4556 = vunpack.c.h.b16 %v3935
    %v4557 = vunpack.c.l.b16 %v3936
    %v4558 = vunpack.c.h.b16 %v3936
    %v4559 = vunpack.c.l.b16 %v3937
    %v4560 = vunpack.c.h.b16 %v3937
    %v4561 = vunpack.c.l.b16 %v3938
    %v4562 = vunpack.c.h.b16 %v3938
    %v4563 = vunpack.c.l.b16 %v3939
    %v4564 = vunpack.c.h.b16 %v3939
    %v4565 = vunpack.c.l.b16 %v3940
    %v4566 = vunpack.c.h.b16 %v3940
    %v4567 = vunpack.c.l.b16 %v3941
    %v4568 = vunpack.c.h.b16 %v3941
    %v4569 = vunpack.c.l.b16 %v3942
    %v4570 = vunpack.c.h.b16 %v3942
    %v4571 = vunpack.c.l.b16 %v3943
    %v4572 = vunpack.c.h.b16 %v3943
    %v4573 = vunpack.c.l.b16 %v3944
    %v4574 = vunpack.c.h.b16 %v3944
    %v4575 = vunpack.c.l.b16 %v3945
    %v4576 = vunpack.c.h.b16 %v3945
    %v4577 = vunpack.c.l.b16 %v3946
    %v4578 = vunpack.c.h.b16 %v3946
    %v4579 = vunpack.c.l.b16 %v3947
    %v4580 = vunpack.c.h.b16 %v3947
    %v4581 = vunpack.c.l.b16 %v3948
    %v4582 = vunpack.c.h.b16 %v3948
    %v4583 = vunpack.c.l.b16 %v3949
    %v4584 = vunpack.c.h.b16 %v3949
    %v4585 = vunpack.c.l.b16 %v3950
    %v4586 = vunpack.c.h.b16 %v3950
    %v4587 = vunpack.c.l.b16 %v3951
    %v4588 = vunpack.c.h.b16 %v3951
    %v4589 = vunpack.c.l.b16 %v3952
    %v4590 = vunpack.c.h.b16 %v3952
    %v4591 = vunpack.c.l.b16 %v3953
    %v4592 = vunpack.c.h.b16 %v3953
    %v4593 = vunpack.c.l.b16 %v3954
    %v4594 = vunpack.c.h.b16 %v3954
    %v4595 = vunpack.c.l.b16 %v3955
    %v4596 = vunpack.c.h.b16 %v3955
    %v4597 = vunpack.c.l.b16 %v3956
    %v4598 = vunpack.c.h.b16 %v3956
    %v4599 = vunpack.c.l.b16 %v3957
    %v4600 = vunpack.c.h.b16 %v3957
    %v4601 = vunpack.c.l.b16 %v3958
    %v4602 = vunpack.c.h.b16 %v3958
    %v4603 = vunpack.c.l.b16 %v3959
    %v4604 = vunpack.c.h.b16 %v3959
    %v4605 = vunpack.c.l.b16 %v3960
    %v4606 = vunpack.c.h.b16 %v3960
    %v4607 = vunpack.c.l.b16 %v3961
    %v4608 = vunpack.c.h.b16 %v3961
    %v4609 = vunpack.c.l.b16 %v3962
    %v4610 = vunpack.c.h.b16 %v3962
    %v4611 = vunpack.c.l.b16 %v3963
    %v4612 = vunpack.c.h.b16 %v3963
    %v4613 = vunpack.c.l.b16 %v3964
    %v4614 = vunpack.c.h.b16 %v3964
    %v4615 = vunpack.c.l.b16 %v3965
    %v4616 = vunpack.c.h.b16 %v3965
    %v4617 = vunpack.c.l.b16 %v3966
    %v4618 = vunpack.c.h.b16 %v3966
    %v4619 = vunpack.c.l.b16 %v3967
    %v4620 = vunpack.c.h.b16 %v3967
    %v4621 = vunpack.c.l.b16 %v3968
    %v4622 = vunpack.c.h.b16 %v3968
    %v4623 = vunpack.c.l.b16 %v3969
    %v4624 = vunpack.c.h.b16 %v3969
    %v4625 = vunpack.c.l.b16 %v3970
    %v4626 = vunpack.c.h.b16 %v3970
    %v4627 = vunpack.c.l.b16 %v3971
    %v4628 = vunpack.c.h.b16 %v3971
    %v4629 = vunpack.c.l.b16 %v3972
    %v4630 = vunpack.c.h.b16 %v3972
    %v4631 = vunpack.c.l.b16 %v3973
    %v4632 = vunpack.c.h.b16 %v3973
    %v4633 = vunpack.c.l.b16 %v3974
    %v4634 = vunpack.c.h.b16 %v3974
    %v4635 = vunpack.c.l.b16 %v3975
    %v4636 = vunpack.c.h.b16 %v3975
    %v4637 = vunpack.c.l.b16 %v3976
    %v4638 = vunpack.c.h.b16 %v3976
    %v4639 = vunpack.c.l.b16 %v3977
    %v4640 = vunpack.c.h.b16 %v3977
    %v4641 = vunpack.c.l.b16 %v3978
    %v4642 = vunpack.c.h.b16 %v3978
    %v4643 = vunpack.c.l.b16 %v3979
    %v4644 = vunpack.c.h.b16 %v3979
    %v4645 = vunpack.c.l.b16 %v3980
    %v4646 = vunpack.c.h.b16 %v3980
    %v4647 = vunpack.c.l.b16 %v3981
    %v4648 = vunpack.c.h.b16 %v3981
    %v4649 = vunpack.c.l.b16 %v3982
    %v4650 = vunpack.c.h.b16 %v3982
    %v4651 = vunpack.c.l.b16 %v3983
    %v4652 = vunpack.c.h.b16 %v3983
    %v4653 = vunpack.c.l.b16 %v3984
    %v4654 = vunpack.c.h.b16 %v3984
    %v4655 = vunpack.c.l.b16 %v3985
    %v4656 = vunpack.c.h.b16 %v3985
    %v4657 = vunpack.c.l.b16 %v3986
    %v4658 = vunpack.c.h.b16 %v3986
    %v4659 = vunpack.c.l.b16 %v3987
    %v4660 = vunpack.c.h.b16 %v3987
    %v4661 = vunpack.c.l.b16 %v3988
    %v4662 = vunpack.c.h.b16 %v3988
    %v4663 = vunpack.c.l.b16 %v3989
    %v4664 = vunpack.c.h.b16 %v3989
    %v4665 = vunpack.c.l.b16 %v3990
    %v4666 = vunpack.c.h.b16 %v3990
    %v4667 = vunpack.c.l.b16 %v3991
    %v4668 = vunpack.c.h.b16 %v3991
    %v4669 = vunpack.c.l.b16 %v3992
    %v4670 = vunpack.c.h.b16 %v3992
    %v4671 = vunpack.c.l.b16 %v3993
    %v4672 = vunpack.c.h.b16 %v3993
    %v4673 = vunpack.c.l.b16 %v3994
    %v4674 = vunpack.c.h.b16 %v3994
    %v4675 = vunpack.c.l.b16 %v3995
    %v4676 = vunpack.c.h.b16 %v3995
    %v4677 = vunpack.c.l.b16 %v3996
    %v4678 = vunpack.c.h.b16 %v3996
    %v4679 = vunpack.c.l.b16 %v3997
    %v4680 = vunpack.c.h.b16 %v3997
    %v4681 = vunpack.c.l.b16 %v3998
    %v4682 = vunpack.c.h.b16 %v3998
    %v4683 = vunpack.c.l.b16 %v3999
    %v4684 = vunpack.c.h.b16 %v3999
    %v4685 = vunpack.c.l.b16 %v4000
    %v4686 = vunpack.c.h.b16 %v4000
    %v4687 = vunpack.c.l.b16 %v4001
    %v4688 = vunpack.c.h.b16 %v4001
    %v4689 = vunpack.c.l.b16 %v4002
    %v4690 = vunpack.c.h.b16 %v4002
    %v4691 = vunpack.c.l.b16 %v4003
    %v4692 = vunpack.c.h.b16 %v4003
    %v4693 = vunpack.c.l.b16 %v4004
    %v4694 = vunpack.c.h.b16 %v4004
    %v4695 = vunpack.c.l.b16 %v4005
    %v4696 = vunpack.c.h.b16 %v4005
    %v4697 = vunpack.c.l.b16 %v4006
    %v4698 = vunpack.c.h.b16 %v4006
    %v4699 = vunpack.c.l.b16 %v4007
    %v4700 = vunpack.c.h.b16 %v4007
    %v4701 = vunpack.c.l.b16 %v4008
    %v4702 = vunpack.c.h.b16 %v4008
    %v4703 = vunpack.c.l.b16 %v4009
    %v4704 = vunpack.c.h.b16 %v4009
    %v4705 = vunpack.c.l.b16 %v4010
    %v4706 = vunpack.c.h.b16 %v4010
    %v4707 = vunpack.c.l.b16 %v4011
    %v4708 = vunpack.c.h.b16 %v4011
    %v4709 = vunpack.c.l.b16 %v4012
    %v4710 = vunpack.c.h.b16 %v4012
    %v4711 = vunpack.c.l.b16 %v4013
    %v4712 = vunpack.c.h.b16 %v4013
    %v4713 = vunpack.c.l.b16 %v4014
    %v4714 = vunpack.c.h.b16 %v4014
    %v4715 = vunpack.c.l.b16 %v4015
    %v4716 = vunpack.c.h.b16 %v4015
    %v4717 = vunpack.c.l.b16 %v4016
    %v4718 = vunpack.c.h.b16 %v4016
    %v4719 = vunpack.c.l.b16 %v4017
    %v4720 = vunpack.c.h.b16 %v4017
    %v4721 = vunpack.c.l.b16 %v4018
    %v4722 = vunpack.c.h.b16 %v4018
    %v4723 = vunpack.c.l.b16 %v4019
    %v4724 = vunpack.c.h.b16 %v4019
    %v4725 = vunpack.c.l.b16 %v4020
    %v4726 = vunpack.c.h.b16 %v4020
    %v4727 = vunpack.c.l.b16 %v4021
    %v4728 = vunpack.c.h.b16 %v4021
    %v4729 = vunpack.c.l.b16 %v4022
    %v4730 = vunpack.c.h.b16 %v4022
    %v4731 = vunpack.c.l.b16 %v4023
    %v4732 = vunpack.c.h.b16 %v4023
    %v4733 = vunpack.c.l.b16 %v4024
    %v4734 = vunpack.c.h.b16 %v4024
    %v4735 = vunpack.c.l.b16 %v4025
    %v4736 = vunpack.c.h.b16 %v4025
    %v4737 = vunpack.c.l.b16 %v4026
    %v4738 = vunpack.c.h.b16 %v4026
    %v4739 = vunpack.c.l.b16 %v4027
    %v4740 = vunpack.c.h.b16 %v4027
    %v4741 = vunpack.c.l.b16 %v4028
    %v4742 = vunpack.c.h.b16 %v4028
    %v4743 = vunpack.c.l.b16 %v4029
    %v4744 = vunpack.c.h.b16 %v4029
    %v4745 = vunpack.c.l.b16 %v4030
    %v4746 = vunpack.c.h.b16 %v4030
    %v4747 = vunpack.c.l.b16 %v4031
    %v4748 = vunpack.c.h.b16 %v4031
    %v4749 = vunpack.c.l.b16 %v4032
    %v4750 = vunpack.c.h.b16 %v4032
    %v4751 = vunpack.c.l.b16 %v4033
    %v4752 = vunpack.c.h.b16 %v4033
    %v4753 = vunpack.c.l.b16 %v4034
    %v4754 = vunpack.c.h.b16 %v4034
    %v4755 = vunpack.c.l.b16 %v4035
    %v4756 = vunpack.c.h.b16 %v4035
    %v4757 = vunpack.c.l.b16 %v4036
    %v4758 = vunpack.c.h.b16 %v4036
    %v4759 = vunpack.c.l.b16 %v4037
    %v4760 = vunpack.c.h.b16 %v4037
    %v4761 = vunpack.c.l.b16 %v4038
    %v4762 = vunpack.c.h.b16 %v4038
    %v4763 = vunpack.c.l.b16 %v4039
    %v4764 = vunpack.c.h.b16 %v4039
    %v4765 = vunpack.c.l.b16 %v4040
    %v4766 = vunpack.c.h.b16 %v4040
    %v4767 = vunpack.c.l.b16 %v4041
    %v4768 = vunpack.c.h.b16 %v4041
    %v4769 = vunpack.c.l.b16 %v4042
    %v4770 = vunpack.c.h.b16 %v4042
    %v4771 = vunpack.c.l.b16 %v4043
    %v4772 = vunpack.c.h.b16 %v4043
    %v4773 = vunpack.c.l.b16 %v4044
    %v4774 = vunpack.c.h.b16 %v4044
    %v4775 = vunpack.c.l.b16 %v4045
    %v4776 = vunpack.c.h.b16 %v4045
    %v4777 = vunpack.c.l.b16 %v4046
    %v4778 = vunpack.c.h.b16 %v4046
    %v4779 = vunpack.c.l.b16 %v4047
    %v4780 = vunpack.c.h.b16 %v4047
    %v4781 = vunpack.c.l.b16 %v4048
    %v4782 = vunpack.c.h.b16 %v4048
    %v4783 = vunpack.c.l.b16 %v4049
    %v4784 = vunpack.c.h.b16 %v4049
    %v4785 = vunpack.c.l.b16 %v4050
    %v4786 = vunpack.c.h.b16 %v4050
    %v4787 = vunpack.c.l.b16 %v4051
    %v4788 = vunpack.c.h.b16 %v4051
    %v4789 = vunpack.c.l.b16 %v4052
    %v4790 = vunpack.c.h.b16 %v4052
    %v4791 = vunpack.c.l.b16 %v4053
    %v4792 = vunpack.c.h.b16 %v4053
    %v4793 = vunpack.c.l.b16 %v4054
    %v4794 = vunpack.c.h.b16 %v4054
    %v4795 = vunpack.c.l.b16 %v4055
    %v4796 = vunpack.c.h.b16 %v4055
    %v4797 = vunpack.c.l.b16 %v4056
    %v4798 = vunpack.c.h.b16 %v4056
    %v4799 = vunpack.c.l.b16 %v4057
    %v4800 = vunpack.c.h.b16 %v4057
    %v4801 = vunpack.c.l.b16 %v4058
    %v4802 = vunpack.c.h.b16 %v4058
    %v4803 = vunpack.c.l.b16 %v4059
    %v4804 = vunpack.c.h.b16 %v4059
    %v4805 = vunpack.c.l.b16 %v4060
    %v4806 = vunpack.c.h.b16 %v4060
    %v4807 = vunpack.c.l.b16 %v4061
    %v4808 = vunpack.c.h.b16 %v4061
    %v4809 = vunpack.c.l.b16 %v4062
    %v4810 = vunpack.c.h.b16 %v4062
    %v4811 = vunpack.c.l.b16 %v4063
    %v4812 = vunpack.c.h.b16 %v4063
    %v4813 = vunpack.c.l.b16 %v4064
    %v4814 = vunpack.c.h.b16 %v4064
    %v4815 = vunpack.c.l.b16 %v4065
    %v4816 = vunpack.c.h.b16 %v4065
    %v4817 = vunpack.c.l.b16 %v4066
    %v4818 = vunpack.c.h.b16 %v4066
    %v4819 = vunpack.c.l.b16 %v4067
    %v4820 = vunpack.c.h.b16 %v4067
    %v4821 = vunpack.c.l.b16 %v4068
    %v4822 = vunpack.c.h.b16 %v4068
    %v4823 = vunpack.c.l.b16 %v4069
    %v4824 = vunpack.c.h.b16 %v4069
    %v4825 = vunpack.c.l.b16 %v4070
    %v4826 = vunpack.c.h.b16 %v4070
    %v4827 = vunpack.c.l.b16 %v4071
    %v4828 = vunpack.c.h.b16 %v4071
    %v4829 = vunpack.c.l.b16 %v4072
    %v4830 = vunpack.c.h.b16 %v4072
    %v4831 = vunpack.c.l.b16 %v4073
    %v4832 = vunpack.c.h.b16 %v4073
    %v4833 = vunpack.c.l.b16 %v4074
    %v4834 = vunpack.c.h.b16 %v4074
    %v4835 = vunpack.c.l.b16 %v4075
    %v4836 = vunpack.c.h.b16 %v4075
    %v4837 = vunpack.c.l.b16 %v4076
    %v4838 = vunpack.c.h.b16 %v4076
    %v4839 = vunpack.c.l.b16 %v4077
    %v4840 = vunpack.c.h.b16 %v4077
    %v4841 = vunpack.c.l.b16 %v4078
    %v4842 = vunpack.c.h.b16 %v4078
    %v4843 = vunpack.c.l.b16 %v4079
    %v4844 = vunpack.c.h.b16 %v4079
    %v4845 = vunpack.c.l.b16 %v4080
    %v4846 = vunpack.c.h.b16 %v4080
    %v4847 = vunpack.c.l.b16 %v4081
    %v4848 = vunpack.c.h.b16 %v4081
    %v4849 = vunpack.c.l.b16 %v4082
    %v4850 = vunpack.c.h.b16 %v4082
    %v4851 = vunpack.c.l.b16 %v4083
    %v4852 = vunpack.c.h.b16 %v4083
    %v4853 = vunpack.c.l.b16 %v4084
    %v4854 = vunpack.c.h.b16 %v4084
    %v4855 = vunpack.c.l.b16 %v4085
    %v4856 = vunpack.c.h.b16 %v4085
    %v4857 = vunpack.c.l.b16 %v4086
    %v4858 = vunpack.c.h.b16 %v4086
    %v4859 = vunpack.c.l.b16 %v4087
    %v4860 = vunpack.c.h.b16 %v4087
    %v4861 = vunpack.c.l.b16 %v4088
    %v4862 = vunpack.c.h.b16 %v4088
    %v4863 = vunpack.c.l.b16 %v4089
    %v4864 = vunpack.c.h.b16 %v4089
    %v4865 = vunpack.c.l.b16 %v4090
    %v4866 = vunpack.c.h.b16 %v4090
    %v4867 = vunpack.c.l.b16 %v4091
    %v4868 = vunpack.c.h.b16 %v4091
    %v4869 = vunpack.c.l.b16 %v4092
    %v4870 = vunpack.c.h.b16 %v4092
    %v4871 = vunpack.c.l.b16 %v4093
    %v4872 = vunpack.c.h.b16 %v4093
    %v4873 = vunpack.c.l.b16 %v4094
    %v4874 = vunpack.c.h.b16 %v4094
    %v4875 = vunpack.c.l.b16 %v4095
    %v4876 = vunpack.c.h.b16 %v4095
    %v4877 = vunpack.c.l.b16 %v4096
    %v4878 = vunpack.c.h.b16 %v4096
    %v4879 = vunpack.c.l.b16 %v4097
    %v4880 = vunpack.c.h.b16 %v4097
    %v4881 = vunpack.c.l.b16 %v4098
    %v4882 = vunpack.c.h.b16 %v4098
    %v4883 = vunpack.c.l.b16 %v4099
    %v4884 = vunpack.c.h.b16 %v4099
    %v4885 = vunpack.c.l.b16 %v4100
    %v4886 = vunpack.c.h.b16 %v4100
    %v4887 = vpack.c.b16 %v4383, %v4375
    %v4888 = vpack.c.b16 %v4384, %v4376
    %v4889 = vpack.c.b16 %v4385, %v4377
    %v4890 = vpack.c.b16 %v4386, %v4378
    %v4891 = vpack.c.b16 %v4387, %v4379
    %v4892 = vpack.c.b16 %v4388, %v4380
    %v4893 = vpack.c.b16 %v4389, %v4381
    %v4894 = vpack.c.b16 %v4390, %v4382
    %v4895 = vpack.c.b16 %v4399, %v4391
    %v4896 = vpack.c.b16 %v4400, %v4392
    %v4897 = vpack.c.b16 %v4401, %v4393
    %v4898 = vpack.c.b16 %v4402, %v4394
    %v4899 = vpack.c.b16 %v4403, %v4395
    %v4900 = vpack.c.b16 %v4404, %v4396
    %v4901 = vpack.c.b16 %v4405, %v4397
    %v4902 = vpack.c.b16 %v4406, %v4398
    %v4903 = vpack.c.b16 %v4415, %v4407
    %v4904 = vpack.c.b16 %v4416, %v4408
    %v4905 = vpack.c.b16 %v4417, %v4409
    %v4906 = vpack.c.b16 %v4418, %v4410
    %v4907 = vpack.c.b16 %v4419, %v4411
    %v4908 = vpack.c.b16 %v4420, %v4412
    %v4909 = vpack.c.b16 %v4421, %v4413
    %v4910 = vpack.c.b16 %v4422, %v4414
    %v4911 = vpack.c.b16 %v4431, %v4423
    %v4912 = vpack.c.b16 %v4432, %v4424
    %v4913 = vpack.c.b16 %v4433, %v4425
    %v4914 = vpack.c.b16 %v4434, %v4426
    %v4915 = vpack.c.b16 %v4435, %v4427
    %v4916 = vpack.c.b16 %v4436, %v4428
    %v4917 = vpack.c.b16 %v4437, %v4429
    %v4918 = vpack.c.b16 %v4438, %v4430
    %v4919 = vpack.c.b16 %v4447, %v4439
    %v4920 = vpack.c.b16 %v4448, %v4440
    %v4921 = vpack.c.b16 %v4449, %v4441
    %v4922 = vpack.c.b16 %v4450, %v4442
    %v4923 = vpack.c.b16 %v4451, %v4443
    %v4924 = vpack.c.b16 %v4452, %v4444
    %v4925 = vpack.c.b16 %v4453, %v4445
    %v4926 = vpack.c.b16 %v4454, %v4446
    %v4927 = vpack.c.b16 %v4463, %v4455
    %v4928 = vpack.c.b16 %v4464, %v4456
    %v4929 = vpack.c.b16 %v4465, %v4457
    %v4930 = vpack.c.b16 %v4466, %v4458
    %v4931 = vpack.c.b16 %v4467, %v4459
    %v4932 = vpack.c.b16 %v4468, %v4460
    %v4933 = vpack.c.b16 %v4469, %v4461
    %v4934 = vpack.c.b16 %v4470, %v4462
    %v4935 = vpack.c.b16 %v4479, %v4471
    %v4936 = vpack.c.b16 %v4480, %v4472
    %v4937 = vpack.c.b16 %v4481, %v4473
    %v4938 = vpack.c.b16 %v4482, %v4474
    %v4939 = vpack.c.b16 %v4483, %v4475
    %v4940 = vpack.c.b16 %v4484, %v4476
    %v4941 = vpack.c.b16 %v4485, %v4477
    %v4942 = vpack.c.b16 %v4486, %v4478
    %v4943 = vpack.c.b16 %v4495, %v4487
    %v4944 = vpack.c.b16 %v4496, %v4488
    %v4945 = vpack.c.b16 %v4497, %v4489
    %v4946 = vpack.c.b16 %v4498, %v4490
    %v4947 = vpack.c.b16 %v4499, %v4491
    %v4948 = vpack.c.b16 %v4500, %v4492
    %v4949 = vpack.c.b16 %v4501, %v4493
    %v4950 = vpack.c.b16 %v4502, %v4494
    %v4951 = vpack.c.b16 %v4511, %v4503
    %v4952 = vpack.c.b16 %v4512, %v4504
    %v4953 = vpack.c.b16 %v4513, %v4505
    %v4954 = vpack.c.b16 %v4514, %v4506
    %v4955 = vpack.c.b16 %v4515, %v4507
    %v4956 = vpack.c.b16 %v4516, %v4508
    %v4957 = vpack.c.b16 %v4517, %v4509
    %v4958 = vpack.c.b16 %v4518, %v4510
    %v4959 = vpack.c.b16 %v4527, %v4519
    %v4960 = vpack.c.b16 %v4528, %v4520
    %v4961 = vpack.c.b16 %v4529, %v4521
    %v4962 = vpack.c.b16 %v4530, %v4522
    %v4963 = vpack.c.b16 %v4531, %v4523
    %v4964 = vpack.c.b16 %v4532, %v4524
    %v4965 = vpack.c.b16 %v4533, %v4525
    %v4966 = vpack.c.b16 %v4534, %v4526
    %v4967 = vpack.c.b16 %v4543, %v4535
    %v4968 = vpack.c.b16 %v4544, %v4536
    %v4969 = vpack.c.b16 %v4545, %v4537
    %v4970 = vpack.c.b16 %v4546, %v4538
    %v4971 = vpack.c.b16 %v4547, %v4539
    %v4972 = vpack.c.b16 %v4548, %v4540
    %v4973 = vpack.c.b16 %v4549, %v4541
    %v4974 = vpack.c.b16 %v4550, %v4542
    %v4975 = vpack.c.b16 %v4559, %v4551
    %v4976 = vpack.c.b16 %v4560, %v4552
    %v4977 = vpack.c.b16 %v4561, %v4553
    %v4978 = vpack.c.b16 %v4562, %v4554
    %v4979 = vpack.c.b16 %v4563, %v4555
    %v4980 = vpack.c.b16 %v4564, %v4556
    %v4981 = vpack.c.b16 %v4565, %v4557
    %v4982 = vpack.c.b16 %v4566, %v4558
    %v4983 = vpack.c.b16 %v4575, %v4567
    %v4984 = vpack.c.b16 %v4576, %v4568
    %v4985 = vpack.c.b16 %v4577, %v4569
    %v4986 = vpack.c.b16 %v4578, %v4570
    %v4987 = vpack.c.b16 %v4579, %v4571
    %v4988 = vpack.c.b16 %v4580, %v4572
    %v4989 = vpack.c.b16 %v4581, %v4573
    %v4990 = vpack.c.b16 %v4582, %v4574
    %v4991 = vpack.c.b16 %v4591, %v4583
    %v4992 = vpack.c.b16 %v4592, %v4584
    %v4993 = vpack.c.b16 %v4593, %v4585
    %v4994 = vpack.c.b16 %v4594, %v4586
    %v4995 = vpack.c.b16 %v4595, %v4587
    %v4996 = vpack.c.b16 %v4596, %v4588
    %v4997 = vpack.c.b16 %v4597, %v4589
    %v4998 = vpack.c.b16 %v4598, %v4590
    %v4999 = vpack.c.b16 %v4607, %v4599
    %v5000 = vpack.c.b16 %v4608, %v4600
    %v5001 = vpack.c.b16 %v4609, %v4601
    %v5002 = vpack.c.b16 %v4610, %v4602
    %v5003 = vpack.c.b16 %v4611, %v4603
    %v5004 = vpack.c.b16 %v4612, %v4604
    %v5005 = vpack.c.b16 %v4613, %v4605
    %v5006 = vpack.c.b16 %v4614, %v4606
    %v5007 = vpack.c.b16 %v4623, %v4615
    %v5008 = vpack.c.b16 %v4624, %v4616
    %v5009 = vpack.c.b16 %v4625, %v4617
    %v5010 = vpack.c.b16 %v4626, %v4618
    %v5011 = vpack.c.b16 %v4627, %v4619
    %v5012 = vpack.c.b16 %v4628, %v4620
    %v5013 = vpack.c.b16 %v4629, %v4621
    %v5014 = vpack.c.b16 %v4630, %v4622
    %v5015 = vpack.c.b16 %v4639, %v4631
    %v5016 = vpack.c.b16 %v4640, %v4632
    %v5017 = vpack.c.b16 %v4641, %v4633
    %v5018 = vpack.c.b16 %v4642, %v4634
    %v5019 = vpack.c.b16 %v4643, %v4635
    %v5020 = vpack.c.b16 %v4644, %v4636
    %v5021 = vpack.c.b16 %v4645, %v4637
    %v5022 = vpack.c.b16 %v4646, %v4638
    %v5023 = vpack.c.b16 %v4655, %v4647
    %v5024 = vpack.c.b16 %v4656, %v4648
    %v5025 = vpack.c.b16 %v4657, %v4649
    %v5026 = vpack.c.b16 %v4658, %v4650
    %v5027 = vpack.c.b16 %v4659, %v4651
    %v5028 = vpack.c.b16 %v4660, %v4652
    %v5029 = vpack.c.b16 %v4661, %v4653
    %v5030 = vpack.c.b16 %v4662, %v4654
    %v5031 = vpack.c.b16 %v4671, %v4663
    %v5032 = vpack.c.b16 %v4672, %v4664
    %v5033 = vpack.c.b16 %v4673, %v4665
    %v5034 = vpack.c.b16 %v4674, %v4666
    %v5035 = vpack.c.b16 %v4675, %v4667
    %v5036 = vpack.c.b16 %v4676, %v4668
    %v5037 = vpack.c.b16 %v4677, %v4669
    %v5038 = vpack.c.b16 %v4678, %v4670
    %v5039 = vpack.c.b16 %v4687, %v4679
    %v5040 = vpack.c.b16 %v4688, %v4680
    %v5041 = vpack.c.b16 %v4689, %v4681
    %v5042 = vpack.c.b16 %v4690, %v4682
    %v5043 = vpack.c.b16 %v4691, %v4683
    %v5044 = vpack.c.b16 %v4692, %v4684
    %v5045 = vpack.c.b16 %v4693, %v4685
    %v5046 = vpack.c.b16 %v4694, %v4686
    %v5047 = vpack.c.b16 %v4703, %v4695
    %v5048 = vpack.c.b16 %v4704, %v4696
    %v5049 = vpack.c.b16 %v4705, %v4697
    %v5050 = vpack.c.b16 %v4706, %v4698
    %v5051 = vpack.c.b16 %v4707, %v4699
    %v5052 = vpack.c.b16 %v4708, %v4700
    %v5053 = vpack.c.b16 %v4709, %v4701
    %v5054 = vpack.c.b16 %v4710, %v4702
    %v5055 = vpack.c.b16 %v4719, %v4711
    %v5056 = vpack.c.b16 %v4720, %v4712
    %v5057 = vpack.c.b16 %v4721, %v4713
    %v5058 = vpack.c.b16 %v4722, %v4714
    %v5059 = vpack.c.b16 %v4723, %v4715
    %v5060 = vpack.c.b16 %v4724, %v4716
    %v5061 = vpack.c.b16 %v4725, %v4717
    %v5062 = vpack.c.b16 %v4726, %v4718
    %v5063 = vpack.c.b16 %v4735, %v4727
    %v5064 = vpack.c.b16 %v4736, %v4728
    %v5065 = vpack.c.b16 %v4737, %v4729
    %v5066 = vpack.c.b16 %v4738, %v4730
    %v5067 = vpack.c.b16 %v4739, %v4731
    %v5068 = vpack.c.b16 %v4740, %v4732
    %v5069 = vpack.c.b16 %v4741, %v4733
    %v5070 = vpack.c.b16 %v4742, %v4734
    %v5071 = vpack.c.b16 %v4751, %v4743
    %v5072 = vpack.c.b16 %v4752, %v4744
    %v5073 = vpack.c.b16 %v4753, %v4745
    %v5074 = vpack.c.b16 %v4754, %v4746
    %v5075 = vpack.c.b16 %v4755, %v4747
    %v5076 = vpack.c.b16 %v4756, %v4748
    %v5077 = vpack.c.b16 %v4757, %v4749
    %v5078 = vpack.c.b16 %v4758, %v4750
    %v5079 = vpack.c.b16 %v4767, %v4759
    %v5080 = vpack.c.b16 %v4768, %v4760
    %v5081 = vpack.c.b16 %v4769, %v4761
    %v5082 = vpack.c.b16 %v4770, %v4762
    %v5083 = vpack.c.b16 %v4771, %v4763
    %v5084 = vpack.c.b16 %v4772, %v4764
    %v5085 = vpack.c.b16 %v4773, %v4765
    %v5086 = vpack.c.b16 %v4774, %v4766
    %v5087 = vpack.c.b16 %v4783, %v4775
    %v5088 = vpack.c.b16 %v4784, %v4776
    %v5089 = vpack.c.b16 %v4785, %v4777
    %v5090 = vpack.c.b16 %v4786, %v4778
    %v5091 = vpack.c.b16 %v4787, %v4779
    %v5092 = vpack.c.b16 %v4788, %v4780
    %v5093 = vpack.c.b16 %v4789, %v4781
    %v5094 = vpack.c.b16 %v4790, %v4782
    %v5095 = vpack.c.b16 %v4799, %v4791
    %v5096 = vpack.c.b16 %v4800, %v4792
    %v5097 = vpack.c.b16 %v4801, %v4793
    %v5098 = vpack.c.b16 %v4802, %v4794
    %v5099 = vpack.c.b16 %v4803, %v4795
    %v5100 = vpack.c.b16 %v4804, %v4796
    %v5101 = vpack.c.b16 %v4805, %v4797
    %v5102 = vpack.c.b16 %v4806, %v4798
    %v5103 = vpack.c.b16 %v4815, %v4807
    %v5104 = vpack.c.b16 %v4816, %v4808
    %v5105 = vpack.c.b16 %v4817, %v4809
    %v5106 = vpack.c.b16 %v4818, %v4810
    %v5107 = vpack.c.b16 %v4819, %v4811
    %v5108 = vpack.c.b16 %v4820, %v4812
    %v5109 = vpack.c.b16 %v4821, %v4813
    %v5110 = vpack.c.b16 %v4822, %v4814
    %v5111 = vpack.c.b16 %v4831, %v4823
    %v5112 = vpack.c.b16 %v4832, %v4824
    %v5113 = vpack.c.b16 %v4833, %v4825
    %v5114 = vpack.c.b16 %v4834, %v4826
    %v5115 = vpack.c.b16 %v4835, %v4827
    %v5116 = vpack.c.b16 %v4836, %v4828
    %v5117 = vpack.c.b16 %v4837, %v4829
    %v5118 = vpack.c.b16 %v4838, %v4830
    %v5119 = vpack.c.b16 %v4847, %v4839
    %v5120 = vpack.c.b16 %v4848, %v4840
    %v5121 = vpack.c.b16 %v4849, %v4841
    %v5122 = vpack.c.b16 %v4850, %v4842
    %v5123 = vpack.c.b16 %v4851, %v4843
    %v5124 = vpack.c.b16 %v4852, %v4844
    %v5125 = vpack.c.b16 %v4853, %v4845
    %v5126 = vpack.c.b16 %v4854, %v4846
    %v5127 = vpack.c.b16 %v4863, %v4855
    %v5128 = vpack.c.b16 %v4864, %v4856
    %v5129 = vpack.c.b16 %v4865, %v4857
    %v5130 = vpack.c.b16 %v4866, %v4858
    %v5131 = vpack.c.b16 %v4867, %v4859
    %v5132 = vpack.c.b16 %v4868, %v4860
    %v5133 = vpack.c.b16 %v4869, %v4861
    %v5134 = vpack.c.b16 %v4870, %v4862
    %v5135 = vpack.c.b16 %v4879, %v4871
    %v5136 = vpack.c.b16 %v4880, %v4872
    %v5137 = vpack.c.b16 %v4881, %v4873
    %v5138 = vpack.c.b16 %v4882, %v4874
    %v5139 = vpack.c.b16 %v4883, %v4875
    %v5140 = vpack.c.b16 %v4884, %v4876
    %v5141 = vpack.c.b16 %v4885, %v4877
    %v5142 = vpack.c.b16 %v4886, %v4878
    %5399 = vmatpush.bf16.msra.mxu0 %v4943
    %5400 = vmatpush.bf16.msra.mxu0 %v4935
    %5401 = vmatpush.bf16.msra.mxu0 %v4927
    %5402 = vmatpush.bf16.msra.mxu0 %v4919
    %5403 = vmatpush.bf16.msra.mxu0 %v4911
    %5404 = vmatpush.bf16.msra.mxu0 %v4903
    %5405 = vmatpush.bf16.msra.mxu0 %v4895
    %5406 = vmatpush.bf16.msra.mxu0 %v4887
    %5407 = vmatmul.bf16.gmra.mxu0 %v3841
    %v5408 = vpop.f32.mrf.mxu0
    %v5409 = vadd.f32 %v4103, %v5408
    %v5410 = vpop.f32.mrf.mxu0
    %v5411 = vadd.f32 %v4103, %v5410
    %5412 = vdwg.mxu0
    %5413 = vmatpush.bf16.msra.mxu0 %v5007
    %5414 = vmatpush.bf16.msra.mxu0 %v4999
    %5415 = vmatpush.bf16.msra.mxu0 %v4991
    %5416 = vmatpush.bf16.msra.mxu0 %v4983
    %5417 = vmatpush.bf16.msra.mxu0 %v4975
    %5418 = vmatpush.bf16.msra.mxu0 %v4967
    %5419 = vmatpush.bf16.msra.mxu0 %v4959
    %5420 = vmatpush.bf16.msra.mxu0 %v4951
    %5421 = vmatmul.bf16.gmra.mxu0 %v3842
    %v5422 = vpop.f32.mrf.mxu0
    %v5423 = vadd.f32 %v5409, %v5422
    %v5424 = vpop.f32.mrf.mxu0
    %v5425 = vadd.f32 %v5411, %v5424
    %5426 = vdwg.mxu0
    %5427 = vmatpush.bf16.msra.mxu0 %v5071
    %5428 = vmatpush.bf16.msra.mxu0 %v5063
    %5429 = vmatpush.bf16.msra.mxu0 %v5055
    %5430 = vmatpush.bf16.msra.mxu0 %v5047
    %5431 = vmatpush.bf16.msra.mxu0 %v5039
    %5432 = vmatpush.bf16.msra.mxu0 %v5031
    %5433 = vmatpush.bf16.msra.mxu0 %v5023
    %5434 = vmatpush.bf16.msra.mxu0 %v5015
    %5435 = vmatmul.bf16.gmra.mxu0 %v3843
    %v5436 = vpop.f32.mrf.mxu0
    %v5437 = vadd.f32 %v5423, %v5436
    %v5438 = vpop.f32.mrf.mxu0
    %v5439 = vadd.f32 %v5425, %v5438
    %5440 = vdwg.mxu0
    %5441 = vmatpush.bf16.msra.mxu0 %v5135
    %5442 = vmatpush.bf16.msra.mxu0 %v5127
    %5443 = vmatpush.bf16.msra.mxu0 %v5119
    %5444 = vmatpush.bf16.msra.mxu0 %v5111
    %5445 = vmatpush.bf16.msra.mxu0 %v5103
    %5446 = vmatpush.bf16.msra.mxu0 %v5095
    %5447 = vmatpush.bf16.msra.mxu0 %v5087
    %5448 = vmatpush.bf16.msra.mxu0 %v5079
    %5449 = vmatmul.bf16.gmra.mxu0 %v3844
    %v5450 = vpop.f32.mrf.mxu0
    %v5451 = vadd.f32 %v5437, %v5450
    %v5452 = vpop.f32.mrf.mxu0
    %v5453 = vadd.f32 %v5439, %v5452
    %5454 = vdwg.mxu0
    %5455 = vmatpush.bf16.msra.mxu0 %v4944
    %5456 = vmatpush.bf16.msra.mxu0 %v4936
    %5457 = vmatpush.bf16.msra.mxu0 %v4928
    %5458 = vmatpush.bf16.msra.mxu0 %v4920
    %5459 = vmatpush.bf16.msra.mxu0 %v4912
    %5460 = vmatpush.bf16.msra.mxu0 %v4904
    %5461 = vmatpush.bf16.msra.mxu0 %v4896
    %5462 = vmatpush.bf16.msra.mxu0 %v4888
    %5463 = vmatmul.bf16.gmra.mxu0 %v3841
    %v5464 = vpop.f32.mrf.mxu0
    %v5465 = vadd.f32 %v4104, %v5464
    %v5466 = vpop.f32.mrf.mxu0
    %v5467 = vadd.f32 %v4104, %v5466
    %5468 = vdwg.mxu0
    %5469 = vmatpush.bf16.msra.mxu0 %v5008
    %5470 = vmatpush.bf16.msra.mxu0 %v5000
    %5471 = vmatpush.bf16.msra.mxu0 %v4992
    %5472 = vmatpush.bf16.msra.mxu0 %v4984
    %5473 = vmatpush.bf16.msra.mxu0 %v4976
    %5474 = vmatpush.bf16.msra.mxu0 %v4968
    %5475 = vmatpush.bf16.msra.mxu0 %v4960
    %5476 = vmatpush.bf16.msra.mxu0 %v4952
    %5477 = vmatmul.bf16.gmra.mxu0 %v3842
    %v5478 = vpop.f32.mrf.mxu0
    %v5479 = vadd.f32 %v5465, %v5478
    %v5480 = vpop.f32.mrf.mxu0
    %v5481 = vadd.f32 %v5467, %v5480
    %5482 = vdwg.mxu0
    %5483 = vmatpush.bf16.msra.mxu0 %v5072
    %5484 = vmatpush.bf16.msra.mxu0 %v5064
    %5485 = vmatpush.bf16.msra.mxu0 %v5056
    %5486 = vmatpush.bf16.msra.mxu0 %v5048
    %5487 = vmatpush.bf16.msra.mxu0 %v5040
    %5488 = vmatpush.bf16.msra.mxu0 %v5032
    %5489 = vmatpush.bf16.msra.mxu0 %v5024
    %5490 = vmatpush.bf16.msra.mxu0 %v5016
    %5491 = vmatmul.bf16.gmra.mxu0 %v3843
    %v5492 = vpop.f32.mrf.mxu0
    %v5493 = vadd.f32 %v5479, %v5492
    %v5494 = vpop.f32.mrf.mxu0
    %v5495 = vadd.f32 %v5481, %v5494
    %5496 = vdwg.mxu0
    %5497 = vmatpush.bf16.msra.mxu0 %v5136
    %5498 = vmatpush.bf16.msra.mxu0 %v5128
    %5499 = vmatpush.bf16.msra.mxu0 %v5120
    %5500 = vmatpush.bf16.msra.mxu0 %v5112
    %5501 = vmatpush.bf16.msra.mxu0 %v5104
    %5502 = vmatpush.bf16.msra.mxu0 %v5096
    %5503 = vmatpush.bf16.msra.mxu0 %v5088
    %5504 = vmatpush.bf16.msra.mxu0 %v5080
    %5505 = vmatmul.bf16.gmra.mxu0 %v3844
    %v5506 = vpop.f32.mrf.mxu0
    %v5507 = vadd.f32 %v5493, %v5506
    %v5508 = vpop.f32.mrf.mxu0
    %v5509 = vadd.f32 %v5495, %v5508
    %5510 = vdwg.mxu0
    %5511 = vmatpush.bf16.msra.mxu0 %v4945
    %5512 = vmatpush.bf16.msra.mxu0 %v4937
    %5513 = vmatpush.bf16.msra.mxu0 %v4929
    %5514 = vmatpush.bf16.msra.mxu0 %v4921
    %5515 = vmatpush.bf16.msra.mxu0 %v4913
    %5516 = vmatpush.bf16.msra.mxu0 %v4905
    %5517 = vmatpush.bf16.msra.mxu0 %v4897
    %5518 = vmatpush.bf16.msra.mxu0 %v4889
    %5519 = vmatmul.bf16.gmra.mxu0 %v3841
    %v5520 = vpop.f32.mrf.mxu0
    %v5521 = vadd.f32 %v4105, %v5520
    %v5522 = vpop.f32.mrf.mxu0
    %v5523 = vadd.f32 %v4105, %v5522
    %5524 = vdwg.mxu0
    %5525 = vmatpush.bf16.msra.mxu0 %v5009
    %5526 = vmatpush.bf16.msra.mxu0 %v5001
    %5527 = vmatpush.bf16.msra.mxu0 %v4993
    %5528 = vmatpush.bf16.msra.mxu0 %v4985
    %5529 = vmatpush.bf16.msra.mxu0 %v4977
    %5530 = vmatpush.bf16.msra.mxu0 %v4969
    %5531 = vmatpush.bf16.msra.mxu0 %v4961
    %5532 = vmatpush.bf16.msra.mxu0 %v4953
    %5533 = vmatmul.bf16.gmra.mxu0 %v3842
    %v5534 = vpop.f32.mrf.mxu0
    %v5535 = vadd.f32 %v5521, %v5534
    %v5536 = vpop.f32.mrf.mxu0
    %v5537 = vadd.f32 %v5523, %v5536
    %5538 = vdwg.mxu0
    %5539 = vmatpush.bf16.msra.mxu0 %v5073
    %5540 = vmatpush.bf16.msra.mxu0 %v5065
    %5541 = vmatpush.bf16.msra.mxu0 %v5057
    %5542 = vmatpush.bf16.msra.mxu0 %v5049
    %5543 = vmatpush.bf16.msra.mxu0 %v5041
    %5544 = vmatpush.bf16.msra.mxu0 %v5033
    %5545 = vmatpush.bf16.msra.mxu0 %v5025
    %5546 = vmatpush.bf16.msra.mxu0 %v5017
    %5547 = vmatmul.bf16.gmra.mxu0 %v3843
    %v5548 = vpop.f32.mrf.mxu0
    %v5549 = vadd.f32 %v5535, %v5548
    %v5550 = vpop.f32.mrf.mxu0
    %v5551 = vadd.f32 %v5537, %v5550
    %5552 = vdwg.mxu0
    %5553 = vmatpush.bf16.msra.mxu0 %v5137
    %5554 = vmatpush.bf16.msra.mxu0 %v5129
    %5555 = vmatpush.bf16.msra.mxu0 %v5121
    %5556 = vmatpush.bf16.msra.mxu0 %v5113
    %5557 = vmatpush.bf16.msra.mxu0 %v5105
    %5558 = vmatpush.bf16.msra.mxu0 %v5097
    %5559 = vmatpush.bf16.msra.mxu0 %v5089
    %5560 = vmatpush.bf16.msra.mxu0 %v5081
    %5561 = vmatmul.bf16.gmra.mxu0 %v3844
    %v5562 = vpop.f32.mrf.mxu0
    %v5563 = vadd.f32 %v5549, %v5562
    %v5564 = vpop.f32.mrf.mxu0
    %v5565 = vadd.f32 %v5551, %v5564
    %5566 = vdwg.mxu0
    %5567 = vmatpush.bf16.msra.mxu0 %v4946
    %5568 = vmatpush.bf16.msra.mxu0 %v4938
    %5569 = vmatpush.bf16.msra.mxu0 %v4930
    %5570 = vmatpush.bf16.msra.mxu0 %v4922
    %5571 = vmatpush.bf16.msra.mxu0 %v4914
    %5572 = vmatpush.bf16.msra.mxu0 %v4906
    %5573 = vmatpush.bf16.msra.mxu0 %v4898
    %5574 = vmatpush.bf16.msra.mxu0 %v4890
    %5575 = vmatmul.bf16.gmra.mxu0 %v3841
    %v5576 = vpop.f32.mrf.mxu0
    %v5577 = vadd.f32 %v4106, %v5576
    %v5578 = vpop.f32.mrf.mxu0
    %v5579 = vadd.f32 %v4106, %v5578
    %5580 = vdwg.mxu0
    %5581 = vmatpush.bf16.msra.mxu0 %v5010
    %5582 = vmatpush.bf16.msra.mxu0 %v5002
    %5583 = vmatpush.bf16.msra.mxu0 %v4994
    %5584 = vmatpush.bf16.msra.mxu0 %v4986
    %5585 = vmatpush.bf16.msra.mxu0 %v4978
    %5586 = vmatpush.bf16.msra.mxu0 %v4970
    %5587 = vmatpush.bf16.msra.mxu0 %v4962
    %5588 = vmatpush.bf16.msra.mxu0 %v4954
    %5589 = vmatmul.bf16.gmra.mxu0 %v3842
    %v5590 = vpop.f32.mrf.mxu0
    %v5591 = vadd.f32 %v5577, %v5590
    %v5592 = vpop.f32.mrf.mxu0
    %v5593 = vadd.f32 %v5579, %v5592
    %5594 = vdwg.mxu0
    %5595 = vmatpush.bf16.msra.mxu0 %v5074
    %5596 = vmatpush.bf16.msra.mxu0 %v5066
    %5597 = vmatpush.bf16.msra.mxu0 %v5058
    %5598 = vmatpush.bf16.msra.mxu0 %v5050
    %5599 = vmatpush.bf16.msra.mxu0 %v5042
    %5600 = vmatpush.bf16.msra.mxu0 %v5034
    %5601 = vmatpush.bf16.msra.mxu0 %v5026
    %5602 = vmatpush.bf16.msra.mxu0 %v5018
    %5603 = vmatmul.bf16.gmra.mxu0 %v3843
    %v5604 = vpop.f32.mrf.mxu0
    %v5605 = vadd.f32 %v5591, %v5604
    %v5606 = vpop.f32.mrf.mxu0
    %v5607 = vadd.f32 %v5593, %v5606
    %5608 = vdwg.mxu0
    %5609 = vmatpush.bf16.msra.mxu0 %v5138
    %5610 = vmatpush.bf16.msra.mxu0 %v5130
    %5611 = vmatpush.bf16.msra.mxu0 %v5122
    %5612 = vmatpush.bf16.msra.mxu0 %v5114
    %5613 = vmatpush.bf16.msra.mxu0 %v5106
    %5614 = vmatpush.bf16.msra.mxu0 %v5098
    %5615 = vmatpush.bf16.msra.mxu0 %v5090
    %5616 = vmatpush.bf16.msra.mxu0 %v5082
    %5617 = vmatmul.bf16.gmra.mxu0 %v3844
    %v5618 = vpop.f32.mrf.mxu0
    %v5619 = vadd.f32 %v5605, %v5618
    %v5620 = vpop.f32.mrf.mxu0
    %v5621 = vadd.f32 %v5607, %v5620
    %5622 = vdwg.mxu0
    %5623 = vmatpush.bf16.msra.mxu0 %v4947
    %5624 = vmatpush.bf16.msra.mxu0 %v4939
    %5625 = vmatpush.bf16.msra.mxu0 %v4931
    %5626 = vmatpush.bf16.msra.mxu0 %v4923
    %5627 = vmatpush.bf16.msra.mxu0 %v4915
    %5628 = vmatpush.bf16.msra.mxu0 %v4907
    %5629 = vmatpush.bf16.msra.mxu0 %v4899
    %5630 = vmatpush.bf16.msra.mxu0 %v4891
    %5631 = vmatmul.bf16.gmra.mxu0 %v3841
    %v5632 = vpop.f32.mrf.mxu0
    %v5633 = vadd.f32 %v4107, %v5632
    %v5634 = vpop.f32.mrf.mxu0
    %v5635 = vadd.f32 %v4107, %v5634
    %5636 = vdwg.mxu0
    %5637 = vmatpush.bf16.msra.mxu0 %v5011
    %5638 = vmatpush.bf16.msra.mxu0 %v5003
    %5639 = vmatpush.bf16.msra.mxu0 %v4995
    %5640 = vmatpush.bf16.msra.mxu0 %v4987
    %5641 = vmatpush.bf16.msra.mxu0 %v4979
    %5642 = vmatpush.bf16.msra.mxu0 %v4971
    %5643 = vmatpush.bf16.msra.mxu0 %v4963
    %5644 = vmatpush.bf16.msra.mxu0 %v4955
    %5645 = vmatmul.bf16.gmra.mxu0 %v3842
    %v5646 = vpop.f32.mrf.mxu0
    %v5647 = vadd.f32 %v5633, %v5646
    %v5648 = vpop.f32.mrf.mxu0
    %v5649 = vadd.f32 %v5635, %v5648
    %5650 = vdwg.mxu0
    %5651 = vmatpush.bf16.msra.mxu0 %v5075
    %5652 = vmatpush.bf16.msra.mxu0 %v5067
    %5653 = vmatpush.bf16.msra.mxu0 %v5059
    %5654 = vmatpush.bf16.msra.mxu0 %v5051
    %5655 = vmatpush.bf16.msra.mxu0 %v5043
    %5656 = vmatpush.bf16.msra.mxu0 %v5035
    %5657 = vmatpush.bf16.msra.mxu0 %v5027
    %5658 = vmatpush.bf16.msra.mxu0 %v5019
    %5659 = vmatmul.bf16.gmra.mxu0 %v3843
    %v5660 = vpop.f32.mrf.mxu0
    %v5661 = vadd.f32 %v5647, %v5660
    %v5662 = vpop.f32.mrf.mxu0
    %v5663 = vadd.f32 %v5649, %v5662
    %5664 = vdwg.mxu0
    %5665 = vmatpush.bf16.msra.mxu0 %v5139
    %5666 = vmatpush.bf16.msra.mxu0 %v5131
    %5667 = vmatpush.bf16.msra.mxu0 %v5123
    %5668 = vmatpush.bf16.msra.mxu0 %v5115
    %5669 = vmatpush.bf16.msra.mxu0 %v5107
    %5670 = vmatpush.bf16.msra.mxu0 %v5099
    %5671 = vmatpush.bf16.msra.mxu0 %v5091
    %5672 = vmatpush.bf16.msra.mxu0 %v5083
    %5673 = vmatmul.bf16.gmra.mxu0 %v3844
    %v5674 = vpop.f32.mrf.mxu0
    %v5675 = vadd.f32 %v5661, %v5674
    %v5676 = vpop.f32.mrf.mxu0
    %v5677 = vadd.f32 %v5663, %v5676
    %5678 = vdwg.mxu0
    %5679 = vmatpush.bf16.msra.mxu0 %v4948
    %5680 = vmatpush.bf16.msra.mxu0 %v4940
    %5681 = vmatpush.bf16.msra.mxu0 %v4932
    %5682 = vmatpush.bf16.msra.mxu0 %v4924
    %5683 = vmatpush.bf16.msra.mxu0 %v4916
    %5684 = vmatpush.bf16.msra.mxu0 %v4908
    %5685 = vmatpush.bf16.msra.mxu0 %v4900
    %5686 = vmatpush.bf16.msra.mxu0 %v4892
    %5687 = vmatmul.bf16.gmra.mxu0 %v3841
    %v5688 = vpop.f32.mrf.mxu0
    %v5689 = vadd.f32 %v4108, %v5688
    %v5690 = vpop.f32.mrf.mxu0
    %v5691 = vadd.f32 %v4108, %v5690
    %5692 = vdwg.mxu0
    %5693 = vmatpush.bf16.msra.mxu0 %v5012
    %5694 = vmatpush.bf16.msra.mxu0 %v5004
    %5695 = vmatpush.bf16.msra.mxu0 %v4996
    %5696 = vmatpush.bf16.msra.mxu0 %v4988
    %5697 = vmatpush.bf16.msra.mxu0 %v4980
    %5698 = vmatpush.bf16.msra.mxu0 %v4972
    %5699 = vmatpush.bf16.msra.mxu0 %v4964
    %5700 = vmatpush.bf16.msra.mxu0 %v4956
    %5701 = vmatmul.bf16.gmra.mxu0 %v3842
    %v5702 = vpop.f32.mrf.mxu0
    %v5703 = vadd.f32 %v5689, %v5702
    %v5704 = vpop.f32.mrf.mxu0
    %v5705 = vadd.f32 %v5691, %v5704
    %5706 = vdwg.mxu0
    %5707 = vmatpush.bf16.msra.mxu0 %v5076
    %5708 = vmatpush.bf16.msra.mxu0 %v5068
    %5709 = vmatpush.bf16.msra.mxu0 %v5060
    %5710 = vmatpush.bf16.msra.mxu0 %v5052
    %5711 = vmatpush.bf16.msra.mxu0 %v5044
    %5712 = vmatpush.bf16.msra.mxu0 %v5036
    %5713 = vmatpush.bf16.msra.mxu0 %v5028
    %5714 = vmatpush.bf16.msra.mxu0 %v5020
    %5715 = vmatmul.bf16.gmra.mxu0 %v3843
    %v5716 = vpop.f32.mrf.mxu0
    %v5717 = vadd.f32 %v5703, %v5716
    %v5718 = vpop.f32.mrf.mxu0
    %v5719 = vadd.f32 %v5705, %v5718
    %5720 = vdwg.mxu0
    %5721 = vmatpush.bf16.msra.mxu0 %v5140
    %5722 = vmatpush.bf16.msra.mxu0 %v5132
    %5723 = vmatpush.bf16.msra.mxu0 %v5124
    %5724 = vmatpush.bf16.msra.mxu0 %v5116
    %5725 = vmatpush.bf16.msra.mxu0 %v5108
    %5726 = vmatpush.bf16.msra.mxu0 %v5100
    %5727 = vmatpush.bf16.msra.mxu0 %v5092
    %5728 = vmatpush.bf16.msra.mxu0 %v5084
    %5729 = vmatmul.bf16.gmra.mxu0 %v3844
    %v5730 = vpop.f32.mrf.mxu0
    %v5731 = vadd.f32 %v5717, %v5730
    %v5732 = vpop.f32.mrf.mxu0
    %v5733 = vadd.f32 %v5719, %v5732
    %5734 = vdwg.mxu0
    %5735 = vmatpush.bf16.msra.mxu0 %v4949
    %5736 = vmatpush.bf16.msra.mxu0 %v4941
    %5737 = vmatpush.bf16.msra.mxu0 %v4933
    %5738 = vmatpush.bf16.msra.mxu0 %v4925
    %5739 = vmatpush.bf16.msra.mxu0 %v4917
    %5740 = vmatpush.bf16.msra.mxu0 %v4909
    %5741 = vmatpush.bf16.msra.mxu0 %v4901
    %5742 = vmatpush.bf16.msra.mxu0 %v4893
    %5743 = vmatmul.bf16.gmra.mxu0 %v3841
    %v5744 = vpop.f32.mrf.mxu0
    %v5745 = vadd.f32 %v4109, %v5744
    %v5746 = vpop.f32.mrf.mxu0
    %v5747 = vadd.f32 %v4109, %v5746
    %5748 = vdwg.mxu0
    %5749 = vmatpush.bf16.msra.mxu0 %v5013
    %5750 = vmatpush.bf16.msra.mxu0 %v5005
    %5751 = vmatpush.bf16.msra.mxu0 %v4997
    %5752 = vmatpush.bf16.msra.mxu0 %v4989
    %5753 = vmatpush.bf16.msra.mxu0 %v4981
    %5754 = vmatpush.bf16.msra.mxu0 %v4973
    %5755 = vmatpush.bf16.msra.mxu0 %v4965
    %5756 = vmatpush.bf16.msra.mxu0 %v4957
    %5757 = vmatmul.bf16.gmra.mxu0 %v3842
    %v5758 = vpop.f32.mrf.mxu0
    %v5759 = vadd.f32 %v5745, %v5758
    %v5760 = vpop.f32.mrf.mxu0
    %v5761 = vadd.f32 %v5747, %v5760
    %5762 = vdwg.mxu0
    %5763 = vmatpush.bf16.msra.mxu0 %v5077
    %5764 = vmatpush.bf16.msra.mxu0 %v5069
    %5765 = vmatpush.bf16.msra.mxu0 %v5061
    %5766 = vmatpush.bf16.msra.mxu0 %v5053
    %5767 = vmatpush.bf16.msra.mxu0 %v5045
    %5768 = vmatpush.bf16.msra.mxu0 %v5037
    %5769 = vmatpush.bf16.msra.mxu0 %v5029
    %5770 = vmatpush.bf16.msra.mxu0 %v5021
    %5771 = vmatmul.bf16.gmra.mxu0 %v3843
    %v5772 = vpop.f32.mrf.mxu0
    %v5773 = vadd.f32 %v5759, %v5772
    %v5774 = vpop.f32.mrf.mxu0
    %v5775 = vadd.f32 %v5761, %v5774
    %5776 = vdwg.mxu0
    %5777 = vmatpush.bf16.msra.mxu0 %v5141
    %5778 = vmatpush.bf16.msra.mxu0 %v5133
    %5779 = vmatpush.bf16.msra.mxu0 %v5125
    %5780 = vmatpush.bf16.msra.mxu0 %v5117
    %5781 = vmatpush.bf16.msra.mxu0 %v5109
    %5782 = vmatpush.bf16.msra.mxu0 %v5101
    %5783 = vmatpush.bf16.msra.mxu0 %v5093
    %5784 = vmatpush.bf16.msra.mxu0 %v5085
    %5785 = vmatmul.bf16.gmra.mxu0 %v3844
    %v5786 = vpop.f32.mrf.mxu0
    %v5787 = vadd.f32 %v5773, %v5786
    %v5788 = vpop.f32.mrf.mxu0
    %v5789 = vadd.f32 %v5775, %v5788
    %5790 = vdwg.mxu0
    %5791 = vmatpush.bf16.msra.mxu0 %v4950
    %5792 = vmatpush.bf16.msra.mxu0 %v4942
    %5793 = vmatpush.bf16.msra.mxu0 %v4934
    %5794 = vmatpush.bf16.msra.mxu0 %v4926
    %5795 = vmatpush.bf16.msra.mxu0 %v4918
    %5796 = vmatpush.bf16.msra.mxu0 %v4910
    %5797 = vmatpush.bf16.msra.mxu0 %v4902
    %5798 = vmatpush.bf16.msra.mxu0 %v4894
    %5799 = vmatmul.bf16.gmra.mxu0 %v3841
    %v5800 = vpop.f32.mrf.mxu0
    %v5801 = vadd.f32 %v4110, %v5800
    %v5802 = vpop.f32.mrf.mxu0
    %v5803 = vadd.f32 %v4110, %v5802
    %5804 = vdwg.mxu0
    %5805 = vmatpush.bf16.msra.mxu0 %v5014
    %5806 = vmatpush.bf16.msra.mxu0 %v5006
    %5807 = vmatpush.bf16.msra.mxu0 %v4998
    %5808 = vmatpush.bf16.msra.mxu0 %v4990
    %5809 = vmatpush.bf16.msra.mxu0 %v4982
    %5810 = vmatpush.bf16.msra.mxu0 %v4974
    %5811 = vmatpush.bf16.msra.mxu0 %v4966
    %5812 = vmatpush.bf16.msra.mxu0 %v4958
    %5813 = vmatmul.bf16.gmra.mxu0 %v3842
    %v5814 = vpop.f32.mrf.mxu0
    %v5815 = vadd.f32 %v5801, %v5814
    %v5816 = vpop.f32.mrf.mxu0
    %v5817 = vadd.f32 %v5803, %v5816
    %5818 = vdwg.mxu0
    %5819 = vmatpush.bf16.msra.mxu0 %v5078
    %5820 = vmatpush.bf16.msra.mxu0 %v5070
    %5821 = vmatpush.bf16.msra.mxu0 %v5062
    %5822 = vmatpush.bf16.msra.mxu0 %v5054
    %5823 = vmatpush.bf16.msra.mxu0 %v5046
    %5824 = vmatpush.bf16.msra.mxu0 %v5038
    %5825 = vmatpush.bf16.msra.mxu0 %v5030
    %5826 = vmatpush.bf16.msra.mxu0 %v5022
    %5827 = vmatmul.bf16.gmra.mxu0 %v3843
    %v5828 = vpop.f32.mrf.mxu0
    %v5829 = vadd.f32 %v5815, %v5828
    %v5830 = vpop.f32.mrf.mxu0
    %v5831 = vadd.f32 %v5817, %v5830
    %5832 = vdwg.mxu0
    %5833 = vmatpush.bf16.msra.mxu0 %v5142
    %5834 = vmatpush.bf16.msra.mxu0 %v5134
    %5835 = vmatpush.bf16.msra.mxu0 %v5126
    %5836 = vmatpush.bf16.msra.mxu0 %v5118
    %5837 = vmatpush.bf16.msra.mxu0 %v5110
    %5838 = vmatpush.bf16.msra.mxu0 %v5102
    %5839 = vmatpush.bf16.msra.mxu0 %v5094
    %5840 = vmatpush.bf16.msra.mxu0 %v5086
    %5841 = vmatmul.bf16.gmra.mxu0 %v3844
    %v5842 = vpop.f32.mrf.mxu0
    %v5843 = vadd.f32 %v5829, %v5842
    %v5844 = vpop.f32.mrf.mxu0
    %v5845 = vadd.f32 %v5831, %v5844
    %5846 = vdwg.mxu0
    %vm5847 = vcmp.gt.f32.partialorder %v5451, 0.0
    %vm5848 = vcmp.gt.f32.partialorder %v5507, 0.0
    %vm5849 = vcmp.gt.f32.partialorder %v5563, 0.0
    %vm5850 = vcmp.gt.f32.partialorder %v5619, 0.0
    %vm5851 = vcmp.gt.f32.partialorder %v5675, 0.0
    %vm5852 = vcmp.gt.f32.partialorder %v5731, 0.0
    %vm5853 = vcmp.gt.f32.partialorder %v5787, 0.0
    %vm5854 = vcmp.gt.f32.partialorder %v5843, 0.0
    %vm5855 = vcmp.gt.f32.partialorder %v5453, 0.0
    %vm5856 = vcmp.gt.f32.partialorder %v5509, 0.0
    %vm5857 = vcmp.gt.f32.partialorder %v5565, 0.0
    %vm5858 = vcmp.gt.f32.partialorder %v5621, 0.0
    %vm5859 = vcmp.gt.f32.partialorder %v5677, 0.0
    %vm5860 = vcmp.gt.f32.partialorder %v5733, 0.0
    %vm5861 = vcmp.gt.f32.partialorder %v5789, 0.0
    %vm5862 = vcmp.gt.f32.partialorder %v5845, 0.0
    %v5863 = vmul.f32 %v5451, 0.01
    %v5864 = vmul.f32 %v5507, 0.01
    %v5865 = vmul.f32 %v5563, 0.01
    %v5866 = vmul.f32 %v5619, 0.01
    %v5867 = vmul.f32 %v5675, 0.01
    %v5868 = vmul.f32 %v5731, 0.01
    %v5869 = vmul.f32 %v5787, 0.01
    %v5870 = vmul.f32 %v5843, 0.01
    %v5871 = vmul.f32 %v5453, 0.01
    %v5872 = vmul.f32 %v5509, 0.01
    %v5873 = vmul.f32 %v5565, 0.01
    %v5874 = vmul.f32 %v5621, 0.01
    %v5875 = vmul.f32 %v5677, 0.01
    %v5876 = vmul.f32 %v5733, 0.01
    %v5877 = vmul.f32 %v5789, 0.01
    %v5878 = vmul.f32 %v5845, 0.01
    %v5879 = vsel %vm5847, %v5451, %v5863
    %v5880 = vsel %vm5848, %v5507, %v5864
    %v5881 = vsel %vm5849, %v5563, %v5865
    %v5882 = vsel %vm5850, %v5619, %v5866
    %v5883 = vsel %vm5851, %v5675, %v5867
    %v5884 = vsel %vm5852, %v5731, %v5868
    %v5885 = vsel %vm5853, %v5787, %v5869
    %v5886 = vsel %vm5854, %v5843, %v5870
    %v5887 = vsel %vm5855, %v5453, %v5871
    %v5888 = vsel %vm5856, %v5509, %v5872
    %v5889 = vsel %vm5857, %v5565, %v5873
    %v5890 = vsel %vm5858, %v5621, %v5874
    %v5891 = vsel %vm5859, %v5677, %v5875
    %v5892 = vsel %vm5860, %v5733, %v5876
    %v5893 = vsel %vm5861, %v5789, %v5877
    %v5894 = vsel %vm5862, %v5845, %v5878
    %v5895 = vpack.c.bf16 %v5887, %v5879
    %v5896 = vpack.c.bf16 %v5888, %v5880
    %v5897 = vpack.c.bf16 %v5889, %v5881
    %v5898 = vpack.c.bf16 %v5890, %v5882
    %v5899 = vpack.c.bf16 %v5891, %v5883
    %v5900 = vpack.c.bf16 %v5892, %v5884
    %v5901 = vpack.c.bf16 %v5893, %v5885
    %v5902 = vpack.c.bf16 %v5894, %v5886
    %v5903 = vld [vmem:[#allocation10] sm:$0xff]
    %v5904 = vld [vmem:[#allocation10 + $0x8] sm:$0xff]
    %v5905 = vld [vmem:[#allocation10 + $0x10] sm:$0xff]
    %v5906 = vld [vmem:[#allocation10 + $0x18] sm:$0xff]
    %v5907 = vld [vmem:[#allocation10 + $0x20] sm:$0xff]
    %v5908 = vld [vmem:[#allocation10 + $0x28] sm:$0xff]
    %v5909 = vld [vmem:[#allocation10 + $0x30] sm:$0xff]
    %v5910 = vld [vmem:[#allocation10 + $0x38] sm:$0xff]
    %v5911 = vld [vmem:[#allocation10 + $0x40] sm:$0xff]
    %v5912 = vld [vmem:[#allocation10 + $0x48] sm:$0xff]
    %v5913 = vld [vmem:[#allocation10 + $0x50] sm:$0xff]
    %v5914 = vld [vmem:[#allocation10 + $0x58] sm:$0xff]
    %v5915 = vld [vmem:[#allocation10 + $0x60] sm:$0xff]
    %v5916 = vld [vmem:[#allocation10 + $0x68] sm:$0xff]
    %v5917 = vld [vmem:[#allocation10 + $0x70] sm:$0xff]
    %v5918 = vld [vmem:[#allocation10 + $0x78] sm:$0xff]
    %v5919 = vld [vmem:[#allocation10 + $0x80] sm:$0xff]
    %v5920 = vld [vmem:[#allocation10 + $0x88] sm:$0xff]
    %v5921 = vld [vmem:[#allocation10 + $0x90] sm:$0xff]
    %v5922 = vld [vmem:[#allocation10 + $0x98] sm:$0xff]
    %v5923 = vld [vmem:[#allocation10 + $0xa0] sm:$0xff]
    %v5924 = vld [vmem:[#allocation10 + $0xa8] sm:$0xff]
    %v5925 = vld [vmem:[#allocation10 + $0xb0] sm:$0xff]
    %v5926 = vld [vmem:[#allocation10 + $0xb8] sm:$0xff]
    %v5927 = vld [vmem:[#allocation10 + $0xc0] sm:$0xff]
    %v5928 = vld [vmem:[#allocation10 + $0xc8] sm:$0xff]
    %v5929 = vld [vmem:[#allocation10 + $0xd0] sm:$0xff]
    %v5930 = vld [vmem:[#allocation10 + $0xd8] sm:$0xff]
    %v5931 = vld [vmem:[#allocation10 + $0xe0] sm:$0xff]
    %v5932 = vld [vmem:[#allocation10 + $0xe8] sm:$0xff]
    %v5933 = vld [vmem:[#allocation10 + $0xf0] sm:$0xff]
    %v5934 = vld [vmem:[#allocation10 + $0xf8] sm:$0xff]
    %v5935 = vld [vmem:[#allocation10 + $0x100] sm:$0xff]
    %v5936 = vld [vmem:[#allocation10 + $0x108] sm:$0xff]
    %v5937 = vld [vmem:[#allocation10 + $0x110] sm:$0xff]
    %v5938 = vld [vmem:[#allocation10 + $0x118] sm:$0xff]
    %v5939 = vld [vmem:[#allocation10 + $0x120] sm:$0xff]
    %v5940 = vld [vmem:[#allocation10 + $0x128] sm:$0xff]
    %v5941 = vld [vmem:[#allocation10 + $0x130] sm:$0xff]
    %v5942 = vld [vmem:[#allocation10 + $0x138] sm:$0xff]
    %v5943 = vld [vmem:[#allocation10 + $0x140] sm:$0xff]
    %v5944 = vld [vmem:[#allocation10 + $0x148] sm:$0xff]
    %v5945 = vld [vmem:[#allocation10 + $0x150] sm:$0xff]
    %v5946 = vld [vmem:[#allocation10 + $0x158] sm:$0xff]
    %v5947 = vld [vmem:[#allocation10 + $0x160] sm:$0xff]
    %v5948 = vld [vmem:[#allocation10 + $0x168] sm:$0xff]
    %v5949 = vld [vmem:[#allocation10 + $0x170] sm:$0xff]
    %v5950 = vld [vmem:[#allocation10 + $0x178] sm:$0xff]
    %v5951 = vld [vmem:[#allocation10 + $0x180] sm:$0xff]
    %v5952 = vld [vmem:[#allocation10 + $0x188] sm:$0xff]
    %v5953 = vld [vmem:[#allocation10 + $0x190] sm:$0xff]
    %v5954 = vld [vmem:[#allocation10 + $0x198] sm:$0xff]
    %v5955 = vld [vmem:[#allocation10 + $0x1a0] sm:$0xff]
    %v5956 = vld [vmem:[#allocation10 + $0x1a8] sm:$0xff]
    %v5957 = vld [vmem:[#allocation10 + $0x1b0] sm:$0xff]
    %v5958 = vld [vmem:[#allocation10 + $0x1b8] sm:$0xff]
    %v5959 = vld [vmem:[#allocation10 + $0x1c0] sm:$0xff]
    %v5960 = vld [vmem:[#allocation10 + $0x1c8] sm:$0xff]
    %v5961 = vld [vmem:[#allocation10 + $0x1d0] sm:$0xff]
    %v5962 = vld [vmem:[#allocation10 + $0x1d8] sm:$0xff]
    %v5963 = vld [vmem:[#allocation10 + $0x1e0] sm:$0xff]
    %v5964 = vld [vmem:[#allocation10 + $0x1e8] sm:$0xff]
    %v5965 = vld [vmem:[#allocation10 + $0x1f0] sm:$0xff]
    %v5966 = vld [vmem:[#allocation10 + $0x1f8] sm:$0xff]
    %v5967 = vld [vmem:[#allocation10 + $0x200] sm:$0xff]
    %v5968 = vld [vmem:[#allocation10 + $0x208] sm:$0xff]
    %v5969 = vld [vmem:[#allocation10 + $0x210] sm:$0xff]
    %v5970 = vld [vmem:[#allocation10 + $0x218] sm:$0xff]
    %v5971 = vld [vmem:[#allocation10 + $0x220] sm:$0xff]
    %v5972 = vld [vmem:[#allocation10 + $0x228] sm:$0xff]
    %v5973 = vld [vmem:[#allocation10 + $0x230] sm:$0xff]
    %v5974 = vld [vmem:[#allocation10 + $0x238] sm:$0xff]
    %v5975 = vld [vmem:[#allocation10 + $0x240] sm:$0xff]
    %v5976 = vld [vmem:[#allocation10 + $0x248] sm:$0xff]
    %v5977 = vld [vmem:[#allocation10 + $0x250] sm:$0xff]
    %v5978 = vld [vmem:[#allocation10 + $0x258] sm:$0xff]
    %v5979 = vld [vmem:[#allocation10 + $0x260] sm:$0xff]
    %v5980 = vld [vmem:[#allocation10 + $0x268] sm:$0xff]
    %v5981 = vld [vmem:[#allocation10 + $0x270] sm:$0xff]
    %v5982 = vld [vmem:[#allocation10 + $0x278] sm:$0xff]
    %v5983 = vld [vmem:[#allocation10 + $0x280] sm:$0xff]
    %v5984 = vld [vmem:[#allocation10 + $0x288] sm:$0xff]
    %v5985 = vld [vmem:[#allocation10 + $0x290] sm:$0xff]
    %v5986 = vld [vmem:[#allocation10 + $0x298] sm:$0xff]
    %v5987 = vld [vmem:[#allocation10 + $0x2a0] sm:$0xff]
    %v5988 = vld [vmem:[#allocation10 + $0x2a8] sm:$0xff]
    %v5989 = vld [vmem:[#allocation10 + $0x2b0] sm:$0xff]
    %v5990 = vld [vmem:[#allocation10 + $0x2b8] sm:$0xff]
    %v5991 = vld [vmem:[#allocation10 + $0x2c0] sm:$0xff]
    %v5992 = vld [vmem:[#allocation10 + $0x2c8] sm:$0xff]
    %v5993 = vld [vmem:[#allocation10 + $0x2d0] sm:$0xff]
    %v5994 = vld [vmem:[#allocation10 + $0x2d8] sm:$0xff]
    %v5995 = vld [vmem:[#allocation10 + $0x2e0] sm:$0xff]
    %v5996 = vld [vmem:[#allocation10 + $0x2e8] sm:$0xff]
    %v5997 = vld [vmem:[#allocation10 + $0x2f0] sm:$0xff]
    %v5998 = vld [vmem:[#allocation10 + $0x2f8] sm:$0xff]
    %v5999 = vld [vmem:[#allocation10 + $0x300] sm:$0xff]
    %v6000 = vld [vmem:[#allocation10 + $0x308] sm:$0xff]
    %v6001 = vld [vmem:[#allocation10 + $0x310] sm:$0xff]
    %v6002 = vld [vmem:[#allocation10 + $0x318] sm:$0xff]
    %v6003 = vld [vmem:[#allocation10 + $0x320] sm:$0xff]
    %v6004 = vld [vmem:[#allocation10 + $0x328] sm:$0xff]
    %v6005 = vld [vmem:[#allocation10 + $0x330] sm:$0xff]
    %v6006 = vld [vmem:[#allocation10 + $0x338] sm:$0xff]
    %v6007 = vld [vmem:[#allocation10 + $0x340] sm:$0xff]
    %v6008 = vld [vmem:[#allocation10 + $0x348] sm:$0xff]
    %v6009 = vld [vmem:[#allocation10 + $0x350] sm:$0xff]
    %v6010 = vld [vmem:[#allocation10 + $0x358] sm:$0xff]
    %v6011 = vld [vmem:[#allocation10 + $0x360] sm:$0xff]
    %v6012 = vld [vmem:[#allocation10 + $0x368] sm:$0xff]
    %v6013 = vld [vmem:[#allocation10 + $0x370] sm:$0xff]
    %v6014 = vld [vmem:[#allocation10 + $0x378] sm:$0xff]
    %v6015 = vld [vmem:[#allocation10 + $0x380] sm:$0xff]
    %v6016 = vld [vmem:[#allocation10 + $0x388] sm:$0xff]
    %v6017 = vld [vmem:[#allocation10 + $0x390] sm:$0xff]
    %v6018 = vld [vmem:[#allocation10 + $0x398] sm:$0xff]
    %v6019 = vld [vmem:[#allocation10 + $0x3a0] sm:$0xff]
    %v6020 = vld [vmem:[#allocation10 + $0x3a8] sm:$0xff]
    %v6021 = vld [vmem:[#allocation10 + $0x3b0] sm:$0xff]
    %v6022 = vld [vmem:[#allocation10 + $0x3b8] sm:$0xff]
    %v6023 = vld [vmem:[#allocation10 + $0x3c0] sm:$0xff]
    %v6024 = vld [vmem:[#allocation10 + $0x3c8] sm:$0xff]
    %v6025 = vld [vmem:[#allocation10 + $0x3d0] sm:$0xff]
    %v6026 = vld [vmem:[#allocation10 + $0x3d8] sm:$0xff]
    %v6027 = vld [vmem:[#allocation10 + $0x3e0] sm:$0xff]
    %v6028 = vld [vmem:[#allocation10 + $0x3e8] sm:$0xff]
    %v6029 = vld [vmem:[#allocation10 + $0x3f0] sm:$0xff]
    %v6030 = vld [vmem:[#allocation10 + $0x3f8] sm:$0xff]
    %v6031 = vld [vmem:[%s12] sm:$0x3]
    %v6033 = vperm.slane %v6031, 0
    %v6034 = vperm.slane %v6031, 1
    %v6165 = vunpack.c.l.b16 %v5903
    %v6166 = vunpack.c.h.b16 %v5903
    %v6167 = vunpack.c.l.b16 %v5904
    %v6168 = vunpack.c.h.b16 %v5904
    %v6169 = vunpack.c.l.b16 %v5905
    %v6170 = vunpack.c.h.b16 %v5905
    %v6171 = vunpack.c.l.b16 %v5906
    %v6172 = vunpack.c.h.b16 %v5906
    %v6173 = vunpack.c.l.b16 %v5907
    %v6174 = vunpack.c.h.b16 %v5907
    %v6175 = vunpack.c.l.b16 %v5908
    %v6176 = vunpack.c.h.b16 %v5908
    %v6177 = vunpack.c.l.b16 %v5909
    %v6178 = vunpack.c.h.b16 %v5909
    %v6179 = vunpack.c.l.b16 %v5910
    %v6180 = vunpack.c.h.b16 %v5910
    %v6181 = vunpack.c.l.b16 %v5911
    %v6182 = vunpack.c.h.b16 %v5911
    %v6183 = vunpack.c.l.b16 %v5912
    %v6184 = vunpack.c.h.b16 %v5912
    %v6185 = vunpack.c.l.b16 %v5913
    %v6186 = vunpack.c.h.b16 %v5913
    %v6187 = vunpack.c.l.b16 %v5914
    %v6188 = vunpack.c.h.b16 %v5914
    %v6189 = vunpack.c.l.b16 %v5915
    %v6190 = vunpack.c.h.b16 %v5915
    %v6191 = vunpack.c.l.b16 %v5916
    %v6192 = vunpack.c.h.b16 %v5916
    %v6193 = vunpack.c.l.b16 %v5917
    %v6194 = vunpack.c.h.b16 %v5917
    %v6195 = vunpack.c.l.b16 %v5918
    %v6196 = vunpack.c.h.b16 %v5918
    %v6197 = vunpack.c.l.b16 %v5919
    %v6198 = vunpack.c.h.b16 %v5919
    %v6199 = vunpack.c.l.b16 %v5920
    %v6200 = vunpack.c.h.b16 %v5920
    %v6201 = vunpack.c.l.b16 %v5921
    %v6202 = vunpack.c.h.b16 %v5921
    %v6203 = vunpack.c.l.b16 %v5922
    %v6204 = vunpack.c.h.b16 %v5922
    %v6205 = vunpack.c.l.b16 %v5923
    %v6206 = vunpack.c.h.b16 %v5923
    %v6207 = vunpack.c.l.b16 %v5924
    %v6208 = vunpack.c.h.b16 %v5924
    %v6209 = vunpack.c.l.b16 %v5925
    %v6210 = vunpack.c.h.b16 %v5925
    %v6211 = vunpack.c.l.b16 %v5926
    %v6212 = vunpack.c.h.b16 %v5926
    %v6213 = vunpack.c.l.b16 %v5927
    %v6214 = vunpack.c.h.b16 %v5927
    %v6215 = vunpack.c.l.b16 %v5928
    %v6216 = vunpack.c.h.b16 %v5928
    %v6217 = vunpack.c.l.b16 %v5929
    %v6218 = vunpack.c.h.b16 %v5929
    %v6219 = vunpack.c.l.b16 %v5930
    %v6220 = vunpack.c.h.b16 %v5930
    %v6221 = vunpack.c.l.b16 %v5931
    %v6222 = vunpack.c.h.b16 %v5931
    %v6223 = vunpack.c.l.b16 %v5932
    %v6224 = vunpack.c.h.b16 %v5932
    %v6225 = vunpack.c.l.b16 %v5933
    %v6226 = vunpack.c.h.b16 %v5933
    %v6227 = vunpack.c.l.b16 %v5934
    %v6228 = vunpack.c.h.b16 %v5934
    %v6229 = vunpack.c.l.b16 %v5935
    %v6230 = vunpack.c.h.b16 %v5935
    %v6231 = vunpack.c.l.b16 %v5936
    %v6232 = vunpack.c.h.b16 %v5936
    %v6233 = vunpack.c.l.b16 %v5937
    %v6234 = vunpack.c.h.b16 %v5937
    %v6235 = vunpack.c.l.b16 %v5938
    %v6236 = vunpack.c.h.b16 %v5938
    %v6237 = vunpack.c.l.b16 %v5939
    %v6238 = vunpack.c.h.b16 %v5939
    %v6239 = vunpack.c.l.b16 %v5940
    %v6240 = vunpack.c.h.b16 %v5940
    %v6241 = vunpack.c.l.b16 %v5941
    %v6242 = vunpack.c.h.b16 %v5941
    %v6243 = vunpack.c.l.b16 %v5942
    %v6244 = vunpack.c.h.b16 %v5942
    %v6245 = vunpack.c.l.b16 %v5943
    %v6246 = vunpack.c.h.b16 %v5943
    %v6247 = vunpack.c.l.b16 %v5944
    %v6248 = vunpack.c.h.b16 %v5944
    %v6249 = vunpack.c.l.b16 %v5945
    %v6250 = vunpack.c.h.b16 %v5945
    %v6251 = vunpack.c.l.b16 %v5946
    %v6252 = vunpack.c.h.b16 %v5946
    %v6253 = vunpack.c.l.b16 %v5947
    %v6254 = vunpack.c.h.b16 %v5947
    %v6255 = vunpack.c.l.b16 %v5948
    %v6256 = vunpack.c.h.b16 %v5948
    %v6257 = vunpack.c.l.b16 %v5949
    %v6258 = vunpack.c.h.b16 %v5949
    %v6259 = vunpack.c.l.b16 %v5950
    %v6260 = vunpack.c.h.b16 %v5950
    %v6261 = vunpack.c.l.b16 %v5951
    %v6262 = vunpack.c.h.b16 %v5951
    %v6263 = vunpack.c.l.b16 %v5952
    %v6264 = vunpack.c.h.b16 %v5952
    %v6265 = vunpack.c.l.b16 %v5953
    %v6266 = vunpack.c.h.b16 %v5953
    %v6267 = vunpack.c.l.b16 %v5954
    %v6268 = vunpack.c.h.b16 %v5954
    %v6269 = vunpack.c.l.b16 %v5955
    %v6270 = vunpack.c.h.b16 %v5955
    %v6271 = vunpack.c.l.b16 %v5956
    %v6272 = vunpack.c.h.b16 %v5956
    %v6273 = vunpack.c.l.b16 %v5957
    %v6274 = vunpack.c.h.b16 %v5957
    %v6275 = vunpack.c.l.b16 %v5958
    %v6276 = vunpack.c.h.b16 %v5958
    %v6277 = vunpack.c.l.b16 %v5959
    %v6278 = vunpack.c.h.b16 %v5959
    %v6279 = vunpack.c.l.b16 %v5960
    %v6280 = vunpack.c.h.b16 %v5960
    %v6281 = vunpack.c.l.b16 %v5961
    %v6282 = vunpack.c.h.b16 %v5961
    %v6283 = vunpack.c.l.b16 %v5962
    %v6284 = vunpack.c.h.b16 %v5962
    %v6285 = vunpack.c.l.b16 %v5963
    %v6286 = vunpack.c.h.b16 %v5963
    %v6287 = vunpack.c.l.b16 %v5964
    %v6288 = vunpack.c.h.b16 %v5964
    %v6289 = vunpack.c.l.b16 %v5965
    %v6290 = vunpack.c.h.b16 %v5965
    %v6291 = vunpack.c.l.b16 %v5966
    %v6292 = vunpack.c.h.b16 %v5966
    %v6293 = vunpack.c.l.b16 %v5967
    %v6294 = vunpack.c.h.b16 %v5967
    %v6295 = vunpack.c.l.b16 %v5968
    %v6296 = vunpack.c.h.b16 %v5968
    %v6297 = vunpack.c.l.b16 %v5969
    %v6298 = vunpack.c.h.b16 %v5969
    %v6299 = vunpack.c.l.b16 %v5970
    %v6300 = vunpack.c.h.b16 %v5970
    %v6301 = vunpack.c.l.b16 %v5971
    %v6302 = vunpack.c.h.b16 %v5971
    %v6303 = vunpack.c.l.b16 %v5972
    %v6304 = vunpack.c.h.b16 %v5972
    %v6305 = vunpack.c.l.b16 %v5973
    %v6306 = vunpack.c.h.b16 %v5973
    %v6307 = vunpack.c.l.b16 %v5974
    %v6308 = vunpack.c.h.b16 %v5974
    %v6309 = vunpack.c.l.b16 %v5975
    %v6310 = vunpack.c.h.b16 %v5975
    %v6311 = vunpack.c.l.b16 %v5976
    %v6312 = vunpack.c.h.b16 %v5976
    %v6313 = vunpack.c.l.b16 %v5977
    %v6314 = vunpack.c.h.b16 %v5977
    %v6315 = vunpack.c.l.b16 %v5978
    %v6316 = vunpack.c.h.b16 %v5978
    %v6317 = vunpack.c.l.b16 %v5979
    %v6318 = vunpack.c.h.b16 %v5979
    %v6319 = vunpack.c.l.b16 %v5980
    %v6320 = vunpack.c.h.b16 %v5980
    %v6321 = vunpack.c.l.b16 %v5981
    %v6322 = vunpack.c.h.b16 %v5981
    %v6323 = vunpack.c.l.b16 %v5982
    %v6324 = vunpack.c.h.b16 %v5982
    %v6325 = vunpack.c.l.b16 %v5983
    %v6326 = vunpack.c.h.b16 %v5983
    %v6327 = vunpack.c.l.b16 %v5984
    %v6328 = vunpack.c.h.b16 %v5984
    %v6329 = vunpack.c.l.b16 %v5985
    %v6330 = vunpack.c.h.b16 %v5985
    %v6331 = vunpack.c.l.b16 %v5986
    %v6332 = vunpack.c.h.b16 %v5986
    %v6333 = vunpack.c.l.b16 %v5987
    %v6334 = vunpack.c.h.b16 %v5987
    %v6335 = vunpack.c.l.b16 %v5988
    %v6336 = vunpack.c.h.b16 %v5988
    %v6337 = vunpack.c.l.b16 %v5989
    %v6338 = vunpack.c.h.b16 %v5989
    %v6339 = vunpack.c.l.b16 %v5990
    %v6340 = vunpack.c.h.b16 %v5990
    %v6341 = vunpack.c.l.b16 %v5991
    %v6342 = vunpack.c.h.b16 %v5991
    %v6343 = vunpack.c.l.b16 %v5992
    %v6344 = vunpack.c.h.b16 %v5992
    %v6345 = vunpack.c.l.b16 %v5993
    %v6346 = vunpack.c.h.b16 %v5993
    %v6347 = vunpack.c.l.b16 %v5994
    %v6348 = vunpack.c.h.b16 %v5994
    %v6349 = vunpack.c.l.b16 %v5995
    %v6350 = vunpack.c.h.b16 %v5995
    %v6351 = vunpack.c.l.b16 %v5996
    %v6352 = vunpack.c.h.b16 %v5996
    %v6353 = vunpack.c.l.b16 %v5997
    %v6354 = vunpack.c.h.b16 %v5997
    %v6355 = vunpack.c.l.b16 %v5998
    %v6356 = vunpack.c.h.b16 %v5998
    %v6357 = vunpack.c.l.b16 %v5999
    %v6358 = vunpack.c.h.b16 %v5999
    %v6359 = vunpack.c.l.b16 %v6000
    %v6360 = vunpack.c.h.b16 %v6000
    %v6361 = vunpack.c.l.b16 %v6001
    %v6362 = vunpack.c.h.b16 %v6001
    %v6363 = vunpack.c.l.b16 %v6002
    %v6364 = vunpack.c.h.b16 %v6002
    %v6365 = vunpack.c.l.b16 %v6003
    %v6366 = vunpack.c.h.b16 %v6003
    %v6367 = vunpack.c.l.b16 %v6004
    %v6368 = vunpack.c.h.b16 %v6004
    %v6369 = vunpack.c.l.b16 %v6005
    %v6370 = vunpack.c.h.b16 %v6005
    %v6371 = vunpack.c.l.b16 %v6006
    %v6372 = vunpack.c.h.b16 %v6006
    %v6373 = vunpack.c.l.b16 %v6007
    %v6374 = vunpack.c.h.b16 %v6007
    %v6375 = vunpack.c.l.b16 %v6008
    %v6376 = vunpack.c.h.b16 %v6008
    %v6377 = vunpack.c.l.b16 %v6009
    %v6378 = vunpack.c.h.b16 %v6009
    %v6379 = vunpack.c.l.b16 %v6010
    %v6380 = vunpack.c.h.b16 %v6010
    %v6381 = vunpack.c.l.b16 %v6011
    %v6382 = vunpack.c.h.b16 %v6011
    %v6383 = vunpack.c.l.b16 %v6012
    %v6384 = vunpack.c.h.b16 %v6012
    %v6385 = vunpack.c.l.b16 %v6013
    %v6386 = vunpack.c.h.b16 %v6013
    %v6387 = vunpack.c.l.b16 %v6014
    %v6388 = vunpack.c.h.b16 %v6014
    %v6389 = vunpack.c.l.b16 %v6015
    %v6390 = vunpack.c.h.b16 %v6015
    %v6391 = vunpack.c.l.b16 %v6016
    %v6392 = vunpack.c.h.b16 %v6016
    %v6393 = vunpack.c.l.b16 %v6017
    %v6394 = vunpack.c.h.b16 %v6017
    %v6395 = vunpack.c.l.b16 %v6018
    %v6396 = vunpack.c.h.b16 %v6018
    %v6397 = vunpack.c.l.b16 %v6019
    %v6398 = vunpack.c.h.b16 %v6019
    %v6399 = vunpack.c.l.b16 %v6020
    %v6400 = vunpack.c.h.b16 %v6020
    %v6401 = vunpack.c.l.b16 %v6021
    %v6402 = vunpack.c.h.b16 %v6021
    %v6403 = vunpack.c.l.b16 %v6022
    %v6404 = vunpack.c.h.b16 %v6022
    %v6405 = vunpack.c.l.b16 %v6023
    %v6406 = vunpack.c.h.b16 %v6023
    %v6407 = vunpack.c.l.b16 %v6024
    %v6408 = vunpack.c.h.b16 %v6024
    %v6409 = vunpack.c.l.b16 %v6025
    %v6410 = vunpack.c.h.b16 %v6025
    %v6411 = vunpack.c.l.b16 %v6026
    %v6412 = vunpack.c.h.b16 %v6026
    %v6413 = vunpack.c.l.b16 %v6027
    %v6414 = vunpack.c.h.b16 %v6027
    %v6415 = vunpack.c.l.b16 %v6028
    %v6416 = vunpack.c.h.b16 %v6028
    %v6417 = vunpack.c.l.b16 %v6029
    %v6418 = vunpack.c.h.b16 %v6029
    %v6419 = vunpack.c.l.b16 %v6030
    %v6420 = vunpack.c.h.b16 %v6030
    %v6421 = vpack.c.b16 %v6167, %v6165
    %v6422 = vpack.c.b16 %v6168, %v6166
    %v6423 = vpack.c.b16 %v6171, %v6169
    %v6424 = vpack.c.b16 %v6172, %v6170
    %v6425 = vpack.c.b16 %v6175, %v6173
    %v6426 = vpack.c.b16 %v6176, %v6174
    %v6427 = vpack.c.b16 %v6179, %v6177
    %v6428 = vpack.c.b16 %v6180, %v6178
    %v6429 = vpack.c.b16 %v6183, %v6181
    %v6430 = vpack.c.b16 %v6184, %v6182
    %v6431 = vpack.c.b16 %v6187, %v6185
    %v6432 = vpack.c.b16 %v6188, %v6186
    %v6433 = vpack.c.b16 %v6191, %v6189
    %v6434 = vpack.c.b16 %v6192, %v6190
    %v6435 = vpack.c.b16 %v6195, %v6193
    %v6436 = vpack.c.b16 %v6196, %v6194
    %v6437 = vpack.c.b16 %v6199, %v6197
    %v6438 = vpack.c.b16 %v6200, %v6198
    %v6439 = vpack.c.b16 %v6203, %v6201
    %v6440 = vpack.c.b16 %v6204, %v6202
    %v6441 = vpack.c.b16 %v6207, %v6205
    %v6442 = vpack.c.b16 %v6208, %v6206
    %v6443 = vpack.c.b16 %v6211, %v6209
    %v6444 = vpack.c.b16 %v6212, %v6210
    %v6445 = vpack.c.b16 %v6215, %v6213
    %v6446 = vpack.c.b16 %v6216, %v6214
    %v6447 = vpack.c.b16 %v6219, %v6217
    %v6448 = vpack.c.b16 %v6220, %v6218
    %v6449 = vpack.c.b16 %v6223, %v6221
    %v6450 = vpack.c.b16 %v6224, %v6222
    %v6451 = vpack.c.b16 %v6227, %v6225
    %v6452 = vpack.c.b16 %v6228, %v6226
    %v6453 = vpack.c.b16 %v6231, %v6229
    %v6454 = vpack.c.b16 %v6232, %v6230
    %v6455 = vpack.c.b16 %v6235, %v6233
    %v6456 = vpack.c.b16 %v6236, %v6234
    %v6457 = vpack.c.b16 %v6239, %v6237
    %v6458 = vpack.c.b16 %v6240, %v6238
    %v6459 = vpack.c.b16 %v6243, %v6241
    %v6460 = vpack.c.b16 %v6244, %v6242
    %v6461 = vpack.c.b16 %v6247, %v6245
    %v6462 = vpack.c.b16 %v6248, %v6246
    %v6463 = vpack.c.b16 %v6251, %v6249
    %v6464 = vpack.c.b16 %v6252, %v6250
    %v6465 = vpack.c.b16 %v6255, %v6253
    %v6466 = vpack.c.b16 %v6256, %v6254
    %v6467 = vpack.c.b16 %v6259, %v6257
    %v6468 = vpack.c.b16 %v6260, %v6258
    %v6469 = vpack.c.b16 %v6263, %v6261
    %v6470 = vpack.c.b16 %v6264, %v6262
    %v6471 = vpack.c.b16 %v6267, %v6265
    %v6472 = vpack.c.b16 %v6268, %v6266
    %v6473 = vpack.c.b16 %v6271, %v6269
    %v6474 = vpack.c.b16 %v6272, %v6270
    %v6475 = vpack.c.b16 %v6275, %v6273
    %v6476 = vpack.c.b16 %v6276, %v6274
    %v6477 = vpack.c.b16 %v6279, %v6277
    %v6478 = vpack.c.b16 %v6280, %v6278
    %v6479 = vpack.c.b16 %v6283, %v6281
    %v6480 = vpack.c.b16 %v6284, %v6282
    %v6481 = vpack.c.b16 %v6287, %v6285
    %v6482 = vpack.c.b16 %v6288, %v6286
    %v6483 = vpack.c.b16 %v6291, %v6289
    %v6484 = vpack.c.b16 %v6292, %v6290
    %v6485 = vpack.c.b16 %v6295, %v6293
    %v6486 = vpack.c.b16 %v6296, %v6294
    %v6487 = vpack.c.b16 %v6299, %v6297
    %v6488 = vpack.c.b16 %v6300, %v6298
    %v6489 = vpack.c.b16 %v6303, %v6301
    %v6490 = vpack.c.b16 %v6304, %v6302
    %v6491 = vpack.c.b16 %v6307, %v6305
    %v6492 = vpack.c.b16 %v6308, %v6306
    %v6493 = vpack.c.b16 %v6311, %v6309
    %v6494 = vpack.c.b16 %v6312, %v6310
    %v6495 = vpack.c.b16 %v6315, %v6313
    %v6496 = vpack.c.b16 %v6316, %v6314
    %v6497 = vpack.c.b16 %v6319, %v6317
    %v6498 = vpack.c.b16 %v6320, %v6318
    %v6499 = vpack.c.b16 %v6323, %v6321
    %v6500 = vpack.c.b16 %v6324, %v6322
    %v6501 = vpack.c.b16 %v6327, %v6325
    %v6502 = vpack.c.b16 %v6328, %v6326
    %v6503 = vpack.c.b16 %v6331, %v6329
    %v6504 = vpack.c.b16 %v6332, %v6330
    %v6505 = vpack.c.b16 %v6335, %v6333
    %v6506 = vpack.c.b16 %v6336, %v6334
    %v6507 = vpack.c.b16 %v6339, %v6337
    %v6508 = vpack.c.b16 %v6340, %v6338
    %v6509 = vpack.c.b16 %v6343, %v6341
    %v6510 = vpack.c.b16 %v6344, %v6342
    %v6511 = vpack.c.b16 %v6347, %v6345
    %v6512 = vpack.c.b16 %v6348, %v6346
    %v6513 = vpack.c.b16 %v6351, %v6349
    %v6514 = vpack.c.b16 %v6352, %v6350
    %v6515 = vpack.c.b16 %v6355, %v6353
    %v6516 = vpack.c.b16 %v6356, %v6354
    %v6517 = vpack.c.b16 %v6359, %v6357
    %v6518 = vpack.c.b16 %v6360, %v6358
    %v6519 = vpack.c.b16 %v6363, %v6361
    %v6520 = vpack.c.b16 %v6364, %v6362
    %v6521 = vpack.c.b16 %v6367, %v6365
    %v6522 = vpack.c.b16 %v6368, %v6366
    %v6523 = vpack.c.b16 %v6371, %v6369
    %v6524 = vpack.c.b16 %v6372, %v6370
    %v6525 = vpack.c.b16 %v6375, %v6373
    %v6526 = vpack.c.b16 %v6376, %v6374
    %v6527 = vpack.c.b16 %v6379, %v6377
    %v6528 = vpack.c.b16 %v6380, %v6378
    %v6529 = vpack.c.b16 %v6383, %v6381
    %v6530 = vpack.c.b16 %v6384, %v6382
    %v6531 = vpack.c.b16 %v6387, %v6385
    %v6532 = vpack.c.b16 %v6388, %v6386
    %v6533 = vpack.c.b16 %v6391, %v6389
    %v6534 = vpack.c.b16 %v6392, %v6390
    %v6535 = vpack.c.b16 %v6395, %v6393
    %v6536 = vpack.c.b16 %v6396, %v6394
    %v6537 = vpack.c.b16 %v6399, %v6397
    %v6538 = vpack.c.b16 %v6400, %v6398
    %v6539 = vpack.c.b16 %v6403, %v6401
    %v6540 = vpack.c.b16 %v6404, %v6402
    %v6541 = vpack.c.b16 %v6407, %v6405
    %v6542 = vpack.c.b16 %v6408, %v6406
    %v6543 = vpack.c.b16 %v6411, %v6409
    %v6544 = vpack.c.b16 %v6412, %v6410
    %v6545 = vpack.c.b16 %v6415, %v6413
    %v6546 = vpack.c.b16 %v6416, %v6414
    %v6547 = vpack.c.b16 %v6419, %v6417
    %v6548 = vpack.c.b16 %v6420, %v6418
    %6677 = vmatpush.bf16.msra.mxu0 %v6435
    %6678 = vmatpush.bf16.msra.mxu0 %v6433
    %6679 = vmatpush.bf16.msra.mxu0 %v6431
    %6680 = vmatpush.bf16.msra.mxu0 %v6429
    %6681 = vmatpush.bf16.msra.mxu0 %v6427
    %6682 = vmatpush.bf16.msra.mxu0 %v6425
    %6683 = vmatpush.bf16.msra.mxu0 %v6423
    %6684 = vmatpush.bf16.msra.mxu0 %v6421
    %6685 = vmatmul.bf16.gmra.mxu0 %v5895
    %v6686 = vpop.f32.mrf.mxu0
    %v6687 = vadd.f32 %v6033, %v6686
    %v6688 = vpop.f32.mrf.mxu0
    %v6689 = vadd.f32 %v6033, %v6688
    %6690 = vdwg.mxu0
    %6691 = vmatpush.bf16.msra.mxu0 %v6451
    %6692 = vmatpush.bf16.msra.mxu0 %v6449
    %6693 = vmatpush.bf16.msra.mxu0 %v6447
    %6694 = vmatpush.bf16.msra.mxu0 %v6445
    %6695 = vmatpush.bf16.msra.mxu0 %v6443
    %6696 = vmatpush.bf16.msra.mxu0 %v6441
    %6697 = vmatpush.bf16.msra.mxu0 %v6439
    %6698 = vmatpush.bf16.msra.mxu0 %v6437
    %6699 = vmatmul.bf16.gmra.mxu0 %v5896
    %v6700 = vpop.f32.mrf.mxu0
    %v6701 = vadd.f32 %v6687, %v6700
    %v6702 = vpop.f32.mrf.mxu0
    %v6703 = vadd.f32 %v6689, %v6702
    %6704 = vdwg.mxu0
    %6705 = vmatpush.bf16.msra.mxu0 %v6467
    %6706 = vmatpush.bf16.msra.mxu0 %v6465
    %6707 = vmatpush.bf16.msra.mxu0 %v6463
    %6708 = vmatpush.bf16.msra.mxu0 %v6461
    %6709 = vmatpush.bf16.msra.mxu0 %v6459
    %6710 = vmatpush.bf16.msra.mxu0 %v6457
    %6711 = vmatpush.bf16.msra.mxu0 %v6455
    %6712 = vmatpush.bf16.msra.mxu0 %v6453
    %6713 = vmatmul.bf16.gmra.mxu0 %v5897
    %v6714 = vpop.f32.mrf.mxu0
    %v6715 = vadd.f32 %v6701, %v6714
    %v6716 = vpop.f32.mrf.mxu0
    %v6717 = vadd.f32 %v6703, %v6716
    %6718 = vdwg.mxu0
    %6719 = vmatpush.bf16.msra.mxu0 %v6483
    %6720 = vmatpush.bf16.msra.mxu0 %v6481
    %6721 = vmatpush.bf16.msra.mxu0 %v6479
    %6722 = vmatpush.bf16.msra.mxu0 %v6477
    %6723 = vmatpush.bf16.msra.mxu0 %v6475
    %6724 = vmatpush.bf16.msra.mxu0 %v6473
    %6725 = vmatpush.bf16.msra.mxu0 %v6471
    %6726 = vmatpush.bf16.msra.mxu0 %v6469
    %6727 = vmatmul.bf16.gmra.mxu0 %v5898
    %v6728 = vpop.f32.mrf.mxu0
    %v6729 = vadd.f32 %v6715, %v6728
    %v6730 = vpop.f32.mrf.mxu0
    %v6731 = vadd.f32 %v6717, %v6730
    %6732 = vdwg.mxu0
    %6733 = vmatpush.bf16.msra.mxu0 %v6499
    %6734 = vmatpush.bf16.msra.mxu0 %v6497
    %6735 = vmatpush.bf16.msra.mxu0 %v6495
    %6736 = vmatpush.bf16.msra.mxu0 %v6493
    %6737 = vmatpush.bf16.msra.mxu0 %v6491
    %6738 = vmatpush.bf16.msra.mxu0 %v6489
    %6739 = vmatpush.bf16.msra.mxu0 %v6487
    %6740 = vmatpush.bf16.msra.mxu0 %v6485
    %6741 = vmatmul.bf16.gmra.mxu0 %v5899
    %v6742 = vpop.f32.mrf.mxu0
    %v6743 = vadd.f32 %v6729, %v6742
    %v6744 = vpop.f32.mrf.mxu0
    %v6745 = vadd.f32 %v6731, %v6744
    %6746 = vdwg.mxu0
    %6747 = vmatpush.bf16.msra.mxu0 %v6515
    %6748 = vmatpush.bf16.msra.mxu0 %v6513
    %6749 = vmatpush.bf16.msra.mxu0 %v6511
    %6750 = vmatpush.bf16.msra.mxu0 %v6509
    %6751 = vmatpush.bf16.msra.mxu0 %v6507
    %6752 = vmatpush.bf16.msra.mxu0 %v6505
    %6753 = vmatpush.bf16.msra.mxu0 %v6503
    %6754 = vmatpush.bf16.msra.mxu0 %v6501
    %6755 = vmatmul.bf16.gmra.mxu0 %v5900
    %v6756 = vpop.f32.mrf.mxu0
    %v6757 = vadd.f32 %v6743, %v6756
    %v6758 = vpop.f32.mrf.mxu0
    %v6759 = vadd.f32 %v6745, %v6758
    %6760 = vdwg.mxu0
    %6761 = vmatpush.bf16.msra.mxu0 %v6531
    %6762 = vmatpush.bf16.msra.mxu0 %v6529
    %6763 = vmatpush.bf16.msra.mxu0 %v6527
    %6764 = vmatpush.bf16.msra.mxu0 %v6525
    %6765 = vmatpush.bf16.msra.mxu0 %v6523
    %6766 = vmatpush.bf16.msra.mxu0 %v6521
    %6767 = vmatpush.bf16.msra.mxu0 %v6519
    %6768 = vmatpush.bf16.msra.mxu0 %v6517
    %6769 = vmatmul.bf16.gmra.mxu0 %v5901
    %v6770 = vpop.f32.mrf.mxu0
    %v6771 = vadd.f32 %v6757, %v6770
    %v6772 = vpop.f32.mrf.mxu0
    %v6773 = vadd.f32 %v6759, %v6772
    %6774 = vdwg.mxu0
    %6775 = vmatpush.bf16.msra.mxu0 %v6547
    %6776 = vmatpush.bf16.msra.mxu0 %v6545
    %6777 = vmatpush.bf16.msra.mxu0 %v6543
    %6778 = vmatpush.bf16.msra.mxu0 %v6541
    %6779 = vmatpush.bf16.msra.mxu0 %v6539
    %6780 = vmatpush.bf16.msra.mxu0 %v6537
    %6781 = vmatpush.bf16.msra.mxu0 %v6535
    %6782 = vmatpush.bf16.msra.mxu0 %v6533
    %6783 = vmatmul.bf16.gmra.mxu0 %v5902
    %v6784 = vpop.f32.mrf.mxu0
    %v6785 = vadd.f32 %v6771, %v6784
    %v6786 = vpop.f32.mrf.mxu0
    %v6787 = vadd.f32 %v6773, %v6786
    %6788 = vdwg.mxu0
    %6789 = vmatpush.bf16.msra.mxu0 %v6436
    %6790 = vmatpush.bf16.msra.mxu0 %v6434
    %6791 = vmatpush.bf16.msra.mxu0 %v6432
    %6792 = vmatpush.bf16.msra.mxu0 %v6430
    %6793 = vmatpush.bf16.msra.mxu0 %v6428
    %6794 = vmatpush.bf16.msra.mxu0 %v6426
    %6795 = vmatpush.bf16.msra.mxu0 %v6424
    %6796 = vmatpush.bf16.msra.mxu0 %v6422
    %6797 = vmatmul.bf16.gmra.mxu0 %v5895
    %v6798 = vpop.f32.mrf.mxu0
    %v6799 = vadd.f32 %v6034, %v6798
    %v6800 = vpop.f32.mrf.mxu0
    %v6801 = vadd.f32 %v6034, %v6800
    %6802 = vdwg.mxu0
    %6803 = vmatpush.bf16.msra.mxu0 %v6452
    %6804 = vmatpush.bf16.msra.mxu0 %v6450
    %6805 = vmatpush.bf16.msra.mxu0 %v6448
    %6806 = vmatpush.bf16.msra.mxu0 %v6446
    %6807 = vmatpush.bf16.msra.mxu0 %v6444
    %6808 = vmatpush.bf16.msra.mxu0 %v6442
    %6809 = vmatpush.bf16.msra.mxu0 %v6440
    %6810 = vmatpush.bf16.msra.mxu0 %v6438
    %6811 = vmatmul.bf16.gmra.mxu0 %v5896
    %v6812 = vpop.f32.mrf.mxu0
    %v6813 = vadd.f32 %v6799, %v6812
    %v6814 = vpop.f32.mrf.mxu0
    %v6815 = vadd.f32 %v6801, %v6814
    %6816 = vdwg.mxu0
    %6817 = vmatpush.bf16.msra.mxu0 %v6468
    %6818 = vmatpush.bf16.msra.mxu0 %v6466
    %6819 = vmatpush.bf16.msra.mxu0 %v6464
    %6820 = vmatpush.bf16.msra.mxu0 %v6462
    %6821 = vmatpush.bf16.msra.mxu0 %v6460
    %6822 = vmatpush.bf16.msra.mxu0 %v6458
    %6823 = vmatpush.bf16.msra.mxu0 %v6456
    %6824 = vmatpush.bf16.msra.mxu0 %v6454
    %6825 = vmatmul.bf16.gmra.mxu0 %v5897
    %v6826 = vpop.f32.mrf.mxu0
    %v6827 = vadd.f32 %v6813, %v6826
    %v6828 = vpop.f32.mrf.mxu0
    %v6829 = vadd.f32 %v6815, %v6828
    %6830 = vdwg.mxu0
    %6831 = vmatpush.bf16.msra.mxu0 %v6484
    %6832 = vmatpush.bf16.msra.mxu0 %v6482
    %6833 = vmatpush.bf16.msra.mxu0 %v6480
    %6834 = vmatpush.bf16.msra.mxu0 %v6478
    %6835 = vmatpush.bf16.msra.mxu0 %v6476
    %6836 = vmatpush.bf16.msra.mxu0 %v6474
    %6837 = vmatpush.bf16.msra.mxu0 %v6472
    %6838 = vmatpush.bf16.msra.mxu0 %v6470
    %6839 = vmatmul.bf16.gmra.mxu0 %v5898
    %v6840 = vpop.f32.mrf.mxu0
    %v6841 = vadd.f32 %v6827, %v6840
    %v6842 = vpop.f32.mrf.mxu0
    %v6843 = vadd.f32 %v6829, %v6842
    %6844 = vdwg.mxu0
    %6845 = vmatpush.bf16.msra.mxu0 %v6500
    %6846 = vmatpush.bf16.msra.mxu0 %v6498
    %6847 = vmatpush.bf16.msra.mxu0 %v6496
    %6848 = vmatpush.bf16.msra.mxu0 %v6494
    %6849 = vmatpush.bf16.msra.mxu0 %v6492
    %6850 = vmatpush.bf16.msra.mxu0 %v6490
    %6851 = vmatpush.bf16.msra.mxu0 %v6488
    %6852 = vmatpush.bf16.msra.mxu0 %v6486
    %6853 = vmatmul.bf16.gmra.mxu0 %v5899
    %v6854 = vpop.f32.mrf.mxu0
    %v6855 = vadd.f32 %v6841, %v6854
    %v6856 = vpop.f32.mrf.mxu0
    %v6857 = vadd.f32 %v6843, %v6856
    %6858 = vdwg.mxu0
    %6859 = vmatpush.bf16.msra.mxu0 %v6516
    %6860 = vmatpush.bf16.msra.mxu0 %v6514
    %6861 = vmatpush.bf16.msra.mxu0 %v6512
    %6862 = vmatpush.bf16.msra.mxu0 %v6510
    %6863 = vmatpush.bf16.msra.mxu0 %v6508
    %6864 = vmatpush.bf16.msra.mxu0 %v6506
    %6865 = vmatpush.bf16.msra.mxu0 %v6504
    %6866 = vmatpush.bf16.msra.mxu0 %v6502
    %6867 = vmatmul.bf16.gmra.mxu0 %v5900
    %v6868 = vpop.f32.mrf.mxu0
    %v6869 = vadd.f32 %v6855, %v6868
    %v6870 = vpop.f32.mrf.mxu0
    %v6871 = vadd.f32 %v6857, %v6870
    %6872 = vdwg.mxu0
    %6873 = vmatpush.bf16.msra.mxu0 %v6532
    %6874 = vmatpush.bf16.msra.mxu0 %v6530
    %6875 = vmatpush.bf16.msra.mxu0 %v6528
    %6876 = vmatpush.bf16.msra.mxu0 %v6526
    %6877 = vmatpush.bf16.msra.mxu0 %v6524
    %6878 = vmatpush.bf16.msra.mxu0 %v6522
    %6879 = vmatpush.bf16.msra.mxu0 %v6520
    %6880 = vmatpush.bf16.msra.mxu0 %v6518
    %6881 = vmatmul.bf16.gmra.mxu0 %v5901
    %v6882 = vpop.f32.mrf.mxu0
    %v6883 = vadd.f32 %v6869, %v6882
    %v6884 = vpop.f32.mrf.mxu0
    %v6885 = vadd.f32 %v6871, %v6884
    %6886 = vdwg.mxu0
    %6887 = vmatpush.bf16.msra.mxu0 %v6548
    %6888 = vmatpush.bf16.msra.mxu0 %v6546
    %6889 = vmatpush.bf16.msra.mxu0 %v6544
    %6890 = vmatpush.bf16.msra.mxu0 %v6542
    %6891 = vmatpush.bf16.msra.mxu0 %v6540
    %6892 = vmatpush.bf16.msra.mxu0 %v6538
    %6893 = vmatpush.bf16.msra.mxu0 %v6536
    %6894 = vmatpush.bf16.msra.mxu0 %v6534
    %6895 = vmatmul.bf16.gmra.mxu0 %v5902
    %v6896 = vpop.f32.mrf.mxu0
    %v6897 = vadd.f32 %v6883, %v6896
    %v6898 = vpop.f32.mrf.mxu0
    %v6899 = vadd.f32 %v6885, %v6898
    %6900 = vdwg.mxu0
    %6901 = vst [vmem:[%s13] sm:$0xff] %v6785
    %6902 = vst [vmem:[%s13 + $0x8] sm:$0xff] %v6897
    %6903 = vst [vmem:[%s13 + $0x10] sm:$0xff] %v6787
    %6904 = vst [vmem:[%s13 + $0x18] sm:$0xff] %v6899
    // Predicated region
    $region78: #{autoencoder_forward.1} parent=1 // pred_check
      _
    $region79: #{autoencoder_forward.1} parent=1 // pred_check_branch
      %6906 = sbr.rel (0) target = $region81
    $region80: #{autoencoder_forward.1} parent=1 // pred_region
      _
    $region81: #{autoencoder_forward.1} parent=1 // pred_fallthru
      _
    // Predicated region
    $region82: #{autoencoder_forward.1} parent=1 // pred_check
      _
    $region83: #{autoencoder_forward.1} parent=1 // pred_check_branch
      %6908 = sbr.rel (0) target = $region85
    $region84: #{autoencoder_forward.1} parent=1 // pred_region
      _
    $region85: #{autoencoder_forward.1} parent=1 // pred_fallthru
      _
    // Predicated region
    $region86: #{autoencoder_forward.1} parent=1 // pred_check
      _
    $region87: #{autoencoder_forward.1} parent=1 // pred_check_branch
      %6910 = sbr.rel (0) target = $region89
    $region88: #{autoencoder_forward.1} parent=1 // pred_region
      _
    $region89: #{autoencoder_forward.1} parent=1 // pred_fallthru
      _
    // Predicated region
    $region90: #{autoencoder_forward.1} parent=1 // pred_check
      _
    $region91: #{autoencoder_forward.1} parent=1 // pred_check_branch
      %6912 = sbr.rel (0) target = $region93
    $region92: #{autoencoder_forward.1} parent=1 // pred_region
      _
    $region93: #{autoencoder_forward.1} parent=1 // pred_fallthru
      _
    %6913 = vsyncpa [#allocation3], 1
    %6914 = vsyncpa [#allocation5], 1
    %6915 = vsyncpa [#allocation8], 1
    %6916 = vsyncpa [#allocation11], 1

</llo_original>
